<compile_context>
chip_gen: v7x
topology: tpu7x:2x2x1
jax: 0.10.0
libtpu: 0.0.40
codegen_flags: <defaults>
</compile_context>

<pallas_src>
import math

import jax
import jax.numpy as jnp
from jax import lax
from jax.experimental import pallas as pl
from jax.experimental.pallas import tpu as pltpu

# ---------------------------------------------------------------------------
# Model hyper-parameters (small, consistent with the module's forward)
# ---------------------------------------------------------------------------
B = 2          # batch
S = 8          # sequence length
D = 32         # d_model  (= layer.size)
H = 4          # attention heads
DK = D // H    # per-head dim
DFF = 64       # feed-forward hidden dim
N_LAYERS = 2   # N in Encoder(layer, N)
EPS = 1e-5     # nn.LayerNorm default eps
BS = B * S     # flattened batch*sequence rows
NEG = -1e9     # additive masking constant
LOG2_S = 3     # S == 8 (power of two, used for batch-id shift in the kernel)
assert S == (1 << LOG2_S)


def _layer_norm(h, gamma, beta):
    """LayerNorm over the last dim. h/gamma/beta: (BS, D)."""
    mu = jnp.mean(h, axis=-1, keepdims=True)
    var = jnp.mean((h - mu) * (h - mu), axis=-1, keepdims=True)
    return (h - mu) * lax.rsqrt(var + EPS) * gamma + beta


def encoder_kernel(
    x_ref,    # (BS, D)     activations, batch flattened onto sublanes
    w_ref,    # (D, 256)    packed weights: [wq|wk|wv | wo | w1 | w2.T]
    pv_ref,   # (8, 128)    packed small params (see wrapper for layout)
    o_ref,    # (BS, D)
):
    x = x_ref[...]
    w = w_ref[...]
    pv = pv_ref[...]

    # --- static slices of the packed weight slab (one-time, loop-invariant) --
    wqkv = w[:, 0:3 * D]                    # (D, 96)  fused Q|K|V projection
    wo = w[:, 3 * D:4 * D]                  # (D, 32)
    w1 = w[:, 4 * D:4 * D + DFF]            # (D, 64)
    w2t = w[:, 4 * D + DFF:4 * D + 2 * DFF]  # (D, 64)  == w2.T

    # --- packed small params, broadcasts hoisted out of the layer loop -------
    bo = jnp.broadcast_to(pv[0:1, 0:D], (BS, D))
    b2 = jnp.broadcast_to(pv[1:2, 0:D], (BS, D))
    g1 = jnp.broadcast_to(pv[2:3, 0:D], (BS, D))
    be1 = jnp.broadcast_to(pv[3:4, 0:D], (BS, D))
    g2 = jnp.broadcast_to(pv[4:5, 0:D], (BS, D))
    be2 = jnp.broadcast_to(pv[5:6, 0:D], (BS, D))
    gf = jnp.broadcast_to(pv[6:7, 0:D], (BS, D))
    bef = jnp.broadcast_to(pv[7:8, 0:D], (BS, D))
    bqkv = jnp.broadcast_to(pv[0:1, D:D + 3 * D], (BS, 3 * D))   # fused Q|K|V bias
    b1 = jnp.broadcast_to(pv[1:2, D:D + DFF], (BS, DFF))         # FFN bias
    key_mask = pv[2:3, D:D + BS]                                  # (1, BS), 0 / -1e9

    # --- in-kernel additive score mask: batch block-diagonal + key mask ------
    # -1e9 underflows to exactly 0 after exp, so fusing the batch into one
    # (BS, BS) score tile is numerically identical to per-batch softmax.
    # (Degenerate fully-masked rows would diverge; not exercised here.)
    rid = lax.broadcasted_iota(jnp.int32, (BS, BS), 0)
    cid = lax.broadcasted_iota(jnp.int32, (BS, BS), 1)
    same_batch = (rid >> LOG2_S) == (cid >> LOG2_S)
    smask = jnp.where(same_batch, 0.0, NEG) + jnp.broadcast_to(key_mask, (BS, BS))

    inv_sqrt_dk = 1.0 / math.sqrt(DK)
    dn_t = (((1,), (1,)), ((), ()))   # contract last dim with last dim (B^T fold)

    # N encoder layers (same weights N times -- matches the shared-layer bug).
    for _ in range(N_LAYERS):
        # ----- sublayer 1: multi-head self-attention (pre-norm residual) -----
        xn = _layer_norm(x, g1, be1)                                   # (BS, D)
        qkv = jnp.dot(xn, wqkv, preferred_element_type=jnp.float32) + bqkv

        ctx_heads = []
        for h in range(H):
            qh = qkv[:, h * DK:(h + 1) * DK]                           # (BS, DK)
            kh = qkv[:, D + h * DK: D + (h + 1) * DK]
            vh = qkv[:, 2 * D + h * DK: 2 * D + (h + 1) * DK]

            # scores = q @ k^T with the transpose folded into the MXU feed
            s = lax.dot_general(qh, kh, dn_t,
                                preferred_element_type=jnp.float32) * inv_sqrt_dk
            s = s + smask                                              # (BS, BS)
            s = s - jnp.max(s, axis=-1, keepdims=True)
            p = jnp.exp(s)
            p = p * pl.reciprocal(jnp.sum(p, axis=-1, keepdims=True),
                                  approx=True)
            ctx_heads.append(
                jnp.dot(p, vh, preferred_element_type=jnp.float32))    # (BS, DK)

        # fused output projection: one (BS,D)x(D,D) matmul instead of 4 K=8 dots
        ctx_all = jnp.concatenate(ctx_heads, axis=1)                   # (BS, D)
        attn = jnp.dot(ctx_all, wo, preferred_element_type=jnp.float32) + bo
        x = x + attn

        # ----- sublayer 2: position-wise feed-forward (pre-norm residual) ----
        xn2 = _layer_norm(x, g2, be2)
        hff = jnp.maximum(
            jnp.dot(xn2, w1, preferred_element_type=jnp.float32) + b1, 0.0)
        # contract against w2.T on its last dim (no transpose materialized)
        x = x + lax.dot_general(hff, w2t, dn_t,
                                preferred_element_type=jnp.float32) + b2

    # final Encoder-level nn.LayerNorm -- single contiguous store
    o_ref[...] = _layer_norm(x, gf, bef).astype(o_ref.dtype)


def encoder_forward(x, mask, params):
    """x: (B, S, D) f32; mask: (B, S) bool key mask. Returns (B, S, D)."""
    x2d = x.reshape(BS, D)

    # One packed weight slab, lane-concatenated: [wq|wk|wv | wo | w1 | w2.T]
    wslab = jnp.concatenate(
        [params["wq"], params["wk"], params["wv"], params["wo"],
         params["w1"], params["w2"].T], axis=1)                 # (D, 256)

    # One packed (8, 128) parameter tile:
    #   rows 0..7, lanes 0:32   -> bo, b2, g1, be1, g2, be2, gf, bef
    #   row 0,     lanes 32:128 -> fused QKV bias [bq|bk|bv]
    #   row 1,     lanes 32:96  -> FFN bias b1
    #   row 2,     lanes 32:48  -> additive key mask (0 / -1e9), length BS
    rows8 = jnp.concatenate(
        [params["bo"], params["b2"], params["g1"], params["be1"],
         params["g2"], params["be2"], params["gf"], params["bef"]], axis=0)
    key_add = jnp.where(mask.reshape(BS), 0.0, NEG).astype(jnp.float32)
    pvec = jnp.zeros((8, 128), jnp.float32)
    pvec = pvec.at[:, 0:D].set(rows8)
    pvec = pvec.at[0, D:2 * D].set(params["bq"][0])
    pvec = pvec.at[0, 2 * D:3 * D].set(params["bk"][0])
    pvec = pvec.at[0, 3 * D:4 * D].set(params["bv"][0])
    pvec = pvec.at[1, D:D + DFF].set(params["b1"][0])
    pvec = pvec.at[2, D:D + BS].set(key_add)

    vmem = pl.BlockSpec(memory_space=pltpu.MemorySpace.VMEM)
    out2d = pl.pallas_call(
        encoder_kernel,
        out_shape=jax.ShapeDtypeStruct((BS, D), jnp.float32),
        in_specs=[vmem, vmem, vmem],
        out_specs=vmem,
    )(x2d, wslab, pvec)
    return out2d.reshape(B, S, D)


# ---------------------------------------------------------------------------
# Pure-JAX reference (same math, unfused weights) for a correctness check
# ---------------------------------------------------------------------------
def encoder_reference(x, mask_bias, p):
    def ln(h, g, b):
        mu = jnp.mean(h, axis=-1, keepdims=True)
        var = jnp.mean((h - mu) ** 2, axis=-1, keepdims=True)
        return (h - mu) / jnp.sqrt(var + EPS) * g + b

    for _ in range(N_LAYERS):
        xn = ln(x, p["g1"], p["be1"])
        q = xn @ p["wq"] + p["bq"]
        k = xn @ p["wk"] + p["bk"]
        v = xn @ p["wv"] + p["bv"]
        qh = q.reshape(B, S, H, DK).transpose(0, 2, 1, 3)
        kh = k.reshape(B, S, H, DK).transpose(0, 2, 1, 3)
        vh = v.reshape(B, S, H, DK).transpose(0, 2, 1, 3)
        sc = jnp.einsum("bhqd,bhkd->bhqk", qh, kh) / math.sqrt(DK)
        sc = sc + mask_bias[:, None, :, :]
        attn = jax.nn.softmax(sc, axis=-1)
        o = jnp.einsum("bhqk,bhkd->bhqd", attn, vh)
        o = o.transpose(0, 2, 1, 3).reshape(B, S, D) @ p["wo"] + p["bo"]
        x = x + o
        xn2 = ln(x, p["g2"], p["be2"])
        ff = jnp.maximum(xn2 @ p["w1"] + p["b1"], 0.0) @ p["w2"] + p["b2"]
        x = x + ff
    return ln(x, p["gf"], p["bef"])


def make_params(key):
    keys = jax.random.split(key, 8)
    scale = 0.1
    return {
        "wq": scale * jax.random.normal(keys[0], (D, D), jnp.float32),
        "wk": scale * jax.random.normal(keys[1], (D, D), jnp.float32),
        "wv": scale * jax.random.normal(keys[2], (D, D), jnp.float32),
        "wo": scale * jax.random.normal(keys[3], (D, D), jnp.float32),
        "w1": scale * jax.random.normal(keys[4], (D, DFF), jnp.float32),
        "w2": scale * jax.random.normal(keys[5], (DFF, D), jnp.float32),
        "bq": jnp.zeros((1, D), jnp.float32),
        "bk": jnp.zeros((1, D), jnp.float32),
        "bv": jnp.zeros((1, D), jnp.float32),
        "bo": 0.01 * jnp.ones((1, D), jnp.float32),
        "b1": 0.01 * jnp.ones((1, DFF), jnp.float32),
        "b2": 0.01 * jnp.ones((1, D), jnp.float32),
        "g1": jnp.ones((1, D), jnp.float32),
        "be1": jnp.zeros((1, D), jnp.float32),
        "g2": jnp.ones((1, D), jnp.float32),
        "be2": jnp.zeros((1, D), jnp.float32),
        "gf": jnp.ones((1, D), jnp.float32),
        "bef": jnp.zeros((1, D), jnp.float32),
    }


if __name__ == "__main__":
    key = jax.random.PRNGKey(0)
    kx, kp = jax.random.split(key)

    x = jax.random.normal(kx, (B, S, D), jnp.float32)
    # mask: attend everywhere for batch 0; batch 1 masks out the last 2 keys.
    mask = jnp.ones((B, S), jnp.bool_)
    mask = mask.at[1, S - 2:].set(False)
    mask_bias = jnp.where(mask, 0.0, NEG).astype(jnp.float32).reshape(B, 1, S)

    params = make_params(kp)

    out = encoder_forward(x, mask, params)
    out = jax.block_until_ready(out)

    ref = encoder_reference(x, mask_bias, params)
    assert out.shape == (B, S, D)
    # tolerance slightly loosened for pl.reciprocal(approx=True) in softmax
    assert jnp.allclose(out, ref, atol=5e-3, rtol=5e-3), "mismatch vs reference"

    print("KERNEL_OK")
</pallas_src>

<mosaic_0001>
module attributes {stable_mosaic.version = 11 : i64} {
  func.func @encoder_kernel(%arg0: memref<16x32xf32, #tpu.memory_space<vmem>>, %arg1: memref<32x256xf32, #tpu.memory_space<vmem>>, %arg2: memref<8x128xf32, #tpu.memory_space<vmem>>, %arg3: memref<16x32xf32, #tpu.memory_space<vmem>>) attributes {dimension_semantics = [], scalar_prefetch = 0 : i64, scratch_operands = 0 : i64, tpu.core_type = #tpu.core_type<tc>} {
    %c0 = arith.constant 0 : index
    %c0_0 = arith.constant 0 : index
    %0 = vector.load %arg0[%c0, %c0_0] : memref<16x32xf32, #tpu.memory_space<vmem>>, vector<16x32xf32>
    %c0_1 = arith.constant 0 : index
    %c0_2 = arith.constant 0 : index
    %1 = vector.load %arg1[%c0_1, %c0_2] : memref<32x256xf32, #tpu.memory_space<vmem>>, vector<32x256xf32>
    %c0_3 = arith.constant 0 : index
    %c0_4 = arith.constant 0 : index
    %2 = vector.load %arg2[%c0_3, %c0_4] : memref<8x128xf32, #tpu.memory_space<vmem>>, vector<8x128xf32>
    %3 = vector.extract_strided_slice %1 {offsets = [0, 0], sizes = [32, 96], strides = [1, 1]} : vector<32x256xf32> to vector<32x96xf32>
    %4 = vector.extract_strided_slice %1 {offsets = [0, 96], sizes = [32, 32], strides = [1, 1]} : vector<32x256xf32> to vector<32x32xf32>
    %5 = vector.extract_strided_slice %1 {offsets = [0, 128], sizes = [32, 64], strides = [1, 1]} : vector<32x256xf32> to vector<32x64xf32>
    %6 = vector.extract_strided_slice %1 {offsets = [0, 192], sizes = [32, 64], strides = [1, 1]} : vector<32x256xf32> to vector<32x64xf32>
    %7 = vector.extract_strided_slice %2 {offsets = [0, 0], sizes = [1, 32], strides = [1, 1]} : vector<8x128xf32> to vector<1x32xf32>
    %8 = vector.shape_cast %7 : vector<1x32xf32> to vector<1x32xf32>
    %9 = vector.broadcast %8 : vector<1x32xf32> to vector<16x32xf32>
    %10 = vector.extract_strided_slice %2 {offsets = [1, 0], sizes = [1, 32], strides = [1, 1]} : vector<8x128xf32> to vector<1x32xf32>
    %11 = vector.shape_cast %10 : vector<1x32xf32> to vector<1x32xf32>
    %12 = vector.broadcast %11 : vector<1x32xf32> to vector<16x32xf32>
    %13 = vector.extract_strided_slice %2 {offsets = [2, 0], sizes = [1, 32], strides = [1, 1]} : vector<8x128xf32> to vector<1x32xf32>
    %14 = vector.shape_cast %13 : vector<1x32xf32> to vector<1x32xf32>
    %15 = vector.broadcast %14 : vector<1x32xf32> to vector<16x32xf32>
    %16 = vector.extract_strided_slice %2 {offsets = [3, 0], sizes = [1, 32], strides = [1, 1]} : vector<8x128xf32> to vector<1x32xf32>
    %17 = vector.shape_cast %16 : vector<1x32xf32> to vector<1x32xf32>
    %18 = vector.broadcast %17 : vector<1x32xf32> to vector<16x32xf32>
    %19 = vector.extract_strided_slice %2 {offsets = [4, 0], sizes = [1, 32], strides = [1, 1]} : vector<8x128xf32> to vector<1x32xf32>
    %20 = vector.shape_cast %19 : vector<1x32xf32> to vector<1x32xf32>
    %21 = vector.broadcast %20 : vector<1x32xf32> to vector<16x32xf32>
    %22 = vector.extract_strided_slice %2 {offsets = [5, 0], sizes = [1, 32], strides = [1, 1]} : vector<8x128xf32> to vector<1x32xf32>
    %23 = vector.shape_cast %22 : vector<1x32xf32> to vector<1x32xf32>
    %24 = vector.broadcast %23 : vector<1x32xf32> to vector<16x32xf32>
    %25 = vector.extract_strided_slice %2 {offsets = [6, 0], sizes = [1, 32], strides = [1, 1]} : vector<8x128xf32> to vector<1x32xf32>
    %26 = vector.shape_cast %25 : vector<1x32xf32> to vector<1x32xf32>
    %27 = vector.broadcast %26 : vector<1x32xf32> to vector<16x32xf32>
    %28 = vector.extract_strided_slice %2 {offsets = [7, 0], sizes = [1, 32], strides = [1, 1]} : vector<8x128xf32> to vector<1x32xf32>
    %29 = vector.shape_cast %28 : vector<1x32xf32> to vector<1x32xf32>
    %30 = vector.broadcast %29 : vector<1x32xf32> to vector<16x32xf32>
    %31 = vector.extract_strided_slice %2 {offsets = [0, 32], sizes = [1, 96], strides = [1, 1]} : vector<8x128xf32> to vector<1x96xf32>
    %32 = vector.shape_cast %31 : vector<1x96xf32> to vector<1x96xf32>
    %33 = vector.broadcast %32 : vector<1x96xf32> to vector<16x96xf32>
    %34 = vector.extract_strided_slice %2 {offsets = [1, 32], sizes = [1, 64], strides = [1, 1]} : vector<8x128xf32> to vector<1x64xf32>
    %35 = vector.shape_cast %34 : vector<1x64xf32> to vector<1x64xf32>
    %36 = vector.broadcast %35 : vector<1x64xf32> to vector<16x64xf32>
    %37 = vector.extract_strided_slice %2 {offsets = [2, 32], sizes = [1, 16], strides = [1, 1]} : vector<8x128xf32> to vector<1x16xf32>
    %38 = tpu.iota {dimensions = array<i32: 0>} : vector<16x16xi32>
    %39 = tpu.iota {dimensions = array<i32: 1>} : vector<16x16xi32>
    %c3_i32 = arith.constant 3 : i32
    %40 = vector.broadcast %c3_i32 : i32 to vector<16x16xi32>
    %41 = arith.shrsi %38, %40 : vector<16x16xi32>
    %c3_i32_5 = arith.constant 3 : i32
    %42 = vector.broadcast %c3_i32_5 : i32 to vector<16x16xi32>
    %43 = arith.shrsi %39, %42 : vector<16x16xi32>
    %44 = arith.cmpi eq, %41, %43 : vector<16x16xi32>
    %cst = arith.constant 0.000000e+00 : f32
    %cst_6 = arith.constant -1.000000e+09 : f32
    %45 = vector.broadcast %cst : f32 to vector<16x16xf32>
    %46 = vector.broadcast %cst_6 : f32 to vector<16x16xf32>
    %47 = arith.select %44, %45, %46 : vector<16x16xi1>, vector<16x16xf32>
    %48 = vector.shape_cast %37 : vector<1x16xf32> to vector<1x16xf32>
    %49 = vector.broadcast %48 : vector<1x16xf32> to vector<16x16xf32>
    %50 = arith.addf %47, %49 : vector<16x16xf32>
    %cst_7 = arith.constant dense<0.000000e+00> : vector<16xf32>
    %51 = vector.multi_reduction <add>, %0, %cst_7 [1] : vector<16x32xf32> to vector<16xf32>
    %52 = vector.shape_cast %51 : vector<16xf32> to vector<16x1xf32>
    %cst_8 = arith.constant 3.200000e+01 : f32
    %53 = vector.broadcast %cst_8 : f32 to vector<16x1xf32>
    %54 = arith.divf %52, %53 : vector<16x1xf32>
    %55 = vector.broadcast %54 : vector<16x1xf32> to vector<16x32xf32>
    %56 = arith.subf %0, %55 : vector<16x32xf32>
    %57 = vector.broadcast %54 : vector<16x1xf32> to vector<16x32xf32>
    %58 = arith.subf %0, %57 : vector<16x32xf32>
    %59 = arith.mulf %56, %58 : vector<16x32xf32>
    %cst_9 = arith.constant dense<0.000000e+00> : vector<16xf32>
    %60 = vector.multi_reduction <add>, %59, %cst_9 [1] : vector<16x32xf32> to vector<16xf32>
    %61 = vector.shape_cast %60 : vector<16xf32> to vector<16x1xf32>
    %cst_10 = arith.constant 3.200000e+01 : f32
    %62 = vector.broadcast %cst_10 : f32 to vector<16x1xf32>
    %63 = arith.divf %61, %62 : vector<16x1xf32>
    %64 = vector.broadcast %54 : vector<16x1xf32> to vector<16x32xf32>
    %65 = arith.subf %0, %64 : vector<16x32xf32>
    %cst_11 = arith.constant 9.99999974E-6 : f32
    %66 = vector.broadcast %cst_11 : f32 to vector<16x1xf32>
    %67 = arith.addf %63, %66 : vector<16x1xf32>
    %68 = math.rsqrt %67 : vector<16x1xf32>
    %69 = vector.broadcast %68 : vector<16x1xf32> to vector<16x32xf32>
    %70 = arith.mulf %65, %69 : vector<16x32xf32>
    %71 = arith.mulf %70, %15 : vector<16x32xf32>
    %72 = arith.addf %71, %18 : vector<16x32xf32>
    %cst_12 = arith.constant dense<0.000000e+00> : vector<16x96xf32>
    %73 = tpu.matmul %72, %3, %cst_12 {dimension_numbers = #tpu.dot_dimension_numbers<[1], [0], [0], [1], [0, 0, 1, 1], [], []>} : vector<16x32xf32>, vector<32x96xf32>, vector<16x96xf32> -> vector<16x96xf32>
    %74 = arith.addf %73, %33 : vector<16x96xf32>
    %75 = vector.extract_strided_slice %74 {offsets = [0, 0], sizes = [16, 8], strides = [1, 1]} : vector<16x96xf32> to vector<16x8xf32>
    %76 = vector.extract_strided_slice %74 {offsets = [0, 32], sizes = [16, 8], strides = [1, 1]} : vector<16x96xf32> to vector<16x8xf32>
    %77 = vector.extract_strided_slice %74 {offsets = [0, 64], sizes = [16, 8], strides = [1, 1]} : vector<16x96xf32> to vector<16x8xf32>
    %cst_13 = arith.constant dense<0.000000e+00> : vector<16x16xf32>
    %78 = tpu.matmul %75, %76, %cst_13 {dimension_numbers = #tpu.dot_dimension_numbers<[1], [1], [0], [0], [0, 0, 1, 0], [], []>} : vector<16x8xf32>, vector<16x8xf32>, vector<16x16xf32> -> vector<16x16xf32>
    %cst_14 = arith.constant 0.353553385 : f32
    %79 = vector.broadcast %cst_14 : f32 to vector<16x16xf32>
    %80 = arith.mulf %78, %79 : vector<16x16xf32>
    %81 = arith.addf %80, %50 : vector<16x16xf32>
    %cst_15 = arith.constant dense<0xFF800000> : vector<16xf32>
    %82 = vector.multi_reduction <maximumf>, %81, %cst_15 [1] : vector<16x16xf32> to vector<16xf32>
    %83 = vector.shape_cast %82 : vector<16xf32> to vector<16x1xf32>
    %84 = vector.broadcast %83 : vector<16x1xf32> to vector<16x16xf32>
    %85 = arith.subf %81, %84 : vector<16x16xf32>
    %86 = math.exp %85 : vector<16x16xf32>
    %cst_16 = arith.constant dense<0.000000e+00> : vector<16xf32>
    %87 = vector.multi_reduction <add>, %86, %cst_16 [1] : vector<16x16xf32> to vector<16xf32>
    %88 = vector.shape_cast %87 : vector<16xf32> to vector<16x1xf32>
    %89 = tpu.reciprocal %88 {approx = true} : vector<16x1xf32> -> vector<16x1xf32>
    %90 = vector.broadcast %89 : vector<16x1xf32> to vector<16x16xf32>
    %91 = arith.mulf %86, %90 : vector<16x16xf32>
    %cst_17 = arith.constant dense<0.000000e+00> : vector<16x8xf32>
    %92 = tpu.matmul %91, %77, %cst_17 {dimension_numbers = #tpu.dot_dimension_numbers<[1], [0], [0], [1], [0, 0, 1, 1], [], []>} : vector<16x16xf32>, vector<16x8xf32>, vector<16x8xf32> -> vector<16x8xf32>
    %93 = vector.extract_strided_slice %74 {offsets = [0, 8], sizes = [16, 8], strides = [1, 1]} : vector<16x96xf32> to vector<16x8xf32>
    %94 = vector.extract_strided_slice %74 {offsets = [0, 40], sizes = [16, 8], strides = [1, 1]} : vector<16x96xf32> to vector<16x8xf32>
    %95 = vector.extract_strided_slice %74 {offsets = [0, 72], sizes = [16, 8], strides = [1, 1]} : vector<16x96xf32> to vector<16x8xf32>
    %cst_18 = arith.constant dense<0.000000e+00> : vector<16x16xf32>
    %96 = tpu.matmul %93, %94, %cst_18 {dimension_numbers = #tpu.dot_dimension_numbers<[1], [1], [0], [0], [0, 0, 1, 0], [], []>} : vector<16x8xf32>, vector<16x8xf32>, vector<16x16xf32> -> vector<16x16xf32>
    %cst_19 = arith.constant 0.353553385 : f32
    %97 = vector.broadcast %cst_19 : f32 to vector<16x16xf32>
    %98 = arith.mulf %96, %97 : vector<16x16xf32>
    %99 = arith.addf %98, %50 : vector<16x16xf32>
    %cst_20 = arith.constant dense<0xFF800000> : vector<16xf32>
    %100 = vector.multi_reduction <maximumf>, %99, %cst_20 [1] : vector<16x16xf32> to vector<16xf32>
    %101 = vector.shape_cast %100 : vector<16xf32> to vector<16x1xf32>
    %102 = vector.broadcast %101 : vector<16x1xf32> to vector<16x16xf32>
    %103 = arith.subf %99, %102 : vector<16x16xf32>
    %104 = math.exp %103 : vector<16x16xf32>
    %cst_21 = arith.constant dense<0.000000e+00> : vector<16xf32>
    %105 = vector.multi_reduction <add>, %104, %cst_21 [1] : vector<16x16xf32> to vector<16xf32>
    %106 = vector.shape_cast %105 : vector<16xf32> to vector<16x1xf32>
    %107 = tpu.reciprocal %106 {approx = true} : vector<16x1xf32> -> vector<16x1xf32>
    %108 = vector.broadcast %107 : vector<16x1xf32> to vector<16x16xf32>
    %109 = arith.mulf %104, %108 : vector<16x16xf32>
    %cst_22 = arith.constant dense<0.000000e+00> : vector<16x8xf32>
    %110 = tpu.matmul %109, %95, %cst_22 {dimension_numbers = #tpu.dot_dimension_numbers<[1], [0], [0], [1], [0, 0, 1, 1], [], []>} : vector<16x16xf32>, vector<16x8xf32>, vector<16x8xf32> -> vector<16x8xf32>
    %111 = vector.extract_strided_slice %74 {offsets = [0, 16], sizes = [16, 8], strides = [1, 1]} : vector<16x96xf32> to vector<16x8xf32>
    %112 = vector.extract_strided_slice %74 {offsets = [0, 48], sizes = [16, 8], strides = [1, 1]} : vector<16x96xf32> to vector<16x8xf32>
    %113 = vector.extract_strided_slice %74 {offsets = [0, 80], sizes = [16, 8], strides = [1, 1]} : vector<16x96xf32> to vector<16x8xf32>
    %cst_23 = arith.constant dense<0.000000e+00> : vector<16x16xf32>
    %114 = tpu.matmul %111, %112, %cst_23 {dimension_numbers = #tpu.dot_dimension_numbers<[1], [1], [0], [0], [0, 0, 1, 0], [], []>} : vector<16x8xf32>, vector<16x8xf32>, vector<16x16xf32> -> vector<16x16xf32>
    %cst_24 = arith.constant 0.353553385 : f32
    %115 = vector.broadcast %cst_24 : f32 to vector<16x16xf32>
    %116 = arith.mulf %114, %115 : vector<16x16xf32>
    %117 = arith.addf %116, %50 : vector<16x16xf32>
    %cst_25 = arith.constant dense<0xFF800000> : vector<16xf32>
    %118 = vector.multi_reduction <maximumf>, %117, %cst_25 [1] : vector<16x16xf32> to vector<16xf32>
    %119 = vector.shape_cast %118 : vector<16xf32> to vector<16x1xf32>
    %120 = vector.broadcast %119 : vector<16x1xf32> to vector<16x16xf32>
    %121 = arith.subf %117, %120 : vector<16x16xf32>
    %122 = math.exp %121 : vector<16x16xf32>
    %cst_26 = arith.constant dense<0.000000e+00> : vector<16xf32>
    %123 = vector.multi_reduction <add>, %122, %cst_26 [1] : vector<16x16xf32> to vector<16xf32>
    %124 = vector.shape_cast %123 : vector<16xf32> to vector<16x1xf32>
    %125 = tpu.reciprocal %124 {approx = true} : vector<16x1xf32> -> vector<16x1xf32>
    %126 = vector.broadcast %125 : vector<16x1xf32> to vector<16x16xf32>
    %127 = arith.mulf %122, %126 : vector<16x16xf32>
    %cst_27 = arith.constant dense<0.000000e+00> : vector<16x8xf32>
    %128 = tpu.matmul %127, %113, %cst_27 {dimension_numbers = #tpu.dot_dimension_numbers<[1], [0], [0], [1], [0, 0, 1, 1], [], []>} : vector<16x16xf32>, vector<16x8xf32>, vector<16x8xf32> -> vector<16x8xf32>
    %129 = vector.extract_strided_slice %74 {offsets = [0, 24], sizes = [16, 8], strides = [1, 1]} : vector<16x96xf32> to vector<16x8xf32>
    %130 = vector.extract_strided_slice %74 {offsets = [0, 56], sizes = [16, 8], strides = [1, 1]} : vector<16x96xf32> to vector<16x8xf32>
    %131 = vector.extract_strided_slice %74 {offsets = [0, 88], sizes = [16, 8], strides = [1, 1]} : vector<16x96xf32> to vector<16x8xf32>
    %cst_28 = arith.constant dense<0.000000e+00> : vector<16x16xf32>
    %132 = tpu.matmul %129, %130, %cst_28 {dimension_numbers = #tpu.dot_dimension_numbers<[1], [1], [0], [0], [0, 0, 1, 0], [], []>} : vector<16x8xf32>, vector<16x8xf32>, vector<16x16xf32> -> vector<16x16xf32>
    %cst_29 = arith.constant 0.353553385 : f32
    %133 = vector.broadcast %cst_29 : f32 to vector<16x16xf32>
    %134 = arith.mulf %132, %133 : vector<16x16xf32>
    %135 = arith.addf %134, %50 : vector<16x16xf32>
    %cst_30 = arith.constant dense<0xFF800000> : vector<16xf32>
    %136 = vector.multi_reduction <maximumf>, %135, %cst_30 [1] : vector<16x16xf32> to vector<16xf32>
    %137 = vector.shape_cast %136 : vector<16xf32> to vector<16x1xf32>
    %138 = vector.broadcast %137 : vector<16x1xf32> to vector<16x16xf32>
    %139 = arith.subf %135, %138 : vector<16x16xf32>
    %140 = math.exp %139 : vector<16x16xf32>
    %cst_31 = arith.constant dense<0.000000e+00> : vector<16xf32>
    %141 = vector.multi_reduction <add>, %140, %cst_31 [1] : vector<16x16xf32> to vector<16xf32>
    %142 = vector.shape_cast %141 : vector<16xf32> to vector<16x1xf32>
    %143 = tpu.reciprocal %142 {approx = true} : vector<16x1xf32> -> vector<16x1xf32>
    %144 = vector.broadcast %143 : vector<16x1xf32> to vector<16x16xf32>
    %145 = arith.mulf %140, %144 : vector<16x16xf32>
    %cst_32 = arith.constant dense<0.000000e+00> : vector<16x8xf32>
    %146 = tpu.matmul %145, %131, %cst_32 {dimension_numbers = #tpu.dot_dimension_numbers<[1], [0], [0], [1], [0, 0, 1, 1], [], []>} : vector<16x16xf32>, vector<16x8xf32>, vector<16x8xf32> -> vector<16x8xf32>
    %147 = tpu.concatenate %92, %110, %128, %146 in 1 : vector<16x8xf32>, vector<16x8xf32>, vector<16x8xf32>, vector<16x8xf32> -> vector<16x32xf32>
    %cst_33 = arith.constant dense<0.000000e+00> : vector<16x32xf32>
    %148 = tpu.matmul %147, %4, %cst_33 {dimension_numbers = #tpu.dot_dimension_numbers<[1], [0], [0], [1], [0, 0, 1, 1], [], []>} : vector<16x32xf32>, vector<32x32xf32>, vector<16x32xf32> -> vector<16x32xf32>
    %149 = arith.addf %148, %9 : vector<16x32xf32>
    %150 = arith.addf %0, %149 : vector<16x32xf32>
    %cst_34 = arith.constant dense<0.000000e+00> : vector<16xf32>
    %151 = vector.multi_reduction <add>, %150, %cst_34 [1] : vector<16x32xf32> to vector<16xf32>
    %152 = vector.shape_cast %151 : vector<16xf32> to vector<16x1xf32>
    %cst_35 = arith.constant 3.200000e+01 : f32
    %153 = vector.broadcast %cst_35 : f32 to vector<16x1xf32>
    %154 = arith.divf %152, %153 : vector<16x1xf32>
    %155 = vector.broadcast %154 : vector<16x1xf32> to vector<16x32xf32>
    %156 = arith.subf %150, %155 : vector<16x32xf32>
    %157 = vector.broadcast %154 : vector<16x1xf32> to vector<16x32xf32>
    %158 = arith.subf %150, %157 : vector<16x32xf32>
    %159 = arith.mulf %156, %158 : vector<16x32xf32>
    %cst_36 = arith.constant dense<0.000000e+00> : vector<16xf32>
    %160 = vector.multi_reduction <add>, %159, %cst_36 [1] : vector<16x32xf32> to vector<16xf32>
    %161 = vector.shape_cast %160 : vector<16xf32> to vector<16x1xf32>
    %cst_37 = arith.constant 3.200000e+01 : f32
    %162 = vector.broadcast %cst_37 : f32 to vector<16x1xf32>
    %163 = arith.divf %161, %162 : vector<16x1xf32>
    %164 = vector.broadcast %154 : vector<16x1xf32> to vector<16x32xf32>
    %165 = arith.subf %150, %164 : vector<16x32xf32>
    %cst_38 = arith.constant 9.99999974E-6 : f32
    %166 = vector.broadcast %cst_38 : f32 to vector<16x1xf32>
    %167 = arith.addf %163, %166 : vector<16x1xf32>
    %168 = math.rsqrt %167 : vector<16x1xf32>
    %169 = vector.broadcast %168 : vector<16x1xf32> to vector<16x32xf32>
    %170 = arith.mulf %165, %169 : vector<16x32xf32>
    %171 = arith.mulf %170, %21 : vector<16x32xf32>
    %172 = arith.addf %171, %24 : vector<16x32xf32>
    %cst_39 = arith.constant dense<0.000000e+00> : vector<16x64xf32>
    %173 = tpu.matmul %172, %5, %cst_39 {dimension_numbers = #tpu.dot_dimension_numbers<[1], [0], [0], [1], [0, 0, 1, 1], [], []>} : vector<16x32xf32>, vector<32x64xf32>, vector<16x64xf32> -> vector<16x64xf32>
    %174 = arith.addf %173, %36 : vector<16x64xf32>
    %cst_40 = arith.constant 0.000000e+00 : f32
    %175 = vector.broadcast %cst_40 : f32 to vector<16x64xf32>
    %176 = arith.maximumf %174, %175 : vector<16x64xf32>
    %cst_41 = arith.constant dense<0.000000e+00> : vector<16x32xf32>
    %177 = tpu.matmul %176, %6, %cst_41 {dimension_numbers = #tpu.dot_dimension_numbers<[1], [1], [0], [0], [0, 0, 1, 0], [], []>} : vector<16x64xf32>, vector<32x64xf32>, vector<16x32xf32> -> vector<16x32xf32>
    %178 = arith.addf %150, %177 : vector<16x32xf32>
    %179 = arith.addf %178, %12 : vector<16x32xf32>
    %cst_42 = arith.constant dense<0.000000e+00> : vector<16xf32>
    %180 = vector.multi_reduction <add>, %179, %cst_42 [1] : vector<16x32xf32> to vector<16xf32>
    %181 = vector.shape_cast %180 : vector<16xf32> to vector<16x1xf32>
    %cst_43 = arith.constant 3.200000e+01 : f32
    %182 = vector.broadcast %cst_43 : f32 to vector<16x1xf32>
    %183 = arith.divf %181, %182 : vector<16x1xf32>
    %184 = vector.broadcast %183 : vector<16x1xf32> to vector<16x32xf32>
    %185 = arith.subf %179, %184 : vector<16x32xf32>
    %186 = vector.broadcast %183 : vector<16x1xf32> to vector<16x32xf32>
    %187 = arith.subf %179, %186 : vector<16x32xf32>
    %188 = arith.mulf %185, %187 : vector<16x32xf32>
    %cst_44 = arith.constant dense<0.000000e+00> : vector<16xf32>
    %189 = vector.multi_reduction <add>, %188, %cst_44 [1] : vector<16x32xf32> to vector<16xf32>
    %190 = vector.shape_cast %189 : vector<16xf32> to vector<16x1xf32>
    %cst_45 = arith.constant 3.200000e+01 : f32
    %191 = vector.broadcast %cst_45 : f32 to vector<16x1xf32>
    %192 = arith.divf %190, %191 : vector<16x1xf32>
    %193 = vector.broadcast %183 : vector<16x1xf32> to vector<16x32xf32>
    %194 = arith.subf %179, %193 : vector<16x32xf32>
    %cst_46 = arith.constant 9.99999974E-6 : f32
    %195 = vector.broadcast %cst_46 : f32 to vector<16x1xf32>
    %196 = arith.addf %192, %195 : vector<16x1xf32>
    %197 = math.rsqrt %196 : vector<16x1xf32>
    %198 = vector.broadcast %197 : vector<16x1xf32> to vector<16x32xf32>
    %199 = arith.mulf %194, %198 : vector<16x32xf32>
    %200 = arith.mulf %199, %15 : vector<16x32xf32>
    %201 = arith.addf %200, %18 : vector<16x32xf32>
    %cst_47 = arith.constant dense<0.000000e+00> : vector<16x96xf32>
    %202 = tpu.matmul %201, %3, %cst_47 {dimension_numbers = #tpu.dot_dimension_numbers<[1], [0], [0], [1], [0, 0, 1, 1], [], []>} : vector<16x32xf32>, vector<32x96xf32>, vector<16x96xf32> -> vector<16x96xf32>
    %203 = arith.addf %202, %33 : vector<16x96xf32>
    %204 = vector.extract_strided_slice %203 {offsets = [0, 0], sizes = [16, 8], strides = [1, 1]} : vector<16x96xf32> to vector<16x8xf32>
    %205 = vector.extract_strided_slice %203 {offsets = [0, 32], sizes = [16, 8], strides = [1, 1]} : vector<16x96xf32> to vector<16x8xf32>
    %206 = vector.extract_strided_slice %203 {offsets = [0, 64], sizes = [16, 8], strides = [1, 1]} : vector<16x96xf32> to vector<16x8xf32>
    %cst_48 = arith.constant dense<0.000000e+00> : vector<16x16xf32>
    %207 = tpu.matmul %204, %205, %cst_48 {dimension_numbers = #tpu.dot_dimension_numbers<[1], [1], [0], [0], [0, 0, 1, 0], [], []>} : vector<16x8xf32>, vector<16x8xf32>, vector<16x16xf32> -> vector<16x16xf32>
    %cst_49 = arith.constant 0.353553385 : f32
    %208 = vector.broadcast %cst_49 : f32 to vector<16x16xf32>
    %209 = arith.mulf %207, %208 : vector<16x16xf32>
    %210 = arith.addf %209, %50 : vector<16x16xf32>
    %cst_50 = arith.constant dense<0xFF800000> : vector<16xf32>
    %211 = vector.multi_reduction <maximumf>, %210, %cst_50 [1] : vector<16x16xf32> to vector<16xf32>
    %212 = vector.shape_cast %211 : vector<16xf32> to vector<16x1xf32>
    %213 = vector.broadcast %212 : vector<16x1xf32> to vector<16x16xf32>
    %214 = arith.subf %210, %213 : vector<16x16xf32>
    %215 = math.exp %214 : vector<16x16xf32>
    %cst_51 = arith.constant dense<0.000000e+00> : vector<16xf32>
    %216 = vector.multi_reduction <add>, %215, %cst_51 [1] : vector<16x16xf32> to vector<16xf32>
    %217 = vector.shape_cast %216 : vector<16xf32> to vector<16x1xf32>
    %218 = tpu.reciprocal %217 {approx = true} : vector<16x1xf32> -> vector<16x1xf32>
    %219 = vector.broadcast %218 : vector<16x1xf32> to vector<16x16xf32>
    %220 = arith.mulf %215, %219 : vector<16x16xf32>
    %cst_52 = arith.constant dense<0.000000e+00> : vector<16x8xf32>
    %221 = tpu.matmul %220, %206, %cst_52 {dimension_numbers = #tpu.dot_dimension_numbers<[1], [0], [0], [1], [0, 0, 1, 1], [], []>} : vector<16x16xf32>, vector<16x8xf32>, vector<16x8xf32> -> vector<16x8xf32>
    %222 = vector.extract_strided_slice %203 {offsets = [0, 8], sizes = [16, 8], strides = [1, 1]} : vector<16x96xf32> to vector<16x8xf32>
    %223 = vector.extract_strided_slice %203 {offsets = [0, 40], sizes = [16, 8], strides = [1, 1]} : vector<16x96xf32> to vector<16x8xf32>
    %224 = vector.extract_strided_slice %203 {offsets = [0, 72], sizes = [16, 8], strides = [1, 1]} : vector<16x96xf32> to vector<16x8xf32>
    %cst_53 = arith.constant dense<0.000000e+00> : vector<16x16xf32>
    %225 = tpu.matmul %222, %223, %cst_53 {dimension_numbers = #tpu.dot_dimension_numbers<[1], [1], [0], [0], [0, 0, 1, 0], [], []>} : vector<16x8xf32>, vector<16x8xf32>, vector<16x16xf32> -> vector<16x16xf32>
    %cst_54 = arith.constant 0.353553385 : f32
    %226 = vector.broadcast %cst_54 : f32 to vector<16x16xf32>
    %227 = arith.mulf %225, %226 : vector<16x16xf32>
    %228 = arith.addf %227, %50 : vector<16x16xf32>
    %cst_55 = arith.constant dense<0xFF800000> : vector<16xf32>
    %229 = vector.multi_reduction <maximumf>, %228, %cst_55 [1] : vector<16x16xf32> to vector<16xf32>
    %230 = vector.shape_cast %229 : vector<16xf32> to vector<16x1xf32>
    %231 = vector.broadcast %230 : vector<16x1xf32> to vector<16x16xf32>
    %232 = arith.subf %228, %231 : vector<16x16xf32>
    %233 = math.exp %232 : vector<16x16xf32>
    %cst_56 = arith.constant dense<0.000000e+00> : vector<16xf32>
    %234 = vector.multi_reduction <add>, %233, %cst_56 [1] : vector<16x16xf32> to vector<16xf32>
    %235 = vector.shape_cast %234 : vector<16xf32> to vector<16x1xf32>
    %236 = tpu.reciprocal %235 {approx = true} : vector<16x1xf32> -> vector<16x1xf32>
    %237 = vector.broadcast %236 : vector<16x1xf32> to vector<16x16xf32>
    %238 = arith.mulf %233, %237 : vector<16x16xf32>
    %cst_57 = arith.constant dense<0.000000e+00> : vector<16x8xf32>
    %239 = tpu.matmul %238, %224, %cst_57 {dimension_numbers = #tpu.dot_dimension_numbers<[1], [0], [0], [1], [0, 0, 1, 1], [], []>} : vector<16x16xf32>, vector<16x8xf32>, vector<16x8xf32> -> vector<16x8xf32>
    %240 = vector.extract_strided_slice %203 {offsets = [0, 16], sizes = [16, 8], strides = [1, 1]} : vector<16x96xf32> to vector<16x8xf32>
    %241 = vector.extract_strided_slice %203 {offsets = [0, 48], sizes = [16, 8], strides = [1, 1]} : vector<16x96xf32> to vector<16x8xf32>
    %242 = vector.extract_strided_slice %203 {offsets = [0, 80], sizes = [16, 8], strides = [1, 1]} : vector<16x96xf32> to vector<16x8xf32>
    %cst_58 = arith.constant dense<0.000000e+00> : vector<16x16xf32>
    %243 = tpu.matmul %240, %241, %cst_58 {dimension_numbers = #tpu.dot_dimension_numbers<[1], [1], [0], [0], [0, 0, 1, 0], [], []>} : vector<16x8xf32>, vector<16x8xf32>, vector<16x16xf32> -> vector<16x16xf32>
    %cst_59 = arith.constant 0.353553385 : f32
    %244 = vector.broadcast %cst_59 : f32 to vector<16x16xf32>
    %245 = arith.mulf %243, %244 : vector<16x16xf32>
    %246 = arith.addf %245, %50 : vector<16x16xf32>
    %cst_60 = arith.constant dense<0xFF800000> : vector<16xf32>
    %247 = vector.multi_reduction <maximumf>, %246, %cst_60 [1] : vector<16x16xf32> to vector<16xf32>
    %248 = vector.shape_cast %247 : vector<16xf32> to vector<16x1xf32>
    %249 = vector.broadcast %248 : vector<16x1xf32> to vector<16x16xf32>
    %250 = arith.subf %246, %249 : vector<16x16xf32>
    %251 = math.exp %250 : vector<16x16xf32>
    %cst_61 = arith.constant dense<0.000000e+00> : vector<16xf32>
    %252 = vector.multi_reduction <add>, %251, %cst_61 [1] : vector<16x16xf32> to vector<16xf32>
    %253 = vector.shape_cast %252 : vector<16xf32> to vector<16x1xf32>
    %254 = tpu.reciprocal %253 {approx = true} : vector<16x1xf32> -> vector<16x1xf32>
    %255 = vector.broadcast %254 : vector<16x1xf32> to vector<16x16xf32>
    %256 = arith.mulf %251, %255 : vector<16x16xf32>
    %cst_62 = arith.constant dense<0.000000e+00> : vector<16x8xf32>
    %257 = tpu.matmul %256, %242, %cst_62 {dimension_numbers = #tpu.dot_dimension_numbers<[1], [0], [0], [1], [0, 0, 1, 1], [], []>} : vector<16x16xf32>, vector<16x8xf32>, vector<16x8xf32> -> vector<16x8xf32>
    %258 = vector.extract_strided_slice %203 {offsets = [0, 24], sizes = [16, 8], strides = [1, 1]} : vector<16x96xf32> to vector<16x8xf32>
    %259 = vector.extract_strided_slice %203 {offsets = [0, 56], sizes = [16, 8], strides = [1, 1]} : vector<16x96xf32> to vector<16x8xf32>
    %260 = vector.extract_strided_slice %203 {offsets = [0, 88], sizes = [16, 8], strides = [1, 1]} : vector<16x96xf32> to vector<16x8xf32>
    %cst_63 = arith.constant dense<0.000000e+00> : vector<16x16xf32>
    %261 = tpu.matmul %258, %259, %cst_63 {dimension_numbers = #tpu.dot_dimension_numbers<[1], [1], [0], [0], [0, 0, 1, 0], [], []>} : vector<16x8xf32>, vector<16x8xf32>, vector<16x16xf32> -> vector<16x16xf32>
    %cst_64 = arith.constant 0.353553385 : f32
    %262 = vector.broadcast %cst_64 : f32 to vector<16x16xf32>
    %263 = arith.mulf %261, %262 : vector<16x16xf32>
    %264 = arith.addf %263, %50 : vector<16x16xf32>
    %cst_65 = arith.constant dense<0xFF800000> : vector<16xf32>
    %265 = vector.multi_reduction <maximumf>, %264, %cst_65 [1] : vector<16x16xf32> to vector<16xf32>
    %266 = vector.shape_cast %265 : vector<16xf32> to vector<16x1xf32>
    %267 = vector.broadcast %266 : vector<16x1xf32> to vector<16x16xf32>
    %268 = arith.subf %264, %267 : vector<16x16xf32>
    %269 = math.exp %268 : vector<16x16xf32>
    %cst_66 = arith.constant dense<0.000000e+00> : vector<16xf32>
    %270 = vector.multi_reduction <add>, %269, %cst_66 [1] : vector<16x16xf32> to vector<16xf32>
    %271 = vector.shape_cast %270 : vector<16xf32> to vector<16x1xf32>
    %272 = tpu.reciprocal %271 {approx = true} : vector<16x1xf32> -> vector<16x1xf32>
    %273 = vector.broadcast %272 : vector<16x1xf32> to vector<16x16xf32>
    %274 = arith.mulf %269, %273 : vector<16x16xf32>
    %cst_67 = arith.constant dense<0.000000e+00> : vector<16x8xf32>
    %275 = tpu.matmul %274, %260, %cst_67 {dimension_numbers = #tpu.dot_dimension_numbers<[1], [0], [0], [1], [0, 0, 1, 1], [], []>} : vector<16x16xf32>, vector<16x8xf32>, vector<16x8xf32> -> vector<16x8xf32>
    %276 = tpu.concatenate %221, %239, %257, %275 in 1 : vector<16x8xf32>, vector<16x8xf32>, vector<16x8xf32>, vector<16x8xf32> -> vector<16x32xf32>
    %cst_68 = arith.constant dense<0.000000e+00> : vector<16x32xf32>
    %277 = tpu.matmul %276, %4, %cst_68 {dimension_numbers = #tpu.dot_dimension_numbers<[1], [0], [0], [1], [0, 0, 1, 1], [], []>} : vector<16x32xf32>, vector<32x32xf32>, vector<16x32xf32> -> vector<16x32xf32>
    %278 = arith.addf %277, %9 : vector<16x32xf32>
    %279 = arith.addf %179, %278 : vector<16x32xf32>
    %cst_69 = arith.constant dense<0.000000e+00> : vector<16xf32>
    %280 = vector.multi_reduction <add>, %279, %cst_69 [1] : vector<16x32xf32> to vector<16xf32>
    %281 = vector.shape_cast %280 : vector<16xf32> to vector<16x1xf32>
    %cst_70 = arith.constant 3.200000e+01 : f32
    %282 = vector.broadcast %cst_70 : f32 to vector<16x1xf32>
    %283 = arith.divf %281, %282 : vector<16x1xf32>
    %284 = vector.broadcast %283 : vector<16x1xf32> to vector<16x32xf32>
    %285 = arith.subf %279, %284 : vector<16x32xf32>
    %286 = vector.broadcast %283 : vector<16x1xf32> to vector<16x32xf32>
    %287 = arith.subf %279, %286 : vector<16x32xf32>
    %288 = arith.mulf %285, %287 : vector<16x32xf32>
    %cst_71 = arith.constant dense<0.000000e+00> : vector<16xf32>
    %289 = vector.multi_reduction <add>, %288, %cst_71 [1] : vector<16x32xf32> to vector<16xf32>
    %290 = vector.shape_cast %289 : vector<16xf32> to vector<16x1xf32>
    %cst_72 = arith.constant 3.200000e+01 : f32
    %291 = vector.broadcast %cst_72 : f32 to vector<16x1xf32>
    %292 = arith.divf %290, %291 : vector<16x1xf32>
    %293 = vector.broadcast %283 : vector<16x1xf32> to vector<16x32xf32>
    %294 = arith.subf %279, %293 : vector<16x32xf32>
    %cst_73 = arith.constant 9.99999974E-6 : f32
    %295 = vector.broadcast %cst_73 : f32 to vector<16x1xf32>
    %296 = arith.addf %292, %295 : vector<16x1xf32>
    %297 = math.rsqrt %296 : vector<16x1xf32>
    %298 = vector.broadcast %297 : vector<16x1xf32> to vector<16x32xf32>
    %299 = arith.mulf %294, %298 : vector<16x32xf32>
    %300 = arith.mulf %299, %21 : vector<16x32xf32>
    %301 = arith.addf %300, %24 : vector<16x32xf32>
    %cst_74 = arith.constant dense<0.000000e+00> : vector<16x64xf32>
    %302 = tpu.matmul %301, %5, %cst_74 {dimension_numbers = #tpu.dot_dimension_numbers<[1], [0], [0], [1], [0, 0, 1, 1], [], []>} : vector<16x32xf32>, vector<32x64xf32>, vector<16x64xf32> -> vector<16x64xf32>
    %303 = arith.addf %302, %36 : vector<16x64xf32>
    %cst_75 = arith.constant 0.000000e+00 : f32
    %304 = vector.broadcast %cst_75 : f32 to vector<16x64xf32>
    %305 = arith.maximumf %303, %304 : vector<16x64xf32>
    %cst_76 = arith.constant dense<0.000000e+00> : vector<16x32xf32>
    %306 = tpu.matmul %305, %6, %cst_76 {dimension_numbers = #tpu.dot_dimension_numbers<[1], [1], [0], [0], [0, 0, 1, 0], [], []>} : vector<16x64xf32>, vector<32x64xf32>, vector<16x32xf32> -> vector<16x32xf32>
    %307 = arith.addf %279, %306 : vector<16x32xf32>
    %308 = arith.addf %307, %12 : vector<16x32xf32>
    %cst_77 = arith.constant dense<0.000000e+00> : vector<16xf32>
    %309 = vector.multi_reduction <add>, %308, %cst_77 [1] : vector<16x32xf32> to vector<16xf32>
    %310 = vector.shape_cast %309 : vector<16xf32> to vector<16x1xf32>
    %cst_78 = arith.constant 3.200000e+01 : f32
    %311 = vector.broadcast %cst_78 : f32 to vector<16x1xf32>
    %312 = arith.divf %310, %311 : vector<16x1xf32>
    %313 = vector.broadcast %312 : vector<16x1xf32> to vector<16x32xf32>
    %314 = arith.subf %308, %313 : vector<16x32xf32>
    %315 = vector.broadcast %312 : vector<16x1xf32> to vector<16x32xf32>
    %316 = arith.subf %308, %315 : vector<16x32xf32>
    %317 = arith.mulf %314, %316 : vector<16x32xf32>
    %cst_79 = arith.constant dense<0.000000e+00> : vector<16xf32>
    %318 = vector.multi_reduction <add>, %317, %cst_79 [1] : vector<16x32xf32> to vector<16xf32>
    %319 = vector.shape_cast %318 : vector<16xf32> to vector<16x1xf32>
    %cst_80 = arith.constant 3.200000e+01 : f32
    %320 = vector.broadcast %cst_80 : f32 to vector<16x1xf32>
    %321 = arith.divf %319, %320 : vector<16x1xf32>
    %322 = vector.broadcast %312 : vector<16x1xf32> to vector<16x32xf32>
    %323 = arith.subf %308, %322 : vector<16x32xf32>
    %cst_81 = arith.constant 9.99999974E-6 : f32
    %324 = vector.broadcast %cst_81 : f32 to vector<16x1xf32>
    %325 = arith.addf %321, %324 : vector<16x1xf32>
    %326 = math.rsqrt %325 : vector<16x1xf32>
    %327 = vector.broadcast %326 : vector<16x1xf32> to vector<16x32xf32>
    %328 = arith.mulf %323, %327 : vector<16x32xf32>
    %329 = arith.mulf %328, %27 : vector<16x32xf32>
    %330 = arith.addf %329, %30 : vector<16x32xf32>
    %c0_82 = arith.constant 0 : index
    %c0_83 = arith.constant 0 : index
    %331 = vector.load %arg3[%c0_82, %c0_83] : memref<16x32xf32, #tpu.memory_space<vmem>>, vector<16x32xf32>
    tpu.vector_store %arg3[%c0_82, %c0_83], %330 {strides = array<i32>} : memref<16x32xf32, #tpu.memory_space<vmem>>, vector<16x32xf32>,
    return
  }
}

</mosaic_0001>

<llo_original>
// kernel: tpu_custom_call.1
$region0: #{tpu_custom_call.1}
  #allocation0 [shape = 'u32[]', space=smem, size = 0x4, offset = 0x4, fixed_abs, tag = 'smem constant byte address 0x4 - core index']
  #allocation1 [shape = 'u32[144,128]{1,0:T(1,128)}', space=vmem, size = 0x12000, scoped, tag = 'internal scratch']
  %s0 = inlined_call_operand.hbm [shape: f32[16,32], index: 0, kind: input, shape index: {}]
  %s1 = inlined_call_operand.hbm [shape: f32[32,256], index: 1, kind: input, shape index: {}]
  %s2 = inlined_call_operand.hbm [shape: f32[8,128], index: 2, kind: input, shape index: {}]
  %s3 = inlined_call_operand.hbm [shape: f32[16,32], index: 3, kind: output, shape index: {}]
  %s4 = sld [smem:[#allocation0]]
  $region34: #{tpu_custom_call.1} parent=0
    _
  %s6 = ssub.s32 1, %s4
  %s7 = scalar_select 0, %s6, %s4
  $region1: #{tpu_custom_call.1} parent=0
    #allocation2 [shape = 'u8[8192]{0}', space=vmem, size = 0x2000, scoped, tag = 'input window, operand 0, single buffered']
    #allocation3 [shape = 's32[1]{0}', space=sflag, size = 0x4, scoped, tag = 'scoped memory for tpu_custom_call.1']
    #allocation4 [shape = 's32[1]{0}', space=sflag, size = 0x4, scoped, tag = 'scoped memory for tpu_custom_call.1']
    #allocation5 [shape = 'u8[32768]{0}', space=vmem, size = 0x8000, scoped, tag = 'input window, operand 1, single buffered']
    #allocation6 [shape = 's32[1]{0}', space=sflag, size = 0x4, scoped, tag = 'scoped memory for tpu_custom_call.1']
    #allocation7 [shape = 'u8[4096]{0}', space=vmem, size = 0x1000, scoped, tag = 'input window, operand 2, single buffered']
    #allocation8 [shape = 'u8[8192]{0}', space=vmem, size = 0x2000, scoped, tag = 'output window, operand 0, single buffered']
    %8 = vsyncpa [#allocation3], 0
    %9 = vsyncpa [#allocation6], 0
    %10 = vsyncpa [#allocation4], 0
    // Predicated region
    $region2: #{tpu_custom_call.1} parent=1 // pred_check
      _
    $region3: #{tpu_custom_call.1} parent=1 // pred_check_branch
      %12 = sbr.rel (0) target = $region5
    $region4: #{tpu_custom_call.1} parent=1 // pred_region
      %s14 = ssub.s32 256, 256
      %15 = vsyncadd [#allocation3], %s14
      %s16 = sshll.u32 [#allocation2], 4
      %s17 = int_to_ptr.vmem [resolvable:$true] %s16
      %22 = dma.hbm_to_vmem [thread:$0]  %s0, 256, %s17, [#allocation3], 128, 128, 8
    $region5: #{tpu_custom_call.1} parent=1 // pred_fallthru
      _
    // Predicated region
    $region6: #{tpu_custom_call.1} parent=1 // pred_check
      _
    $region7: #{tpu_custom_call.1} parent=1 // pred_check_branch
      %24 = sbr.rel (0) target = $region9
    $region8: #{tpu_custom_call.1} parent=1 // pred_region
      %s26 = ssub.s32 1024, 1024
      %27 = vsyncadd [#allocation6], %s26
      %s28 = sshll.u32 [#allocation5], 4
      %s29 = int_to_ptr.vmem [resolvable:$true] %s28
      %34 = dma.hbm_to_vmem [thread:$0]  %s1, 1024, %s29, [#allocation6], 256, 256, 16
    $region9: #{tpu_custom_call.1} parent=1 // pred_fallthru
      _
    // Predicated region
    $region10: #{tpu_custom_call.1} parent=1 // pred_check
      _
    $region11: #{tpu_custom_call.1} parent=1 // pred_check_branch
      %36 = sbr.rel (0) target = $region13
    $region12: #{tpu_custom_call.1} parent=1 // pred_region
      %s38 = ssub.s32 128, 128
      %39 = vsyncadd [#allocation6], %s38
      %s41 = sshll.u32 [#allocation7], 4
      %s42 = int_to_ptr.vmem [resolvable:$true] %s41
      %44 = dma.hbm_to_vmem [thread:$0]  %s2, 128, %s42, [#allocation6]
    $region13: #{tpu_custom_call.1} parent=1 // pred_fallthru
      _
    // Predicated region
    $region14: #{tpu_custom_call.1} parent=1 // pred_check
      _
    $region15: #{tpu_custom_call.1} parent=1 // pred_check_branch
      %46 = sbr.rel (0) target = $region17
    $region16: #{tpu_custom_call.1} parent=1 // pred_region
      %47 = dma.done [#allocation3], 256
    $region17: #{tpu_custom_call.1} parent=1 // pred_fallthru
      _
    // Predicated region
    $region18: #{tpu_custom_call.1} parent=1 // pred_check
      _
    $region19: #{tpu_custom_call.1} parent=1 // pred_check_branch
      %49 = sbr.rel (0) target = $region21
    $region20: #{tpu_custom_call.1} parent=1 // pred_region
      %50 = dma.done [#allocation6], 1024
    $region21: #{tpu_custom_call.1} parent=1 // pred_fallthru
      _
    // Predicated region
    $region22: #{tpu_custom_call.1} parent=1 // pred_check
      _
    $region23: #{tpu_custom_call.1} parent=1 // pred_check_branch
      %52 = sbr.rel (0) target = $region25
    $region24: #{tpu_custom_call.1} parent=1 // pred_region
      %53 = dma.done [#allocation6], 128
    $region25: #{tpu_custom_call.1} parent=1 // pred_fallthru
      _
    %v54 = vld [vmem:[#allocation2] sm:$0xff]
    %v55 = vld [vmem:[#allocation2 + $0x8] sm:$0xff]
    %v56 = vld [vmem:[#allocation5] sm:$0xff]
    %v57 = vld [vmem:[#allocation5 + $0x8] sm:$0xff]
    %v58 = vld [vmem:[#allocation5 + $0x10] sm:$0xff]
    %v59 = vld [vmem:[#allocation5 + $0x18] sm:$0xff]
    %v60 = vld [vmem:[#allocation5 + $0x20] sm:$0xff]
    %v61 = vld [vmem:[#allocation5 + $0x28] sm:$0xff]
    %v62 = vld [vmem:[#allocation5 + $0x30] sm:$0xff]
    %v63 = vld [vmem:[#allocation5 + $0x38] sm:$0xff]
    %v64 = vld [vmem:[#allocation7] sm:$0xff]
    %v65 = vlaneseq
    %v66 = vshrl.u32 %v65, 7
    %v67 = vsub.s32 0, %v66
    %v68 = vrot.slane %v64, %v67
    %v69 = vlaneseq
    %v70 = vshrl.u32 %v69, 7
    %v71 = vsub.s32 1, %v70
    %v72 = vrot.slane %v64, %v71
    %v73 = vlaneseq
    %v74 = vshrl.u32 %v73, 7
    %v75 = vsub.s32 2, %v74
    %v76 = vrot.slane %v64, %v75
    %v77 = vlaneseq
    %v78 = vshrl.u32 %v77, 7
    %v79 = vsub.s32 3, %v78
    %v80 = vrot.slane %v64, %v79
    %v81 = vlaneseq
    %v82 = vshrl.u32 %v81, 7
    %v83 = vsub.s32 4, %v82
    %v84 = vrot.slane %v64, %v83
    %v85 = vlaneseq
    %v86 = vshrl.u32 %v85, 7
    %v87 = vsub.s32 5, %v86
    %v88 = vrot.slane %v64, %v87
    %v89 = vlaneseq
    %v90 = vshrl.u32 %v89, 7
    %v91 = vsub.s32 6, %v90
    %v92 = vrot.slane %v64, %v91
    %v93 = vlaneseq
    %v94 = vshrl.u32 %v93, 7
    %v95 = vsub.s32 7, %v94
    %v96 = vrot.slane %v64, %v95
    %v97 = vlaneseq
    %v98 = vshrl.u32 %v97, 7
    %v99 = vadd.s32 %v98, 8
    %v100 = vlaneseq
    %v101 = vand.u32 %v100, 127
    %v102 = vshra.s32 %v98, 3
    %v103 = vshra.s32 %v99, 3
    %v104 = vshra.s32 %v101, 3
    %vm105 = vcmp.eq.s32.totalorder %v102, %v104
    %vm106 = vcmp.eq.s32.totalorder %v103, %v104
    %v107 = vsel %vm105, 0.0, -1e+09
    %v108 = vsel %vm106, 0.0, -1e+09
    %110 = vrot.lane.b32.xlu0 %v76, 96
    %v111 = vpop.permute.xlu0 %110
    %v113 = vadd.f32 %v107, %v111
    %v114 = vadd.f32 %v108, %v111
    %vm115 = vcmask 261120
    %v116 = vsel %vm115, %v54, 0.0
    %117 = vadd.xlane.f32.xlu0 %v116
    %v118 = vpop.xlane.xlu0 %117
    %v119 = vsel %vm115, %v55, 0.0
    %120 = vadd.xlane.f32.xlu0 %v119
    %v121 = vpop.xlane.xlu0 %120
    %v122 = vrcp.pop 32.0
    %v123 = vmul.f32 %v118, %v122
    %v124 = vmul.f32 %v121, %v122
    %v125 = vsub.f32 %v54, %v123
    %v126 = vsub.f32 %v55, %v124
    %v127 = vmul.f32 %v125, %v125
    %v128 = vmul.f32 %v126, %v126
    %v129 = vsel %vm115, %v127, 0.0
    %130 = vadd.xlane.f32.xlu0 %v129
    %v131 = vpop.xlane.xlu0 %130
    %v132 = vsel %vm115, %v128, 0.0
    %133 = vadd.xlane.f32.xlu0 %v132
    %v134 = vpop.xlane.xlu0 %133
    %v135 = vmul.f32 %v131, %v122
    %v136 = vmul.f32 %v134, %v122
    %v137 = vadd.f32 %v135, 1e-05
    %v138 = vadd.f32 %v136, 1e-05
    %v139 = vrsqrt.pop %v137
    %v140 = vrsqrt.pop %v138
    %v141 = vmul.f32 %v125, %v139
    %v142 = vmul.f32 %v126, %v140
    %v143 = vmul.f32 %v141, %v76
    %v144 = vmul.f32 %v142, %v76
    %v145 = vadd.f32 %v143, %v80
    %v146 = vadd.f32 %v144, %v80
    %148 = vrot.lane.b32.xlu0 %v68, 96
    %v149 = vpop.permute.xlu0 %148
    %v152 = vsel %vm115, %v145, 0
    %v155 = vsel %vm115, %v146, 0
    %157 = vmatprep.subr.mxu0 0.0
    %158 = vmatpush1.msra.mxu0 %v56
    %159 = vmatprep.subr.mxu0 0.0
    %160 = vmatpush1.msra.mxu0 %v58
    %161 = vmatprep.subr.mxu0 0.0
    %162 = vmatpush1.msra.mxu0 %v60
    %163 = vmatprep.subr.mxu0 0.0
    %164 = vmatpush1.msra.mxu0 %v62
    %165 = vmatprep.subr.mxu0 0.0
    %166 = vmatpush1.msra.mxu0 0.0
    %167 = vmatprep.subr.mxu0 0.0
    %168 = vmatpush1.msra.mxu0 0.0
    %169 = vmatprep.subr.mxu0 0.0
    %170 = vmatpush1.msra.mxu0 0.0
    %171 = vmatprep.subr.mxu0 0.0
    %172 = vmatpush1.msra.mxu0 0.0
    %173 = vmatprep.subr.mxu0 0.0
    %174 = vmatpush1.msra.mxu0 0.0
    %175 = vmatprep.subr.mxu0 0.0
    %176 = vmatpush1.msra.mxu0 0.0
    %177 = vmatprep.subr.mxu0 0.0
    %178 = vmatpush1.msra.mxu0 0.0
    %179 = vmatprep.subr.mxu0 0.0
    %180 = vmatpush1.msra.mxu0 0.0
    %181 = vmatprep.subr.mxu0 0.0
    %182 = vmatpush1.msra.mxu0 0.0
    %183 = vmatprep.subr.mxu0 0.0
    %184 = vmatpush1.msra.mxu0 0.0
    %185 = vmatprep.subr.mxu0 0.0
    %186 = vmatpush1.msra.mxu0 0.0
    %187 = vmatprep.subr.mxu0 0.0
    %188 = vmatpush1.msra.mxu0 0.0
    %189 = vmatprep.subr.mxu0 0.0
    %190 = vmatpush1.msra.mxu0 0.0
    %191 = vmatprep.subr.mxu0 0.0
    %192 = vmatpush1.msra.mxu0 0.0
    %193 = vmatprep.subr.mxu0 0.0
    %194 = vmatpush1.msra.mxu0 0.0
    %195 = vmatprep.subr.mxu0 0.0
    %196 = vmatpush1.msra.mxu0 0.0
    %197 = vmatprep.subr.mxu0 0.0
    %198 = vmatpush1.msra.mxu0 0.0
    %199 = vmatprep.subr.mxu0 0.0
    %200 = vmatpush1.msra.mxu0 0.0
    %201 = vmatprep.subr.mxu0 0.0
    %202 = vmatpush1.msra.mxu0 0.0
    %203 = vmatprep.subr.mxu0 0.0
    %204 = vmatpush1.msra.mxu0 0.0
    %205 = vmatprep.subr.mxu0 0.0
    %206 = vmatpush1.msra.mxu0 0.0
    %207 = vmatprep.subr.mxu0 0.0
    %208 = vmatpush1.msra.mxu0 0.0
    %209 = vmatprep.subr.mxu0 0.0
    %210 = vmatpush1.msra.mxu0 0.0
    %211 = vmatprep.subr.mxu0 0.0
    %212 = vmatpush1.msra.mxu0 0.0
    %213 = vmatprep.subr.mxu0 0.0
    %214 = vmatpush1.msra.mxu0 0.0
    %215 = vmatprep.subr.mxu0 0.0
    %216 = vmatpush1.msra.mxu0 0.0
    %217 = vmatprep.subr.mxu0 0.0
    %218 = vmatpush1.msra.mxu0 0.0
    %219 = vmatprep.subr.mxu0 0.0
    %220 = vmatpush1.msra.mxu0 0.0
    %221 = vmatprep.mubr.f32.mxu0 0.0
    %222 = vmatmul.mubr.f32.gmra.mrb[0].mxu0 %v152
    %v223 = vpop.f32.mrb[0].mxu0
    %v224 = vadd.f32 %v149, %v223
    %v225 = vpop.f32.mrb[0].mxu0
    %226 = vmatprep.mubr.f32.mxu0 0.0
    %227 = vmatmul.mubr.f32.gmra.mrb[0].mxu0 %v155
    %v228 = vpop.f32.mrb[0].mxu0
    %v229 = vadd.f32 %v149, %v228
    %v230 = vpop.f32.mrb[0].mxu0
    %231 = vdwg.mxu0
    %234 = vrot.lane.b32.xlu0 %v224, 96
    %v235 = vpop.permute.xlu0 %234
    %236 = vrot.lane.b32.xlu0 %v229, 96
    %v237 = vpop.permute.xlu0 %236
    %vm238 = vcmask 64512
    %v239 = vsel %vm238, %v224, 0
    %v241 = vsel %vm238, %v229, 0
    %v243 = vsel %vm238, %v235, 0
    %v245 = vsel %vm238, %v237, 0
    %247 = vmatprep.subr.mxu0 0.0
    %248 = vmatpush1.xpose.msra.mxu0 %v243
    %249 = vmatprep.subr.mxu0 0.0
    %250 = vmatpush1.xpose.msra.mxu0 %v245
    %251 = vmatprep.subr.mxu0 0.0
    %252 = vmatpush1.xpose.msra.mxu0 0.0
    %253 = vmatprep.subr.mxu0 0.0
    %254 = vmatpush1.xpose.msra.mxu0 0.0
    %255 = vmatprep.subr.mxu0 0.0
    %256 = vmatpush1.xpose.msra.mxu0 0.0
    %257 = vmatprep.subr.mxu0 0.0
    %258 = vmatpush1.xpose.msra.mxu0 0.0
    %259 = vmatprep.subr.mxu0 0.0
    %260 = vmatpush1.xpose.msra.mxu0 0.0
    %261 = vmatprep.subr.mxu0 0.0
    %262 = vmatpush1.xpose.msra.mxu0 0.0
    %263 = vmatprep.subr.mxu0 0.0
    %264 = vmatpush1.xpose.msra.mxu0 0.0
    %265 = vmatprep.subr.mxu0 0.0
    %266 = vmatpush1.xpose.msra.mxu0 0.0
    %267 = vmatprep.subr.mxu0 0.0
    %268 = vmatpush1.xpose.msra.mxu0 0.0
    %269 = vmatprep.subr.mxu0 0.0
    %270 = vmatpush1.xpose.msra.mxu0 0.0
    %271 = vmatprep.subr.mxu0 0.0
    %272 = vmatpush1.xpose.msra.mxu0 0.0
    %273 = vmatprep.subr.mxu0 0.0
    %274 = vmatpush1.xpose.msra.mxu0 0.0
    %275 = vmatprep.subr.mxu0 0.0
    %276 = vmatpush1.xpose.msra.mxu0 0.0
    %277 = vmatprep.subr.mxu0 0.0
    %278 = vmatpush1.xpose.msra.mxu0 0.0
    %279 = vmatprep.subr.mxu0 0.0
    %280 = vmatpush1.xpose.msra.mxu0 0.0
    %281 = vmatprep.subr.mxu0 0.0
    %282 = vmatpush1.xpose.msra.mxu0 0.0
    %283 = vmatprep.subr.mxu0 0.0
    %284 = vmatpush1.xpose.msra.mxu0 0.0
    %285 = vmatprep.subr.mxu0 0.0
    %286 = vmatpush1.xpose.msra.mxu0 0.0
    %287 = vmatprep.subr.mxu0 0.0
    %288 = vmatpush1.xpose.msra.mxu0 0.0
    %289 = vmatprep.subr.mxu0 0.0
    %290 = vmatpush1.xpose.msra.mxu0 0.0
    %291 = vmatprep.subr.mxu0 0.0
    %292 = vmatpush1.xpose.msra.mxu0 0.0
    %293 = vmatprep.subr.mxu0 0.0
    %294 = vmatpush1.xpose.msra.mxu0 0.0
    %295 = vmatprep.subr.mxu0 0.0
    %296 = vmatpush1.xpose.msra.mxu0 0.0
    %297 = vmatprep.subr.mxu0 0.0
    %298 = vmatpush1.xpose.msra.mxu0 0.0
    %299 = vmatprep.subr.mxu0 0.0
    %300 = vmatpush1.xpose.msra.mxu0 0.0
    %301 = vmatprep.subr.mxu0 0.0
    %302 = vmatpush1.xpose.msra.mxu0 0.0
    %303 = vmatprep.subr.mxu0 0.0
    %304 = vmatpush1.xpose.msra.mxu0 0.0
    %305 = vmatprep.subr.mxu0 0.0
    %306 = vmatpush1.xpose.msra.mxu0 0.0
    %307 = vmatprep.subr.mxu0 0.0
    %308 = vmatpush1.xpose.msra.mxu0 0.0
    %309 = vmatprep.subr.mxu0 0.0
    %310 = vmatpush1.xpose.msra.mxu0 0.0
    %311 = vmatprep.mubr.f32.mxu0 0.0
    %312 = vmatmul.mubr.f32.gmra.mrb[0].mxu0 %v239
    %v313 = vpop.f32.mrb[0].mxu0
    %v314 = vadd.f32 0.0, %v313
    %v315 = vpop.f32.mrb[0].mxu0
    %316 = vmatprep.mubr.f32.mxu0 0.0
    %317 = vmatmul.mubr.f32.gmra.mrb[0].mxu0 %v241
    %v318 = vpop.f32.mrb[0].mxu0
    %v319 = vadd.f32 0.0, %v318
    %v320 = vpop.f32.mrb[0].mxu0
    %321 = vdwg.mxu0
    %v322 = vmul.f32 %v314, 0.35355338
    %v323 = vmul.f32 %v319, 0.35355338
    %v324 = vadd.f32 %v322, %v113
    %v325 = vadd.f32 %v323, %v114
    %vm326 = vcmask 130048
    %v327 = vsel %vm326, %v324, -inf
    %328 = vmax.xlane.f32.xlu0 %v327
    %v329 = vpop.xlane.xlu0 %328
    %v330 = vsel %vm326, %v325, -inf
    %331 = vmax.xlane.f32.xlu0 %v330
    %v332 = vpop.xlane.xlu0 %331
    %v333 = vsub.f32 %v324, %v329
    %v334 = vsub.f32 %v325, %v332
    %v335 = vmul.f32 %v333, 1.442695
    %v336 = vpow.pop %v335
    %v337 = vmul.f32 %v334, 1.442695
    %v338 = vpow.pop %v337
    %v339 = vsel %vm326, %v336, 0.0
    %340 = vadd.xlane.f32.xlu0 %v339
    %v341 = vpop.xlane.xlu0 %340
    %v342 = vsel %vm326, %v338, 0.0
    %343 = vadd.xlane.f32.xlu0 %v342
    %v344 = vpop.xlane.xlu0 %343
    %v345 = vrcp.pop %v341
    %v346 = vrcp.pop %v344
    %v347 = vmul.f32 %v336, %v345
    %v348 = vmul.f32 %v338, %v346
    %349 = vrot.lane.b32.xlu0 %v224, 64
    %v350 = vpop.permute.xlu0 %349
    %351 = vrot.lane.b32.xlu0 %v229, 64
    %v352 = vpop.permute.xlu0 %351
    %v356 = vsel %vm326, %v347, 0
    %v359 = vsel %vm326, %v348, 0
    %361 = vmatprep.subr.mxu0 0.0
    %362 = vmatpush1.msra.mxu0 %v350
    %363 = vmatprep.subr.mxu0 0.0
    %364 = vmatpush1.msra.mxu0 %v352
    %365 = vmatprep.subr.mxu0 0.0
    %366 = vmatpush1.msra.mxu0 0.0
    %367 = vmatprep.subr.mxu0 0.0
    %368 = vmatpush1.msra.mxu0 0.0
    %369 = vmatprep.subr.mxu0 0.0
    %370 = vmatpush1.msra.mxu0 0.0
    %371 = vmatprep.subr.mxu0 0.0
    %372 = vmatpush1.msra.mxu0 0.0
    %373 = vmatprep.subr.mxu0 0.0
    %374 = vmatpush1.msra.mxu0 0.0
    %375 = vmatprep.subr.mxu0 0.0
    %376 = vmatpush1.msra.mxu0 0.0
    %377 = vmatprep.subr.mxu0 0.0
    %378 = vmatpush1.msra.mxu0 0.0
    %379 = vmatprep.subr.mxu0 0.0
    %380 = vmatpush1.msra.mxu0 0.0
    %381 = vmatprep.subr.mxu0 0.0
    %382 = vmatpush1.msra.mxu0 0.0
    %383 = vmatprep.subr.mxu0 0.0
    %384 = vmatpush1.msra.mxu0 0.0
    %385 = vmatprep.subr.mxu0 0.0
    %386 = vmatpush1.msra.mxu0 0.0
    %387 = vmatprep.subr.mxu0 0.0
    %388 = vmatpush1.msra.mxu0 0.0
    %389 = vmatprep.subr.mxu0 0.0
    %390 = vmatpush1.msra.mxu0 0.0
    %391 = vmatprep.subr.mxu0 0.0
    %392 = vmatpush1.msra.mxu0 0.0
    %393 = vmatprep.subr.mxu0 0.0
    %394 = vmatpush1.msra.mxu0 0.0
    %395 = vmatprep.subr.mxu0 0.0
    %396 = vmatpush1.msra.mxu0 0.0
    %397 = vmatprep.subr.mxu0 0.0
    %398 = vmatpush1.msra.mxu0 0.0
    %399 = vmatprep.subr.mxu0 0.0
    %400 = vmatpush1.msra.mxu0 0.0
    %401 = vmatprep.subr.mxu0 0.0
    %402 = vmatpush1.msra.mxu0 0.0
    %403 = vmatprep.subr.mxu0 0.0
    %404 = vmatpush1.msra.mxu0 0.0
    %405 = vmatprep.subr.mxu0 0.0
    %406 = vmatpush1.msra.mxu0 0.0
    %407 = vmatprep.subr.mxu0 0.0
    %408 = vmatpush1.msra.mxu0 0.0
    %409 = vmatprep.subr.mxu0 0.0
    %410 = vmatpush1.msra.mxu0 0.0
    %411 = vmatprep.subr.mxu0 0.0
    %412 = vmatpush1.msra.mxu0 0.0
    %413 = vmatprep.subr.mxu0 0.0
    %414 = vmatpush1.msra.mxu0 0.0
    %415 = vmatprep.subr.mxu0 0.0
    %416 = vmatpush1.msra.mxu0 0.0
    %417 = vmatprep.subr.mxu0 0.0
    %418 = vmatpush1.msra.mxu0 0.0
    %419 = vmatprep.subr.mxu0 0.0
    %420 = vmatpush1.msra.mxu0 0.0
    %421 = vmatprep.subr.mxu0 0.0
    %422 = vmatpush1.msra.mxu0 0.0
    %423 = vmatprep.subr.mxu0 0.0
    %424 = vmatpush1.msra.mxu0 0.0
    %425 = vmatprep.mubr.f32.mxu0 0.0
    %426 = vmatmul.mubr.f32.gmra.mrb[0].mxu0 %v356
    %v427 = vpop.f32.mrb[0].mxu0
    %v428 = vadd.f32 0.0, %v427
    %v429 = vpop.f32.mrb[0].mxu0
    %430 = vmatprep.mubr.f32.mxu0 0.0
    %431 = vmatmul.mubr.f32.gmra.mrb[0].mxu0 %v359
    %v432 = vpop.f32.mrb[0].mxu0
    %v433 = vadd.f32 0.0, %v432
    %v434 = vpop.f32.mrb[0].mxu0
    %435 = vdwg.mxu0
    %436 = vrot.lane.b32.xlu0 %v224, 120
    %v437 = vpop.permute.xlu0 %436
    %438 = vrot.lane.b32.xlu0 %v229, 120
    %v439 = vpop.permute.xlu0 %438
    %440 = vrot.lane.b32.xlu0 %v224, 88
    %v441 = vpop.permute.xlu0 %440
    %442 = vrot.lane.b32.xlu0 %v229, 88
    %v443 = vpop.permute.xlu0 %442
    %v444 = vsel %vm238, %v437, 0
    %v446 = vsel %vm238, %v439, 0
    %v448 = vsel %vm238, %v441, 0
    %v450 = vsel %vm238, %v443, 0
    %452 = vmatprep.subr.mxu0 0.0
    %453 = vmatpush1.xpose.msra.mxu0 %v448
    %454 = vmatprep.subr.mxu0 0.0
    %455 = vmatpush1.xpose.msra.mxu0 %v450
    %456 = vmatprep.subr.mxu0 0.0
    %457 = vmatpush1.xpose.msra.mxu0 0.0
    %458 = vmatprep.subr.mxu0 0.0
    %459 = vmatpush1.xpose.msra.mxu0 0.0
    %460 = vmatprep.subr.mxu0 0.0
    %461 = vmatpush1.xpose.msra.mxu0 0.0
    %462 = vmatprep.subr.mxu0 0.0
    %463 = vmatpush1.xpose.msra.mxu0 0.0
    %464 = vmatprep.subr.mxu0 0.0
    %465 = vmatpush1.xpose.msra.mxu0 0.0
    %466 = vmatprep.subr.mxu0 0.0
    %467 = vmatpush1.xpose.msra.mxu0 0.0
    %468 = vmatprep.subr.mxu0 0.0
    %469 = vmatpush1.xpose.msra.mxu0 0.0
    %470 = vmatprep.subr.mxu0 0.0
    %471 = vmatpush1.xpose.msra.mxu0 0.0
    %472 = vmatprep.subr.mxu0 0.0
    %473 = vmatpush1.xpose.msra.mxu0 0.0
    %474 = vmatprep.subr.mxu0 0.0
    %475 = vmatpush1.xpose.msra.mxu0 0.0
    %476 = vmatprep.subr.mxu0 0.0
    %477 = vmatpush1.xpose.msra.mxu0 0.0
    %478 = vmatprep.subr.mxu0 0.0
    %479 = vmatpush1.xpose.msra.mxu0 0.0
    %480 = vmatprep.subr.mxu0 0.0
    %481 = vmatpush1.xpose.msra.mxu0 0.0
    %482 = vmatprep.subr.mxu0 0.0
    %483 = vmatpush1.xpose.msra.mxu0 0.0
    %484 = vmatprep.subr.mxu0 0.0
    %485 = vmatpush1.xpose.msra.mxu0 0.0
    %486 = vmatprep.subr.mxu0 0.0
    %487 = vmatpush1.xpose.msra.mxu0 0.0
    %488 = vmatprep.subr.mxu0 0.0
    %489 = vmatpush1.xpose.msra.mxu0 0.0
    %490 = vmatprep.subr.mxu0 0.0
    %491 = vmatpush1.xpose.msra.mxu0 0.0
    %492 = vmatprep.subr.mxu0 0.0
    %493 = vmatpush1.xpose.msra.mxu0 0.0
    %494 = vmatprep.subr.mxu0 0.0
    %495 = vmatpush1.xpose.msra.mxu0 0.0
    %496 = vmatprep.subr.mxu0 0.0
    %497 = vmatpush1.xpose.msra.mxu0 0.0
    %498 = vmatprep.subr.mxu0 0.0
    %499 = vmatpush1.xpose.msra.mxu0 0.0
    %500 = vmatprep.subr.mxu0 0.0
    %501 = vmatpush1.xpose.msra.mxu0 0.0
    %502 = vmatprep.subr.mxu0 0.0
    %503 = vmatpush1.xpose.msra.mxu0 0.0
    %504 = vmatprep.subr.mxu0 0.0
    %505 = vmatpush1.xpose.msra.mxu0 0.0
    %506 = vmatprep.subr.mxu0 0.0
    %507 = vmatpush1.xpose.msra.mxu0 0.0
    %508 = vmatprep.subr.mxu0 0.0
    %509 = vmatpush1.xpose.msra.mxu0 0.0
    %510 = vmatprep.subr.mxu0 0.0
    %511 = vmatpush1.xpose.msra.mxu0 0.0
    %512 = vmatprep.subr.mxu0 0.0
    %513 = vmatpush1.xpose.msra.mxu0 0.0
    %514 = vmatprep.subr.mxu0 0.0
    %515 = vmatpush1.xpose.msra.mxu0 0.0
    %516 = vmatprep.mubr.f32.mxu0 0.0
    %517 = vmatmul.mubr.f32.gmra.mrb[0].mxu0 %v444
    %v518 = vpop.f32.mrb[0].mxu0
    %v519 = vadd.f32 0.0, %v518
    %v520 = vpop.f32.mrb[0].mxu0
    %521 = vmatprep.mubr.f32.mxu0 0.0
    %522 = vmatmul.mubr.f32.gmra.mrb[0].mxu0 %v446
    %v523 = vpop.f32.mrb[0].mxu0
    %v524 = vadd.f32 0.0, %v523
    %v525 = vpop.f32.mrb[0].mxu0
    %526 = vdwg.mxu0
    %v527 = vmul.f32 %v519, 0.35355338
    %v528 = vmul.f32 %v524, 0.35355338
    %v529 = vadd.f32 %v527, %v113
    %v530 = vadd.f32 %v528, %v114
    %v531 = vsel %vm326, %v529, -inf
    %532 = vmax.xlane.f32.xlu0 %v531
    %v533 = vpop.xlane.xlu0 %532
    %v534 = vsel %vm326, %v530, -inf
    %535 = vmax.xlane.f32.xlu0 %v534
    %v536 = vpop.xlane.xlu0 %535
    %v537 = vsub.f32 %v529, %v533
    %v538 = vsub.f32 %v530, %v536
    %v539 = vmul.f32 %v537, 1.442695
    %v540 = vpow.pop %v539
    %v541 = vmul.f32 %v538, 1.442695
    %v542 = vpow.pop %v541
    %v543 = vsel %vm326, %v540, 0.0
    %544 = vadd.xlane.f32.xlu0 %v543
    %v545 = vpop.xlane.xlu0 %544
    %v546 = vsel %vm326, %v542, 0.0
    %547 = vadd.xlane.f32.xlu0 %v546
    %v548 = vpop.xlane.xlu0 %547
    %v549 = vrcp.pop %v545
    %v550 = vrcp.pop %v548
    %v551 = vmul.f32 %v540, %v549
    %v552 = vmul.f32 %v542, %v550
    %553 = vrot.lane.b32.xlu0 %v224, 56
    %v554 = vpop.permute.xlu0 %553
    %555 = vrot.lane.b32.xlu0 %v229, 56
    %v556 = vpop.permute.xlu0 %555
    %v560 = vsel %vm326, %v551, 0
    %v563 = vsel %vm326, %v552, 0
    %565 = vmatprep.subr.mxu0 0.0
    %566 = vmatpush1.msra.mxu0 %v554
    %567 = vmatprep.subr.mxu0 0.0
    %568 = vmatpush1.msra.mxu0 %v556
    %569 = vmatprep.subr.mxu0 0.0
    %570 = vmatpush1.msra.mxu0 0.0
    %571 = vmatprep.subr.mxu0 0.0
    %572 = vmatpush1.msra.mxu0 0.0
    %573 = vmatprep.subr.mxu0 0.0
    %574 = vmatpush1.msra.mxu0 0.0
    %575 = vmatprep.subr.mxu0 0.0
    %576 = vmatpush1.msra.mxu0 0.0
    %577 = vmatprep.subr.mxu0 0.0
    %578 = vmatpush1.msra.mxu0 0.0
    %579 = vmatprep.subr.mxu0 0.0
    %580 = vmatpush1.msra.mxu0 0.0
    %581 = vmatprep.subr.mxu0 0.0
    %582 = vmatpush1.msra.mxu0 0.0
    %583 = vmatprep.subr.mxu0 0.0
    %584 = vmatpush1.msra.mxu0 0.0
    %585 = vmatprep.subr.mxu0 0.0
    %586 = vmatpush1.msra.mxu0 0.0
    %587 = vmatprep.subr.mxu0 0.0
    %588 = vmatpush1.msra.mxu0 0.0
    %589 = vmatprep.subr.mxu0 0.0
    %590 = vmatpush1.msra.mxu0 0.0
    %591 = vmatprep.subr.mxu0 0.0
    %592 = vmatpush1.msra.mxu0 0.0
    %593 = vmatprep.subr.mxu0 0.0
    %594 = vmatpush1.msra.mxu0 0.0
    %595 = vmatprep.subr.mxu0 0.0
    %596 = vmatpush1.msra.mxu0 0.0
    %597 = vmatprep.subr.mxu0 0.0
    %598 = vmatpush1.msra.mxu0 0.0
    %599 = vmatprep.subr.mxu0 0.0
    %600 = vmatpush1.msra.mxu0 0.0
    %601 = vmatprep.subr.mxu0 0.0
    %602 = vmatpush1.msra.mxu0 0.0
    %603 = vmatprep.subr.mxu0 0.0
    %604 = vmatpush1.msra.mxu0 0.0
    %605 = vmatprep.subr.mxu0 0.0
    %606 = vmatpush1.msra.mxu0 0.0
    %607 = vmatprep.subr.mxu0 0.0
    %608 = vmatpush1.msra.mxu0 0.0
    %609 = vmatprep.subr.mxu0 0.0
    %610 = vmatpush1.msra.mxu0 0.0
    %611 = vmatprep.subr.mxu0 0.0
    %612 = vmatpush1.msra.mxu0 0.0
    %613 = vmatprep.subr.mxu0 0.0
    %614 = vmatpush1.msra.mxu0 0.0
    %615 = vmatprep.subr.mxu0 0.0
    %616 = vmatpush1.msra.mxu0 0.0
    %617 = vmatprep.subr.mxu0 0.0
    %618 = vmatpush1.msra.mxu0 0.0
    %619 = vmatprep.subr.mxu0 0.0
    %620 = vmatpush1.msra.mxu0 0.0
    %621 = vmatprep.subr.mxu0 0.0
    %622 = vmatpush1.msra.mxu0 0.0
    %623 = vmatprep.subr.mxu0 0.0
    %624 = vmatpush1.msra.mxu0 0.0
    %625 = vmatprep.subr.mxu0 0.0
    %626 = vmatpush1.msra.mxu0 0.0
    %627 = vmatprep.subr.mxu0 0.0
    %628 = vmatpush1.msra.mxu0 0.0
    %629 = vmatprep.mubr.f32.mxu0 0.0
    %630 = vmatmul.mubr.f32.gmra.mrb[0].mxu0 %v560
    %v631 = vpop.f32.mrb[0].mxu0
    %v632 = vadd.f32 0.0, %v631
    %v633 = vpop.f32.mrb[0].mxu0
    %634 = vmatprep.mubr.f32.mxu0 0.0
    %635 = vmatmul.mubr.f32.gmra.mrb[0].mxu0 %v563
    %v636 = vpop.f32.mrb[0].mxu0
    %v637 = vadd.f32 0.0, %v636
    %v638 = vpop.f32.mrb[0].mxu0
    %639 = vdwg.mxu0
    %640 = vrot.lane.b32.xlu0 %v224, 112
    %v641 = vpop.permute.xlu0 %640
    %642 = vrot.lane.b32.xlu0 %v229, 112
    %v643 = vpop.permute.xlu0 %642
    %644 = vrot.lane.b32.xlu0 %v224, 80
    %v645 = vpop.permute.xlu0 %644
    %646 = vrot.lane.b32.xlu0 %v229, 80
    %v647 = vpop.permute.xlu0 %646
    %v648 = vsel %vm238, %v641, 0
    %v650 = vsel %vm238, %v643, 0
    %v652 = vsel %vm238, %v645, 0
    %v654 = vsel %vm238, %v647, 0
    %656 = vmatprep.subr.mxu0 0.0
    %657 = vmatpush1.xpose.msra.mxu0 %v652
    %658 = vmatprep.subr.mxu0 0.0
    %659 = vmatpush1.xpose.msra.mxu0 %v654
    %660 = vmatprep.subr.mxu0 0.0
    %661 = vmatpush1.xpose.msra.mxu0 0.0
    %662 = vmatprep.subr.mxu0 0.0
    %663 = vmatpush1.xpose.msra.mxu0 0.0
    %664 = vmatprep.subr.mxu0 0.0
    %665 = vmatpush1.xpose.msra.mxu0 0.0
    %666 = vmatprep.subr.mxu0 0.0
    %667 = vmatpush1.xpose.msra.mxu0 0.0
    %668 = vmatprep.subr.mxu0 0.0
    %669 = vmatpush1.xpose.msra.mxu0 0.0
    %670 = vmatprep.subr.mxu0 0.0
    %671 = vmatpush1.xpose.msra.mxu0 0.0
    %672 = vmatprep.subr.mxu0 0.0
    %673 = vmatpush1.xpose.msra.mxu0 0.0
    %674 = vmatprep.subr.mxu0 0.0
    %675 = vmatpush1.xpose.msra.mxu0 0.0
    %676 = vmatprep.subr.mxu0 0.0
    %677 = vmatpush1.xpose.msra.mxu0 0.0
    %678 = vmatprep.subr.mxu0 0.0
    %679 = vmatpush1.xpose.msra.mxu0 0.0
    %680 = vmatprep.subr.mxu0 0.0
    %681 = vmatpush1.xpose.msra.mxu0 0.0
    %682 = vmatprep.subr.mxu0 0.0
    %683 = vmatpush1.xpose.msra.mxu0 0.0
    %684 = vmatprep.subr.mxu0 0.0
    %685 = vmatpush1.xpose.msra.mxu0 0.0
    %686 = vmatprep.subr.mxu0 0.0
    %687 = vmatpush1.xpose.msra.mxu0 0.0
    %688 = vmatprep.subr.mxu0 0.0
    %689 = vmatpush1.xpose.msra.mxu0 0.0
    %690 = vmatprep.subr.mxu0 0.0
    %691 = vmatpush1.xpose.msra.mxu0 0.0
    %692 = vmatprep.subr.mxu0 0.0
    %693 = vmatpush1.xpose.msra.mxu0 0.0
    %694 = vmatprep.subr.mxu0 0.0
    %695 = vmatpush1.xpose.msra.mxu0 0.0
    %696 = vmatprep.subr.mxu0 0.0
    %697 = vmatpush1.xpose.msra.mxu0 0.0
    %698 = vmatprep.subr.mxu0 0.0
    %699 = vmatpush1.xpose.msra.mxu0 0.0
    %700 = vmatprep.subr.mxu0 0.0
    %701 = vmatpush1.xpose.msra.mxu0 0.0
    %702 = vmatprep.subr.mxu0 0.0
    %703 = vmatpush1.xpose.msra.mxu0 0.0
    %704 = vmatprep.subr.mxu0 0.0
    %705 = vmatpush1.xpose.msra.mxu0 0.0
    %706 = vmatprep.subr.mxu0 0.0
    %707 = vmatpush1.xpose.msra.mxu0 0.0
    %708 = vmatprep.subr.mxu0 0.0
    %709 = vmatpush1.xpose.msra.mxu0 0.0
    %710 = vmatprep.subr.mxu0 0.0
    %711 = vmatpush1.xpose.msra.mxu0 0.0
    %712 = vmatprep.subr.mxu0 0.0
    %713 = vmatpush1.xpose.msra.mxu0 0.0
    %714 = vmatprep.subr.mxu0 0.0
    %715 = vmatpush1.xpose.msra.mxu0 0.0
    %716 = vmatprep.subr.mxu0 0.0
    %717 = vmatpush1.xpose.msra.mxu0 0.0
    %718 = vmatprep.subr.mxu0 0.0
    %719 = vmatpush1.xpose.msra.mxu0 0.0
    %720 = vmatprep.mubr.f32.mxu0 0.0
    %721 = vmatmul.mubr.f32.gmra.mrb[0].mxu0 %v648
    %v722 = vpop.f32.mrb[0].mxu0
    %v723 = vadd.f32 0.0, %v722
    %v724 = vpop.f32.mrb[0].mxu0
    %725 = vmatprep.mubr.f32.mxu0 0.0
    %726 = vmatmul.mubr.f32.gmra.mrb[0].mxu0 %v650
    %v727 = vpop.f32.mrb[0].mxu0
    %v728 = vadd.f32 0.0, %v727
    %v729 = vpop.f32.mrb[0].mxu0
    %730 = vdwg.mxu0
    %v731 = vmul.f32 %v723, 0.35355338
    %v732 = vmul.f32 %v728, 0.35355338
    %v733 = vadd.f32 %v731, %v113
    %v734 = vadd.f32 %v732, %v114
    %v735 = vsel %vm326, %v733, -inf
    %736 = vmax.xlane.f32.xlu0 %v735
    %v737 = vpop.xlane.xlu0 %736
    %v738 = vsel %vm326, %v734, -inf
    %739 = vmax.xlane.f32.xlu0 %v738
    %v740 = vpop.xlane.xlu0 %739
    %v741 = vsub.f32 %v733, %v737
    %v742 = vsub.f32 %v734, %v740
    %v743 = vmul.f32 %v741, 1.442695
    %v744 = vpow.pop %v743
    %v745 = vmul.f32 %v742, 1.442695
    %v746 = vpow.pop %v745
    %v747 = vsel %vm326, %v744, 0.0
    %748 = vadd.xlane.f32.xlu0 %v747
    %v749 = vpop.xlane.xlu0 %748
    %v750 = vsel %vm326, %v746, 0.0
    %751 = vadd.xlane.f32.xlu0 %v750
    %v752 = vpop.xlane.xlu0 %751
    %v753 = vrcp.pop %v749
    %v754 = vrcp.pop %v752
    %v755 = vmul.f32 %v744, %v753
    %v756 = vmul.f32 %v746, %v754
    %757 = vrot.lane.b32.xlu0 %v224, 48
    %v758 = vpop.permute.xlu0 %757
    %759 = vrot.lane.b32.xlu0 %v229, 48
    %v760 = vpop.permute.xlu0 %759
    %v764 = vsel %vm326, %v755, 0
    %v767 = vsel %vm326, %v756, 0
    %769 = vmatprep.subr.mxu0 0.0
    %770 = vmatpush1.msra.mxu0 %v758
    %771 = vmatprep.subr.mxu0 0.0
    %772 = vmatpush1.msra.mxu0 %v760
    %773 = vmatprep.subr.mxu0 0.0
    %774 = vmatpush1.msra.mxu0 0.0
    %775 = vmatprep.subr.mxu0 0.0
    %776 = vmatpush1.msra.mxu0 0.0
    %777 = vmatprep.subr.mxu0 0.0
    %778 = vmatpush1.msra.mxu0 0.0
    %779 = vmatprep.subr.mxu0 0.0
    %780 = vmatpush1.msra.mxu0 0.0
    %781 = vmatprep.subr.mxu0 0.0
    %782 = vmatpush1.msra.mxu0 0.0
    %783 = vmatprep.subr.mxu0 0.0
    %784 = vmatpush1.msra.mxu0 0.0
    %785 = vmatprep.subr.mxu0 0.0
    %786 = vmatpush1.msra.mxu0 0.0
    %787 = vmatprep.subr.mxu0 0.0
    %788 = vmatpush1.msra.mxu0 0.0
    %789 = vmatprep.subr.mxu0 0.0
    %790 = vmatpush1.msra.mxu0 0.0
    %791 = vmatprep.subr.mxu0 0.0
    %792 = vmatpush1.msra.mxu0 0.0
    %793 = vmatprep.subr.mxu0 0.0
    %794 = vmatpush1.msra.mxu0 0.0
    %795 = vmatprep.subr.mxu0 0.0
    %796 = vmatpush1.msra.mxu0 0.0
    %797 = vmatprep.subr.mxu0 0.0
    %798 = vmatpush1.msra.mxu0 0.0
    %799 = vmatprep.subr.mxu0 0.0
    %800 = vmatpush1.msra.mxu0 0.0
    %801 = vmatprep.subr.mxu0 0.0
    %802 = vmatpush1.msra.mxu0 0.0
    %803 = vmatprep.subr.mxu0 0.0
    %804 = vmatpush1.msra.mxu0 0.0
    %805 = vmatprep.subr.mxu0 0.0
    %806 = vmatpush1.msra.mxu0 0.0
    %807 = vmatprep.subr.mxu0 0.0
    %808 = vmatpush1.msra.mxu0 0.0
    %809 = vmatprep.subr.mxu0 0.0
    %810 = vmatpush1.msra.mxu0 0.0
    %811 = vmatprep.subr.mxu0 0.0
    %812 = vmatpush1.msra.mxu0 0.0
    %813 = vmatprep.subr.mxu0 0.0
    %814 = vmatpush1.msra.mxu0 0.0
    %815 = vmatprep.subr.mxu0 0.0
    %816 = vmatpush1.msra.mxu0 0.0
    %817 = vmatprep.subr.mxu0 0.0
    %818 = vmatpush1.msra.mxu0 0.0
    %819 = vmatprep.subr.mxu0 0.0
    %820 = vmatpush1.msra.mxu0 0.0
    %821 = vmatprep.subr.mxu0 0.0
    %822 = vmatpush1.msra.mxu0 0.0
    %823 = vmatprep.subr.mxu0 0.0
    %824 = vmatpush1.msra.mxu0 0.0
    %825 = vmatprep.subr.mxu0 0.0
    %826 = vmatpush1.msra.mxu0 0.0
    %827 = vmatprep.subr.mxu0 0.0
    %828 = vmatpush1.msra.mxu0 0.0
    %829 = vmatprep.subr.mxu0 0.0
    %830 = vmatpush1.msra.mxu0 0.0
    %831 = vmatprep.subr.mxu0 0.0
    %832 = vmatpush1.msra.mxu0 0.0
    %833 = vmatprep.mubr.f32.mxu0 0.0
    %834 = vmatmul.mubr.f32.gmra.mrb[0].mxu0 %v764
    %v835 = vpop.f32.mrb[0].mxu0
    %v836 = vadd.f32 0.0, %v835
    %v837 = vpop.f32.mrb[0].mxu0
    %838 = vmatprep.mubr.f32.mxu0 0.0
    %839 = vmatmul.mubr.f32.gmra.mrb[0].mxu0 %v767
    %v840 = vpop.f32.mrb[0].mxu0
    %v841 = vadd.f32 0.0, %v840
    %v842 = vpop.f32.mrb[0].mxu0
    %843 = vdwg.mxu0
    %844 = vrot.lane.b32.xlu0 %v224, 104
    %v845 = vpop.permute.xlu0 %844
    %846 = vrot.lane.b32.xlu0 %v229, 104
    %v847 = vpop.permute.xlu0 %846
    %848 = vrot.lane.b32.xlu0 %v224, 72
    %v849 = vpop.permute.xlu0 %848
    %850 = vrot.lane.b32.xlu0 %v229, 72
    %v851 = vpop.permute.xlu0 %850
    %v852 = vsel %vm238, %v845, 0
    %v854 = vsel %vm238, %v847, 0
    %v856 = vsel %vm238, %v849, 0
    %v858 = vsel %vm238, %v851, 0
    %860 = vmatprep.subr.mxu0 0.0
    %861 = vmatpush1.xpose.msra.mxu0 %v856
    %862 = vmatprep.subr.mxu0 0.0
    %863 = vmatpush1.xpose.msra.mxu0 %v858
    %864 = vmatprep.subr.mxu0 0.0
    %865 = vmatpush1.xpose.msra.mxu0 0.0
    %866 = vmatprep.subr.mxu0 0.0
    %867 = vmatpush1.xpose.msra.mxu0 0.0
    %868 = vmatprep.subr.mxu0 0.0
    %869 = vmatpush1.xpose.msra.mxu0 0.0
    %870 = vmatprep.subr.mxu0 0.0
    %871 = vmatpush1.xpose.msra.mxu0 0.0
    %872 = vmatprep.subr.mxu0 0.0
    %873 = vmatpush1.xpose.msra.mxu0 0.0
    %874 = vmatprep.subr.mxu0 0.0
    %875 = vmatpush1.xpose.msra.mxu0 0.0
    %876 = vmatprep.subr.mxu0 0.0
    %877 = vmatpush1.xpose.msra.mxu0 0.0
    %878 = vmatprep.subr.mxu0 0.0
    %879 = vmatpush1.xpose.msra.mxu0 0.0
    %880 = vmatprep.subr.mxu0 0.0
    %881 = vmatpush1.xpose.msra.mxu0 0.0
    %882 = vmatprep.subr.mxu0 0.0
    %883 = vmatpush1.xpose.msra.mxu0 0.0
    %884 = vmatprep.subr.mxu0 0.0
    %885 = vmatpush1.xpose.msra.mxu0 0.0
    %886 = vmatprep.subr.mxu0 0.0
    %887 = vmatpush1.xpose.msra.mxu0 0.0
    %888 = vmatprep.subr.mxu0 0.0
    %889 = vmatpush1.xpose.msra.mxu0 0.0
    %890 = vmatprep.subr.mxu0 0.0
    %891 = vmatpush1.xpose.msra.mxu0 0.0
    %892 = vmatprep.subr.mxu0 0.0
    %893 = vmatpush1.xpose.msra.mxu0 0.0
    %894 = vmatprep.subr.mxu0 0.0
    %895 = vmatpush1.xpose.msra.mxu0 0.0
    %896 = vmatprep.subr.mxu0 0.0
    %897 = vmatpush1.xpose.msra.mxu0 0.0
    %898 = vmatprep.subr.mxu0 0.0
    %899 = vmatpush1.xpose.msra.mxu0 0.0
    %900 = vmatprep.subr.mxu0 0.0
    %901 = vmatpush1.xpose.msra.mxu0 0.0
    %902 = vmatprep.subr.mxu0 0.0
    %903 = vmatpush1.xpose.msra.mxu0 0.0
    %904 = vmatprep.subr.mxu0 0.0
    %905 = vmatpush1.xpose.msra.mxu0 0.0
    %906 = vmatprep.subr.mxu0 0.0
    %907 = vmatpush1.xpose.msra.mxu0 0.0
    %908 = vmatprep.subr.mxu0 0.0
    %909 = vmatpush1.xpose.msra.mxu0 0.0
    %910 = vmatprep.subr.mxu0 0.0
    %911 = vmatpush1.xpose.msra.mxu0 0.0
    %912 = vmatprep.subr.mxu0 0.0
    %913 = vmatpush1.xpose.msra.mxu0 0.0
    %914 = vmatprep.subr.mxu0 0.0
    %915 = vmatpush1.xpose.msra.mxu0 0.0
    %916 = vmatprep.subr.mxu0 0.0
    %917 = vmatpush1.xpose.msra.mxu0 0.0
    %918 = vmatprep.subr.mxu0 0.0
    %919 = vmatpush1.xpose.msra.mxu0 0.0
    %920 = vmatprep.subr.mxu0 0.0
    %921 = vmatpush1.xpose.msra.mxu0 0.0
    %922 = vmatprep.subr.mxu0 0.0
    %923 = vmatpush1.xpose.msra.mxu0 0.0
    %924 = vmatprep.mubr.f32.mxu0 0.0
    %925 = vmatmul.mubr.f32.gmra.mrb[0].mxu0 %v852
    %v926 = vpop.f32.mrb[0].mxu0
    %v927 = vadd.f32 0.0, %v926
    %v928 = vpop.f32.mrb[0].mxu0
    %929 = vmatprep.mubr.f32.mxu0 0.0
    %930 = vmatmul.mubr.f32.gmra.mrb[0].mxu0 %v854
    %v931 = vpop.f32.mrb[0].mxu0
    %v932 = vadd.f32 0.0, %v931
    %v933 = vpop.f32.mrb[0].mxu0
    %934 = vdwg.mxu0
    %v935 = vmul.f32 %v927, 0.35355338
    %v936 = vmul.f32 %v932, 0.35355338
    %v937 = vadd.f32 %v935, %v113
    %v938 = vadd.f32 %v936, %v114
    %v939 = vsel %vm326, %v937, -inf
    %940 = vmax.xlane.f32.xlu0 %v939
    %v941 = vpop.xlane.xlu0 %940
    %v942 = vsel %vm326, %v938, -inf
    %943 = vmax.xlane.f32.xlu0 %v942
    %v944 = vpop.xlane.xlu0 %943
    %v945 = vsub.f32 %v937, %v941
    %v946 = vsub.f32 %v938, %v944
    %v947 = vmul.f32 %v945, 1.442695
    %v948 = vpow.pop %v947
    %v949 = vmul.f32 %v946, 1.442695
    %v950 = vpow.pop %v949
    %v951 = vsel %vm326, %v948, 0.0
    %952 = vadd.xlane.f32.xlu0 %v951
    %v953 = vpop.xlane.xlu0 %952
    %v954 = vsel %vm326, %v950, 0.0
    %955 = vadd.xlane.f32.xlu0 %v954
    %v956 = vpop.xlane.xlu0 %955
    %v957 = vrcp.pop %v953
    %v958 = vrcp.pop %v956
    %v959 = vmul.f32 %v948, %v957
    %v960 = vmul.f32 %v950, %v958
    %961 = vrot.lane.b32.xlu0 %v224, 40
    %v962 = vpop.permute.xlu0 %961
    %963 = vrot.lane.b32.xlu0 %v229, 40
    %v964 = vpop.permute.xlu0 %963
    %v968 = vsel %vm326, %v959, 0
    %v971 = vsel %vm326, %v960, 0
    %973 = vmatprep.subr.mxu0 0.0
    %974 = vmatpush1.msra.mxu0 %v962
    %975 = vmatprep.subr.mxu0 0.0
    %976 = vmatpush1.msra.mxu0 %v964
    %977 = vmatprep.subr.mxu0 0.0
    %978 = vmatpush1.msra.mxu0 0.0
    %979 = vmatprep.subr.mxu0 0.0
    %980 = vmatpush1.msra.mxu0 0.0
    %981 = vmatprep.subr.mxu0 0.0
    %982 = vmatpush1.msra.mxu0 0.0
    %983 = vmatprep.subr.mxu0 0.0
    %984 = vmatpush1.msra.mxu0 0.0
    %985 = vmatprep.subr.mxu0 0.0
    %986 = vmatpush1.msra.mxu0 0.0
    %987 = vmatprep.subr.mxu0 0.0
    %988 = vmatpush1.msra.mxu0 0.0
    %989 = vmatprep.subr.mxu0 0.0
    %990 = vmatpush1.msra.mxu0 0.0
    %991 = vmatprep.subr.mxu0 0.0
    %992 = vmatpush1.msra.mxu0 0.0
    %993 = vmatprep.subr.mxu0 0.0
    %994 = vmatpush1.msra.mxu0 0.0
    %995 = vmatprep.subr.mxu0 0.0
    %996 = vmatpush1.msra.mxu0 0.0
    %997 = vmatprep.subr.mxu0 0.0
    %998 = vmatpush1.msra.mxu0 0.0
    %999 = vmatprep.subr.mxu0 0.0
    %1000 = vmatpush1.msra.mxu0 0.0
    %1001 = vmatprep.subr.mxu0 0.0
    %1002 = vmatpush1.msra.mxu0 0.0
    %1003 = vmatprep.subr.mxu0 0.0
    %1004 = vmatpush1.msra.mxu0 0.0
    %1005 = vmatprep.subr.mxu0 0.0
    %1006 = vmatpush1.msra.mxu0 0.0
    %1007 = vmatprep.subr.mxu0 0.0
    %1008 = vmatpush1.msra.mxu0 0.0
    %1009 = vmatprep.subr.mxu0 0.0
    %1010 = vmatpush1.msra.mxu0 0.0
    %1011 = vmatprep.subr.mxu0 0.0
    %1012 = vmatpush1.msra.mxu0 0.0
    %1013 = vmatprep.subr.mxu0 0.0
    %1014 = vmatpush1.msra.mxu0 0.0
    %1015 = vmatprep.subr.mxu0 0.0
    %1016 = vmatpush1.msra.mxu0 0.0
    %1017 = vmatprep.subr.mxu0 0.0
    %1018 = vmatpush1.msra.mxu0 0.0
    %1019 = vmatprep.subr.mxu0 0.0
    %1020 = vmatpush1.msra.mxu0 0.0
    %1021 = vmatprep.subr.mxu0 0.0
    %1022 = vmatpush1.msra.mxu0 0.0
    %1023 = vmatprep.subr.mxu0 0.0
    %1024 = vmatpush1.msra.mxu0 0.0
    %1025 = vmatprep.subr.mxu0 0.0
    %1026 = vmatpush1.msra.mxu0 0.0
    %1027 = vmatprep.subr.mxu0 0.0
    %1028 = vmatpush1.msra.mxu0 0.0
    %1029 = vmatprep.subr.mxu0 0.0
    %1030 = vmatpush1.msra.mxu0 0.0
    %1031 = vmatprep.subr.mxu0 0.0
    %1032 = vmatpush1.msra.mxu0 0.0
    %1033 = vmatprep.subr.mxu0 0.0
    %1034 = vmatpush1.msra.mxu0 0.0
    %1035 = vmatprep.subr.mxu0 0.0
    %1036 = vmatpush1.msra.mxu0 0.0
    %1037 = vmatprep.mubr.f32.mxu0 0.0
    %1038 = vmatmul.mubr.f32.gmra.mrb[0].mxu0 %v968
    %v1039 = vpop.f32.mrb[0].mxu0
    %v1040 = vadd.f32 0.0, %v1039
    %v1041 = vpop.f32.mrb[0].mxu0
    %1042 = vmatprep.mubr.f32.mxu0 0.0
    %1043 = vmatmul.mubr.f32.gmra.mrb[0].mxu0 %v971
    %v1044 = vpop.f32.mrb[0].mxu0
    %v1045 = vadd.f32 0.0, %v1044
    %v1046 = vpop.f32.mrb[0].mxu0
    %1047 = vdwg.mxu0
    %1050 = vrot.lane.b32.xlu0 %v632, 8
    %v1051 = vpop.permute.xlu0 %1050
    %1052 = vrot.lane.b32.xlu0 %v637, 8
    %v1053 = vpop.permute.xlu0 %1052
    %1058 = vrot.lane.b32.xlu0 %v836, 16
    %v1059 = vpop.permute.xlu0 %1058
    %1060 = vrot.lane.b32.xlu0 %v841, 16
    %v1061 = vpop.permute.xlu0 %1060
    %1066 = vrot.lane.b32.xlu0 %v1040, 24
    %v1067 = vpop.permute.xlu0 %1066
    %1068 = vrot.lane.b32.xlu0 %v1045, 24
    %v1069 = vpop.permute.xlu0 %1068
    %v1072 = vsel %vm238, %v428, %v1051
    %v1073 = vsel %vm238, %v433, %v1053
    %v1074 = vsel %vm326, %v1072, %v1059
    %v1075 = vsel %vm326, %v1073, %v1061
    %vm1076 = vcmask 195584
    %v1077 = vsel %vm1076, %v1074, %v1067
    %v1078 = vsel %vm1076, %v1075, %v1069
    %1083 = vrot.lane.b32.xlu0 %v56, 32
    %v1084 = vpop.permute.xlu0 %1083
    %1085 = vrot.lane.b32.xlu0 %v58, 32
    %v1086 = vpop.permute.xlu0 %1085
    %1087 = vrot.lane.b32.xlu0 %v60, 32
    %v1088 = vpop.permute.xlu0 %1087
    %1089 = vrot.lane.b32.xlu0 %v62, 32
    %v1090 = vpop.permute.xlu0 %1089
    %v1096 = vsel %vm115, %v1077, 0
    %v1099 = vsel %vm115, %v1078, 0
    %1101 = vmatprep.subr.mxu0 0.0
    %1102 = vmatpush1.msra.mxu0 %v1084
    %1103 = vmatprep.subr.mxu0 0.0
    %1104 = vmatpush1.msra.mxu0 %v1086
    %1105 = vmatprep.subr.mxu0 0.0
    %1106 = vmatpush1.msra.mxu0 %v1088
    %1107 = vmatprep.subr.mxu0 0.0
    %1108 = vmatpush1.msra.mxu0 %v1090
    %1109 = vmatprep.subr.mxu0 0.0
    %1110 = vmatpush1.msra.mxu0 0.0
    %1111 = vmatprep.subr.mxu0 0.0
    %1112 = vmatpush1.msra.mxu0 0.0
    %1113 = vmatprep.subr.mxu0 0.0
    %1114 = vmatpush1.msra.mxu0 0.0
    %1115 = vmatprep.subr.mxu0 0.0
    %1116 = vmatpush1.msra.mxu0 0.0
    %1117 = vmatprep.subr.mxu0 0.0
    %1118 = vmatpush1.msra.mxu0 0.0
    %1119 = vmatprep.subr.mxu0 0.0
    %1120 = vmatpush1.msra.mxu0 0.0
    %1121 = vmatprep.subr.mxu0 0.0
    %1122 = vmatpush1.msra.mxu0 0.0
    %1123 = vmatprep.subr.mxu0 0.0
    %1124 = vmatpush1.msra.mxu0 0.0
    %1125 = vmatprep.subr.mxu0 0.0
    %1126 = vmatpush1.msra.mxu0 0.0
    %1127 = vmatprep.subr.mxu0 0.0
    %1128 = vmatpush1.msra.mxu0 0.0
    %1129 = vmatprep.subr.mxu0 0.0
    %1130 = vmatpush1.msra.mxu0 0.0
    %1131 = vmatprep.subr.mxu0 0.0
    %1132 = vmatpush1.msra.mxu0 0.0
    %1133 = vmatprep.subr.mxu0 0.0
    %1134 = vmatpush1.msra.mxu0 0.0
    %1135 = vmatprep.subr.mxu0 0.0
    %1136 = vmatpush1.msra.mxu0 0.0
    %1137 = vmatprep.subr.mxu0 0.0
    %1138 = vmatpush1.msra.mxu0 0.0
    %1139 = vmatprep.subr.mxu0 0.0
    %1140 = vmatpush1.msra.mxu0 0.0
    %1141 = vmatprep.subr.mxu0 0.0
    %1142 = vmatpush1.msra.mxu0 0.0
    %1143 = vmatprep.subr.mxu0 0.0
    %1144 = vmatpush1.msra.mxu0 0.0
    %1145 = vmatprep.subr.mxu0 0.0
    %1146 = vmatpush1.msra.mxu0 0.0
    %1147 = vmatprep.subr.mxu0 0.0
    %1148 = vmatpush1.msra.mxu0 0.0
    %1149 = vmatprep.subr.mxu0 0.0
    %1150 = vmatpush1.msra.mxu0 0.0
    %1151 = vmatprep.subr.mxu0 0.0
    %1152 = vmatpush1.msra.mxu0 0.0
    %1153 = vmatprep.subr.mxu0 0.0
    %1154 = vmatpush1.msra.mxu0 0.0
    %1155 = vmatprep.subr.mxu0 0.0
    %1156 = vmatpush1.msra.mxu0 0.0
    %1157 = vmatprep.subr.mxu0 0.0
    %1158 = vmatpush1.msra.mxu0 0.0
    %1159 = vmatprep.subr.mxu0 0.0
    %1160 = vmatpush1.msra.mxu0 0.0
    %1161 = vmatprep.subr.mxu0 0.0
    %1162 = vmatpush1.msra.mxu0 0.0
    %1163 = vmatprep.subr.mxu0 0.0
    %1164 = vmatpush1.msra.mxu0 0.0
    %1165 = vmatprep.mubr.f32.mxu0 0.0
    %1166 = vmatmul.mubr.f32.gmra.mrb[0].mxu0 %v1096
    %v1167 = vpop.f32.mrb[0].mxu0
    %v1168 = vadd.f32 %v68, %v1167
    %v1169 = vpop.f32.mrb[0].mxu0
    %1170 = vmatprep.mubr.f32.mxu0 0.0
    %1171 = vmatmul.mubr.f32.gmra.mrb[0].mxu0 %v1099
    %v1172 = vpop.f32.mrb[0].mxu0
    %v1173 = vadd.f32 %v68, %v1172
    %v1174 = vpop.f32.mrb[0].mxu0
    %1175 = vdwg.mxu0
    %v1176 = vadd.f32 %v54, %v1168
    %v1177 = vadd.f32 %v55, %v1173
    %v1178 = vsel %vm115, %v1176, 0.0
    %1179 = vadd.xlane.f32.xlu0 %v1178
    %v1180 = vpop.xlane.xlu0 %1179
    %v1181 = vsel %vm115, %v1177, 0.0
    %1182 = vadd.xlane.f32.xlu0 %v1181
    %v1183 = vpop.xlane.xlu0 %1182
    %v1184 = vmul.f32 %v1180, %v122
    %v1185 = vmul.f32 %v1183, %v122
    %v1186 = vsub.f32 %v1176, %v1184
    %v1187 = vsub.f32 %v1177, %v1185
    %v1188 = vmul.f32 %v1186, %v1186
    %v1189 = vmul.f32 %v1187, %v1187
    %v1190 = vsel %vm115, %v1188, 0.0
    %1191 = vadd.xlane.f32.xlu0 %v1190
    %v1192 = vpop.xlane.xlu0 %1191
    %v1193 = vsel %vm115, %v1189, 0.0
    %1194 = vadd.xlane.f32.xlu0 %v1193
    %v1195 = vpop.xlane.xlu0 %1194
    %v1196 = vmul.f32 %v1192, %v122
    %v1197 = vmul.f32 %v1195, %v122
    %v1198 = vadd.f32 %v1196, 1e-05
    %v1199 = vadd.f32 %v1197, 1e-05
    %v1200 = vrsqrt.pop %v1198
    %v1201 = vrsqrt.pop %v1199
    %v1202 = vmul.f32 %v1186, %v1200
    %v1203 = vmul.f32 %v1187, %v1201
    %v1204 = vmul.f32 %v1202, %v84
    %v1205 = vmul.f32 %v1203, %v84
    %v1206 = vadd.f32 %v1204, %v88
    %v1207 = vadd.f32 %v1205, %v88
    %1209 = vrot.lane.b32.xlu0 %v72, 96
    %v1210 = vpop.permute.xlu0 %1209
    %v1213 = vsel %vm115, %v1206, 0
    %v1216 = vsel %vm115, %v1207, 0
    %1218 = vmatprep.subr.mxu0 0.0
    %1219 = vmatpush1.msra.mxu0 %v57
    %1220 = vmatprep.subr.mxu0 0.0
    %1221 = vmatpush1.msra.mxu0 %v59
    %1222 = vmatprep.subr.mxu0 0.0
    %1223 = vmatpush1.msra.mxu0 %v61
    %1224 = vmatprep.subr.mxu0 0.0
    %1225 = vmatpush1.msra.mxu0 %v63
    %1226 = vmatprep.subr.mxu0 0.0
    %1227 = vmatpush1.msra.mxu0 0.0
    %1228 = vmatprep.subr.mxu0 0.0
    %1229 = vmatpush1.msra.mxu0 0.0
    %1230 = vmatprep.subr.mxu0 0.0
    %1231 = vmatpush1.msra.mxu0 0.0
    %1232 = vmatprep.subr.mxu0 0.0
    %1233 = vmatpush1.msra.mxu0 0.0
    %1234 = vmatprep.subr.mxu0 0.0
    %1235 = vmatpush1.msra.mxu0 0.0
    %1236 = vmatprep.subr.mxu0 0.0
    %1237 = vmatpush1.msra.mxu0 0.0
    %1238 = vmatprep.subr.mxu0 0.0
    %1239 = vmatpush1.msra.mxu0 0.0
    %1240 = vmatprep.subr.mxu0 0.0
    %1241 = vmatpush1.msra.mxu0 0.0
    %1242 = vmatprep.subr.mxu0 0.0
    %1243 = vmatpush1.msra.mxu0 0.0
    %1244 = vmatprep.subr.mxu0 0.0
    %1245 = vmatpush1.msra.mxu0 0.0
    %1246 = vmatprep.subr.mxu0 0.0
    %1247 = vmatpush1.msra.mxu0 0.0
    %1248 = vmatprep.subr.mxu0 0.0
    %1249 = vmatpush1.msra.mxu0 0.0
    %1250 = vmatprep.subr.mxu0 0.0
    %1251 = vmatpush1.msra.mxu0 0.0
    %1252 = vmatprep.subr.mxu0 0.0
    %1253 = vmatpush1.msra.mxu0 0.0
    %1254 = vmatprep.subr.mxu0 0.0
    %1255 = vmatpush1.msra.mxu0 0.0
    %1256 = vmatprep.subr.mxu0 0.0
    %1257 = vmatpush1.msra.mxu0 0.0
    %1258 = vmatprep.subr.mxu0 0.0
    %1259 = vmatpush1.msra.mxu0 0.0
    %1260 = vmatprep.subr.mxu0 0.0
    %1261 = vmatpush1.msra.mxu0 0.0
    %1262 = vmatprep.subr.mxu0 0.0
    %1263 = vmatpush1.msra.mxu0 0.0
    %1264 = vmatprep.subr.mxu0 0.0
    %1265 = vmatpush1.msra.mxu0 0.0
    %1266 = vmatprep.subr.mxu0 0.0
    %1267 = vmatpush1.msra.mxu0 0.0
    %1268 = vmatprep.subr.mxu0 0.0
    %1269 = vmatpush1.msra.mxu0 0.0
    %1270 = vmatprep.subr.mxu0 0.0
    %1271 = vmatpush1.msra.mxu0 0.0
    %1272 = vmatprep.subr.mxu0 0.0
    %1273 = vmatpush1.msra.mxu0 0.0
    %1274 = vmatprep.subr.mxu0 0.0
    %1275 = vmatpush1.msra.mxu0 0.0
    %1276 = vmatprep.subr.mxu0 0.0
    %1277 = vmatpush1.msra.mxu0 0.0
    %1278 = vmatprep.subr.mxu0 0.0
    %1279 = vmatpush1.msra.mxu0 0.0
    %1280 = vmatprep.subr.mxu0 0.0
    %1281 = vmatpush1.msra.mxu0 0.0
    %1282 = vmatprep.mubr.f32.mxu0 0.0
    %1283 = vmatmul.mubr.f32.gmra.mrb[0].mxu0 %v1213
    %v1284 = vpop.f32.mrb[0].mxu0
    %v1285 = vadd.f32 %v1210, %v1284
    %v1286 = vpop.f32.mrb[0].mxu0
    %1287 = vmatprep.mubr.f32.mxu0 0.0
    %1288 = vmatmul.mubr.f32.gmra.mrb[0].mxu0 %v1216
    %v1289 = vpop.f32.mrb[0].mxu0
    %v1290 = vadd.f32 %v1210, %v1289
    %v1291 = vpop.f32.mrb[0].mxu0
    %1292 = vdwg.mxu0
    %v1293 = vmax.f32 %v1285, 0.0
    %v1294 = vmax.f32 %v1290, 0.0
    %1299 = vrot.lane.b32.xlu0 %v57, 64
    %v1300 = vpop.permute.xlu0 %1299
    %1301 = vrot.lane.b32.xlu0 %v59, 64
    %v1302 = vpop.permute.xlu0 %1301
    %1303 = vrot.lane.b32.xlu0 %v61, 64
    %v1304 = vpop.permute.xlu0 %1303
    %1305 = vrot.lane.b32.xlu0 %v63, 64
    %v1306 = vpop.permute.xlu0 %1305
    %vm1307 = vcmask 523264
    %v1309 = vsel %vm1307, %v1293, 0
    %v1312 = vsel %vm1307, %v1294, 0
    %v1314 = vsel %vm1307, %v1300, 0
    %v1316 = vsel %vm1307, %v1302, 0
    %v1318 = vsel %vm1307, %v1304, 0
    %v1320 = vsel %vm1307, %v1306, 0
    %1322 = vmatprep.subr.mxu0 0.0
    %1323 = vmatpush1.xpose.msra.mxu0 %v1314
    %1324 = vmatprep.subr.mxu0 0.0
    %1325 = vmatpush1.xpose.msra.mxu0 %v1316
    %1326 = vmatprep.subr.mxu0 0.0
    %1327 = vmatpush1.xpose.msra.mxu0 %v1318
    %1328 = vmatprep.subr.mxu0 0.0
    %1329 = vmatpush1.xpose.msra.mxu0 %v1320
    %1330 = vmatprep.subr.mxu0 0.0
    %1331 = vmatpush1.xpose.msra.mxu0 0.0
    %1332 = vmatprep.subr.mxu0 0.0
    %1333 = vmatpush1.xpose.msra.mxu0 0.0
    %1334 = vmatprep.subr.mxu0 0.0
    %1335 = vmatpush1.xpose.msra.mxu0 0.0
    %1336 = vmatprep.subr.mxu0 0.0
    %1337 = vmatpush1.xpose.msra.mxu0 0.0
    %1338 = vmatprep.subr.mxu0 0.0
    %1339 = vmatpush1.xpose.msra.mxu0 0.0
    %1340 = vmatprep.subr.mxu0 0.0
    %1341 = vmatpush1.xpose.msra.mxu0 0.0
    %1342 = vmatprep.subr.mxu0 0.0
    %1343 = vmatpush1.xpose.msra.mxu0 0.0
    %1344 = vmatprep.subr.mxu0 0.0
    %1345 = vmatpush1.xpose.msra.mxu0 0.0
    %1346 = vmatprep.subr.mxu0 0.0
    %1347 = vmatpush1.xpose.msra.mxu0 0.0
    %1348 = vmatprep.subr.mxu0 0.0
    %1349 = vmatpush1.xpose.msra.mxu0 0.0
    %1350 = vmatprep.subr.mxu0 0.0
    %1351 = vmatpush1.xpose.msra.mxu0 0.0
    %1352 = vmatprep.subr.mxu0 0.0
    %1353 = vmatpush1.xpose.msra.mxu0 0.0
    %1354 = vmatprep.subr.mxu0 0.0
    %1355 = vmatpush1.xpose.msra.mxu0 0.0
    %1356 = vmatprep.subr.mxu0 0.0
    %1357 = vmatpush1.xpose.msra.mxu0 0.0
    %1358 = vmatprep.subr.mxu0 0.0
    %1359 = vmatpush1.xpose.msra.mxu0 0.0
    %1360 = vmatprep.subr.mxu0 0.0
    %1361 = vmatpush1.xpose.msra.mxu0 0.0
    %1362 = vmatprep.subr.mxu0 0.0
    %1363 = vmatpush1.xpose.msra.mxu0 0.0
    %1364 = vmatprep.subr.mxu0 0.0
    %1365 = vmatpush1.xpose.msra.mxu0 0.0
    %1366 = vmatprep.subr.mxu0 0.0
    %1367 = vmatpush1.xpose.msra.mxu0 0.0
    %1368 = vmatprep.subr.mxu0 0.0
    %1369 = vmatpush1.xpose.msra.mxu0 0.0
    %1370 = vmatprep.subr.mxu0 0.0
    %1371 = vmatpush1.xpose.msra.mxu0 0.0
    %1372 = vmatprep.subr.mxu0 0.0
    %1373 = vmatpush1.xpose.msra.mxu0 0.0
    %1374 = vmatprep.subr.mxu0 0.0
    %1375 = vmatpush1.xpose.msra.mxu0 0.0
    %1376 = vmatprep.subr.mxu0 0.0
    %1377 = vmatpush1.xpose.msra.mxu0 0.0
    %1378 = vmatprep.subr.mxu0 0.0
    %1379 = vmatpush1.xpose.msra.mxu0 0.0
    %1380 = vmatprep.subr.mxu0 0.0
    %1381 = vmatpush1.xpose.msra.mxu0 0.0
    %1382 = vmatprep.subr.mxu0 0.0
    %1383 = vmatpush1.xpose.msra.mxu0 0.0
    %1384 = vmatprep.subr.mxu0 0.0
    %1385 = vmatpush1.xpose.msra.mxu0 0.0
    %1386 = vmatprep.mubr.f32.mxu0 0.0
    %1387 = vmatmul.mubr.f32.gmra.mrb[0].mxu0 %v1309
    %v1388 = vpop.f32.mrb[0].mxu0
    %v1389 = vadd.f32 0.0, %v1388
    %v1390 = vpop.f32.mrb[0].mxu0
    %1391 = vmatprep.mubr.f32.mxu0 0.0
    %1392 = vmatmul.mubr.f32.gmra.mrb[0].mxu0 %v1312
    %v1393 = vpop.f32.mrb[0].mxu0
    %v1394 = vadd.f32 0.0, %v1393
    %v1395 = vpop.f32.mrb[0].mxu0
    %1396 = vdwg.mxu0
    %v1397 = vadd.f32 %v1176, %v1389
    %v1398 = vadd.f32 %v1177, %v1394
    %v1399 = vadd.f32 %v1397, %v72
    %v1400 = vadd.f32 %v1398, %v72
    %v1401 = vsel %vm115, %v1399, 0.0
    %1402 = vadd.xlane.f32.xlu0 %v1401
    %v1403 = vpop.xlane.xlu0 %1402
    %v1404 = vsel %vm115, %v1400, 0.0
    %1405 = vadd.xlane.f32.xlu0 %v1404
    %v1406 = vpop.xlane.xlu0 %1405
    %v1407 = vmul.f32 %v1403, %v122
    %v1408 = vmul.f32 %v1406, %v122
    %v1409 = vsub.f32 %v1399, %v1407
    %v1410 = vsub.f32 %v1400, %v1408
    %v1411 = vmul.f32 %v1409, %v1409
    %v1412 = vmul.f32 %v1410, %v1410
    %v1413 = vsel %vm115, %v1411, 0.0
    %1414 = vadd.xlane.f32.xlu0 %v1413
    %v1415 = vpop.xlane.xlu0 %1414
    %v1416 = vsel %vm115, %v1412, 0.0
    %1417 = vadd.xlane.f32.xlu0 %v1416
    %v1418 = vpop.xlane.xlu0 %1417
    %v1419 = vmul.f32 %v1415, %v122
    %v1420 = vmul.f32 %v1418, %v122
    %v1421 = vadd.f32 %v1419, 1e-05
    %v1422 = vadd.f32 %v1420, 1e-05
    %v1423 = vrsqrt.pop %v1421
    %v1424 = vrsqrt.pop %v1422
    %v1425 = vmul.f32 %v1409, %v1423
    %v1426 = vmul.f32 %v1410, %v1424
    %v1427 = vmul.f32 %v1425, %v76
    %v1428 = vmul.f32 %v1426, %v76
    %v1429 = vadd.f32 %v1427, %v80
    %v1430 = vadd.f32 %v1428, %v80
    %v1432 = vsel %vm115, %v1429, 0
    %v1435 = vsel %vm115, %v1430, 0
    %1437 = vmatprep.subr.mxu0 0.0
    %1438 = vmatpush1.msra.mxu0 %v56
    %1439 = vmatprep.subr.mxu0 0.0
    %1440 = vmatpush1.msra.mxu0 %v58
    %1441 = vmatprep.subr.mxu0 0.0
    %1442 = vmatpush1.msra.mxu0 %v60
    %1443 = vmatprep.subr.mxu0 0.0
    %1444 = vmatpush1.msra.mxu0 %v62
    %1445 = vmatprep.subr.mxu0 0.0
    %1446 = vmatpush1.msra.mxu0 0.0
    %1447 = vmatprep.subr.mxu0 0.0
    %1448 = vmatpush1.msra.mxu0 0.0
    %1449 = vmatprep.subr.mxu0 0.0
    %1450 = vmatpush1.msra.mxu0 0.0
    %1451 = vmatprep.subr.mxu0 0.0
    %1452 = vmatpush1.msra.mxu0 0.0
    %1453 = vmatprep.subr.mxu0 0.0
    %1454 = vmatpush1.msra.mxu0 0.0
    %1455 = vmatprep.subr.mxu0 0.0
    %1456 = vmatpush1.msra.mxu0 0.0
    %1457 = vmatprep.subr.mxu0 0.0
    %1458 = vmatpush1.msra.mxu0 0.0
    %1459 = vmatprep.subr.mxu0 0.0
    %1460 = vmatpush1.msra.mxu0 0.0
    %1461 = vmatprep.subr.mxu0 0.0
    %1462 = vmatpush1.msra.mxu0 0.0
    %1463 = vmatprep.subr.mxu0 0.0
    %1464 = vmatpush1.msra.mxu0 0.0
    %1465 = vmatprep.subr.mxu0 0.0
    %1466 = vmatpush1.msra.mxu0 0.0
    %1467 = vmatprep.subr.mxu0 0.0
    %1468 = vmatpush1.msra.mxu0 0.0
    %1469 = vmatprep.subr.mxu0 0.0
    %1470 = vmatpush1.msra.mxu0 0.0
    %1471 = vmatprep.subr.mxu0 0.0
    %1472 = vmatpush1.msra.mxu0 0.0
    %1473 = vmatprep.subr.mxu0 0.0
    %1474 = vmatpush1.msra.mxu0 0.0
    %1475 = vmatprep.subr.mxu0 0.0
    %1476 = vmatpush1.msra.mxu0 0.0
    %1477 = vmatprep.subr.mxu0 0.0
    %1478 = vmatpush1.msra.mxu0 0.0
    %1479 = vmatprep.subr.mxu0 0.0
    %1480 = vmatpush1.msra.mxu0 0.0
    %1481 = vmatprep.subr.mxu0 0.0
    %1482 = vmatpush1.msra.mxu0 0.0
    %1483 = vmatprep.subr.mxu0 0.0
    %1484 = vmatpush1.msra.mxu0 0.0
    %1485 = vmatprep.subr.mxu0 0.0
    %1486 = vmatpush1.msra.mxu0 0.0
    %1487 = vmatprep.subr.mxu0 0.0
    %1488 = vmatpush1.msra.mxu0 0.0
    %1489 = vmatprep.subr.mxu0 0.0
    %1490 = vmatpush1.msra.mxu0 0.0
    %1491 = vmatprep.subr.mxu0 0.0
    %1492 = vmatpush1.msra.mxu0 0.0
    %1493 = vmatprep.subr.mxu0 0.0
    %1494 = vmatpush1.msra.mxu0 0.0
    %1495 = vmatprep.subr.mxu0 0.0
    %1496 = vmatpush1.msra.mxu0 0.0
    %1497 = vmatprep.subr.mxu0 0.0
    %1498 = vmatpush1.msra.mxu0 0.0
    %1499 = vmatprep.subr.mxu0 0.0
    %1500 = vmatpush1.msra.mxu0 0.0
    %1501 = vmatprep.mubr.f32.mxu0 0.0
    %1502 = vmatmul.mubr.f32.gmra.mrb[0].mxu0 %v1432
    %v1503 = vpop.f32.mrb[0].mxu0
    %v1504 = vadd.f32 %v149, %v1503
    %v1505 = vpop.f32.mrb[0].mxu0
    %1506 = vmatprep.mubr.f32.mxu0 0.0
    %1507 = vmatmul.mubr.f32.gmra.mrb[0].mxu0 %v1435
    %v1508 = vpop.f32.mrb[0].mxu0
    %v1509 = vadd.f32 %v149, %v1508
    %v1510 = vpop.f32.mrb[0].mxu0
    %1511 = vdwg.mxu0
    %1514 = vrot.lane.b32.xlu0 %v1504, 96
    %v1515 = vpop.permute.xlu0 %1514
    %1516 = vrot.lane.b32.xlu0 %v1509, 96
    %v1517 = vpop.permute.xlu0 %1516
    %v1518 = vsel %vm238, %v1504, 0
    %v1520 = vsel %vm238, %v1509, 0
    %v1522 = vsel %vm238, %v1515, 0
    %v1524 = vsel %vm238, %v1517, 0
    %1526 = vmatprep.subr.mxu0 0.0
    %1527 = vmatpush1.xpose.msra.mxu0 %v1522
    %1528 = vmatprep.subr.mxu0 0.0
    %1529 = vmatpush1.xpose.msra.mxu0 %v1524
    %1530 = vmatprep.subr.mxu0 0.0
    %1531 = vmatpush1.xpose.msra.mxu0 0.0
    %1532 = vmatprep.subr.mxu0 0.0
    %1533 = vmatpush1.xpose.msra.mxu0 0.0
    %1534 = vmatprep.subr.mxu0 0.0
    %1535 = vmatpush1.xpose.msra.mxu0 0.0
    %1536 = vmatprep.subr.mxu0 0.0
    %1537 = vmatpush1.xpose.msra.mxu0 0.0
    %1538 = vmatprep.subr.mxu0 0.0
    %1539 = vmatpush1.xpose.msra.mxu0 0.0
    %1540 = vmatprep.subr.mxu0 0.0
    %1541 = vmatpush1.xpose.msra.mxu0 0.0
    %1542 = vmatprep.subr.mxu0 0.0
    %1543 = vmatpush1.xpose.msra.mxu0 0.0
    %1544 = vmatprep.subr.mxu0 0.0
    %1545 = vmatpush1.xpose.msra.mxu0 0.0
    %1546 = vmatprep.subr.mxu0 0.0
    %1547 = vmatpush1.xpose.msra.mxu0 0.0
    %1548 = vmatprep.subr.mxu0 0.0
    %1549 = vmatpush1.xpose.msra.mxu0 0.0
    %1550 = vmatprep.subr.mxu0 0.0
    %1551 = vmatpush1.xpose.msra.mxu0 0.0
    %1552 = vmatprep.subr.mxu0 0.0
    %1553 = vmatpush1.xpose.msra.mxu0 0.0
    %1554 = vmatprep.subr.mxu0 0.0
    %1555 = vmatpush1.xpose.msra.mxu0 0.0
    %1556 = vmatprep.subr.mxu0 0.0
    %1557 = vmatpush1.xpose.msra.mxu0 0.0
    %1558 = vmatprep.subr.mxu0 0.0
    %1559 = vmatpush1.xpose.msra.mxu0 0.0
    %1560 = vmatprep.subr.mxu0 0.0
    %1561 = vmatpush1.xpose.msra.mxu0 0.0
    %1562 = vmatprep.subr.mxu0 0.0
    %1563 = vmatpush1.xpose.msra.mxu0 0.0
    %1564 = vmatprep.subr.mxu0 0.0
    %1565 = vmatpush1.xpose.msra.mxu0 0.0
    %1566 = vmatprep.subr.mxu0 0.0
    %1567 = vmatpush1.xpose.msra.mxu0 0.0
    %1568 = vmatprep.subr.mxu0 0.0
    %1569 = vmatpush1.xpose.msra.mxu0 0.0
    %1570 = vmatprep.subr.mxu0 0.0
    %1571 = vmatpush1.xpose.msra.mxu0 0.0
    %1572 = vmatprep.subr.mxu0 0.0
    %1573 = vmatpush1.xpose.msra.mxu0 0.0
    %1574 = vmatprep.subr.mxu0 0.0
    %1575 = vmatpush1.xpose.msra.mxu0 0.0
    %1576 = vmatprep.subr.mxu0 0.0
    %1577 = vmatpush1.xpose.msra.mxu0 0.0
    %1578 = vmatprep.subr.mxu0 0.0
    %1579 = vmatpush1.xpose.msra.mxu0 0.0
    %1580 = vmatprep.subr.mxu0 0.0
    %1581 = vmatpush1.xpose.msra.mxu0 0.0
    %1582 = vmatprep.subr.mxu0 0.0
    %1583 = vmatpush1.xpose.msra.mxu0 0.0
    %1584 = vmatprep.subr.mxu0 0.0
    %1585 = vmatpush1.xpose.msra.mxu0 0.0
    %1586 = vmatprep.subr.mxu0 0.0
    %1587 = vmatpush1.xpose.msra.mxu0 0.0
    %1588 = vmatprep.subr.mxu0 0.0
    %1589 = vmatpush1.xpose.msra.mxu0 0.0
    %1590 = vmatprep.mubr.f32.mxu0 0.0
    %1591 = vmatmul.mubr.f32.gmra.mrb[0].mxu0 %v1518
    %v1592 = vpop.f32.mrb[0].mxu0
    %v1593 = vadd.f32 0.0, %v1592
    %v1594 = vpop.f32.mrb[0].mxu0
    %1595 = vmatprep.mubr.f32.mxu0 0.0
    %1596 = vmatmul.mubr.f32.gmra.mrb[0].mxu0 %v1520
    %v1597 = vpop.f32.mrb[0].mxu0
    %v1598 = vadd.f32 0.0, %v1597
    %v1599 = vpop.f32.mrb[0].mxu0
    %1600 = vdwg.mxu0
    %v1601 = vmul.f32 %v1593, 0.35355338
    %v1602 = vmul.f32 %v1598, 0.35355338
    %v1603 = vadd.f32 %v1601, %v113
    %v1604 = vadd.f32 %v1602, %v114
    %v1605 = vsel %vm326, %v1603, -inf
    %1606 = vmax.xlane.f32.xlu0 %v1605
    %v1607 = vpop.xlane.xlu0 %1606
    %v1608 = vsel %vm326, %v1604, -inf
    %1609 = vmax.xlane.f32.xlu0 %v1608
    %v1610 = vpop.xlane.xlu0 %1609
    %v1611 = vsub.f32 %v1603, %v1607
    %v1612 = vsub.f32 %v1604, %v1610
    %v1613 = vmul.f32 %v1611, 1.442695
    %v1614 = vpow.pop %v1613
    %v1615 = vmul.f32 %v1612, 1.442695
    %v1616 = vpow.pop %v1615
    %v1617 = vsel %vm326, %v1614, 0.0
    %1618 = vadd.xlane.f32.xlu0 %v1617
    %v1619 = vpop.xlane.xlu0 %1618
    %v1620 = vsel %vm326, %v1616, 0.0
    %1621 = vadd.xlane.f32.xlu0 %v1620
    %v1622 = vpop.xlane.xlu0 %1621
    %v1623 = vrcp.pop %v1619
    %v1624 = vrcp.pop %v1622
    %v1625 = vmul.f32 %v1614, %v1623
    %v1626 = vmul.f32 %v1616, %v1624
    %1627 = vrot.lane.b32.xlu0 %v1504, 64
    %v1628 = vpop.permute.xlu0 %1627
    %1629 = vrot.lane.b32.xlu0 %v1509, 64
    %v1630 = vpop.permute.xlu0 %1629
    %v1634 = vsel %vm326, %v1625, 0
    %v1637 = vsel %vm326, %v1626, 0
    %1639 = vmatprep.subr.mxu0 0.0
    %1640 = vmatpush1.msra.mxu0 %v1628
    %1641 = vmatprep.subr.mxu0 0.0
    %1642 = vmatpush1.msra.mxu0 %v1630
    %1643 = vmatprep.subr.mxu0 0.0
    %1644 = vmatpush1.msra.mxu0 0.0
    %1645 = vmatprep.subr.mxu0 0.0
    %1646 = vmatpush1.msra.mxu0 0.0
    %1647 = vmatprep.subr.mxu0 0.0
    %1648 = vmatpush1.msra.mxu0 0.0
    %1649 = vmatprep.subr.mxu0 0.0
    %1650 = vmatpush1.msra.mxu0 0.0
    %1651 = vmatprep.subr.mxu0 0.0
    %1652 = vmatpush1.msra.mxu0 0.0
    %1653 = vmatprep.subr.mxu0 0.0
    %1654 = vmatpush1.msra.mxu0 0.0
    %1655 = vmatprep.subr.mxu0 0.0
    %1656 = vmatpush1.msra.mxu0 0.0
    %1657 = vmatprep.subr.mxu0 0.0
    %1658 = vmatpush1.msra.mxu0 0.0
    %1659 = vmatprep.subr.mxu0 0.0
    %1660 = vmatpush1.msra.mxu0 0.0
    %1661 = vmatprep.subr.mxu0 0.0
    %1662 = vmatpush1.msra.mxu0 0.0
    %1663 = vmatprep.subr.mxu0 0.0
    %1664 = vmatpush1.msra.mxu0 0.0
    %1665 = vmatprep.subr.mxu0 0.0
    %1666 = vmatpush1.msra.mxu0 0.0
    %1667 = vmatprep.subr.mxu0 0.0
    %1668 = vmatpush1.msra.mxu0 0.0
    %1669 = vmatprep.subr.mxu0 0.0
    %1670 = vmatpush1.msra.mxu0 0.0
    %1671 = vmatprep.subr.mxu0 0.0
    %1672 = vmatpush1.msra.mxu0 0.0
    %1673 = vmatprep.subr.mxu0 0.0
    %1674 = vmatpush1.msra.mxu0 0.0
    %1675 = vmatprep.subr.mxu0 0.0
    %1676 = vmatpush1.msra.mxu0 0.0
    %1677 = vmatprep.subr.mxu0 0.0
    %1678 = vmatpush1.msra.mxu0 0.0
    %1679 = vmatprep.subr.mxu0 0.0
    %1680 = vmatpush1.msra.mxu0 0.0
    %1681 = vmatprep.subr.mxu0 0.0
    %1682 = vmatpush1.msra.mxu0 0.0
    %1683 = vmatprep.subr.mxu0 0.0
    %1684 = vmatpush1.msra.mxu0 0.0
    %1685 = vmatprep.subr.mxu0 0.0
    %1686 = vmatpush1.msra.mxu0 0.0
    %1687 = vmatprep.subr.mxu0 0.0
    %1688 = vmatpush1.msra.mxu0 0.0
    %1689 = vmatprep.subr.mxu0 0.0
    %1690 = vmatpush1.msra.mxu0 0.0
    %1691 = vmatprep.subr.mxu0 0.0
    %1692 = vmatpush1.msra.mxu0 0.0
    %1693 = vmatprep.subr.mxu0 0.0
    %1694 = vmatpush1.msra.mxu0 0.0
    %1695 = vmatprep.subr.mxu0 0.0
    %1696 = vmatpush1.msra.mxu0 0.0
    %1697 = vmatprep.subr.mxu0 0.0
    %1698 = vmatpush1.msra.mxu0 0.0
    %1699 = vmatprep.subr.mxu0 0.0
    %1700 = vmatpush1.msra.mxu0 0.0
    %1701 = vmatprep.subr.mxu0 0.0
    %1702 = vmatpush1.msra.mxu0 0.0
    %1703 = vmatprep.mubr.f32.mxu0 0.0
    %1704 = vmatmul.mubr.f32.gmra.mrb[0].mxu0 %v1634
    %v1705 = vpop.f32.mrb[0].mxu0
    %v1706 = vadd.f32 0.0, %v1705
    %v1707 = vpop.f32.mrb[0].mxu0
    %1708 = vmatprep.mubr.f32.mxu0 0.0
    %1709 = vmatmul.mubr.f32.gmra.mrb[0].mxu0 %v1637
    %v1710 = vpop.f32.mrb[0].mxu0
    %v1711 = vadd.f32 0.0, %v1710
    %v1712 = vpop.f32.mrb[0].mxu0
    %1713 = vdwg.mxu0
    %1714 = vrot.lane.b32.xlu0 %v1504, 120
    %v1715 = vpop.permute.xlu0 %1714
    %1716 = vrot.lane.b32.xlu0 %v1509, 120
    %v1717 = vpop.permute.xlu0 %1716
    %1718 = vrot.lane.b32.xlu0 %v1504, 88
    %v1719 = vpop.permute.xlu0 %1718
    %1720 = vrot.lane.b32.xlu0 %v1509, 88
    %v1721 = vpop.permute.xlu0 %1720
    %v1722 = vsel %vm238, %v1715, 0
    %v1724 = vsel %vm238, %v1717, 0
    %v1726 = vsel %vm238, %v1719, 0
    %v1728 = vsel %vm238, %v1721, 0
    %1730 = vmatprep.subr.mxu0 0.0
    %1731 = vmatpush1.xpose.msra.mxu0 %v1726
    %1732 = vmatprep.subr.mxu0 0.0
    %1733 = vmatpush1.xpose.msra.mxu0 %v1728
    %1734 = vmatprep.subr.mxu0 0.0
    %1735 = vmatpush1.xpose.msra.mxu0 0.0
    %1736 = vmatprep.subr.mxu0 0.0
    %1737 = vmatpush1.xpose.msra.mxu0 0.0
    %1738 = vmatprep.subr.mxu0 0.0
    %1739 = vmatpush1.xpose.msra.mxu0 0.0
    %1740 = vmatprep.subr.mxu0 0.0
    %1741 = vmatpush1.xpose.msra.mxu0 0.0
    %1742 = vmatprep.subr.mxu0 0.0
    %1743 = vmatpush1.xpose.msra.mxu0 0.0
    %1744 = vmatprep.subr.mxu0 0.0
    %1745 = vmatpush1.xpose.msra.mxu0 0.0
    %1746 = vmatprep.subr.mxu0 0.0
    %1747 = vmatpush1.xpose.msra.mxu0 0.0
    %1748 = vmatprep.subr.mxu0 0.0
    %1749 = vmatpush1.xpose.msra.mxu0 0.0
    %1750 = vmatprep.subr.mxu0 0.0
    %1751 = vmatpush1.xpose.msra.mxu0 0.0
    %1752 = vmatprep.subr.mxu0 0.0
    %1753 = vmatpush1.xpose.msra.mxu0 0.0
    %1754 = vmatprep.subr.mxu0 0.0
    %1755 = vmatpush1.xpose.msra.mxu0 0.0
    %1756 = vmatprep.subr.mxu0 0.0
    %1757 = vmatpush1.xpose.msra.mxu0 0.0
    %1758 = vmatprep.subr.mxu0 0.0
    %1759 = vmatpush1.xpose.msra.mxu0 0.0
    %1760 = vmatprep.subr.mxu0 0.0
    %1761 = vmatpush1.xpose.msra.mxu0 0.0
    %1762 = vmatprep.subr.mxu0 0.0
    %1763 = vmatpush1.xpose.msra.mxu0 0.0
    %1764 = vmatprep.subr.mxu0 0.0
    %1765 = vmatpush1.xpose.msra.mxu0 0.0
    %1766 = vmatprep.subr.mxu0 0.0
    %1767 = vmatpush1.xpose.msra.mxu0 0.0
    %1768 = vmatprep.subr.mxu0 0.0
    %1769 = vmatpush1.xpose.msra.mxu0 0.0
    %1770 = vmatprep.subr.mxu0 0.0
    %1771 = vmatpush1.xpose.msra.mxu0 0.0
    %1772 = vmatprep.subr.mxu0 0.0
    %1773 = vmatpush1.xpose.msra.mxu0 0.0
    %1774 = vmatprep.subr.mxu0 0.0
    %1775 = vmatpush1.xpose.msra.mxu0 0.0
    %1776 = vmatprep.subr.mxu0 0.0
    %1777 = vmatpush1.xpose.msra.mxu0 0.0
    %1778 = vmatprep.subr.mxu0 0.0
    %1779 = vmatpush1.xpose.msra.mxu0 0.0
    %1780 = vmatprep.subr.mxu0 0.0
    %1781 = vmatpush1.xpose.msra.mxu0 0.0
    %1782 = vmatprep.subr.mxu0 0.0
    %1783 = vmatpush1.xpose.msra.mxu0 0.0
    %1784 = vmatprep.subr.mxu0 0.0
    %1785 = vmatpush1.xpose.msra.mxu0 0.0
    %1786 = vmatprep.subr.mxu0 0.0
    %1787 = vmatpush1.xpose.msra.mxu0 0.0
    %1788 = vmatprep.subr.mxu0 0.0
    %1789 = vmatpush1.xpose.msra.mxu0 0.0
    %1790 = vmatprep.subr.mxu0 0.0
    %1791 = vmatpush1.xpose.msra.mxu0 0.0
    %1792 = vmatprep.subr.mxu0 0.0
    %1793 = vmatpush1.xpose.msra.mxu0 0.0
    %1794 = vmatprep.mubr.f32.mxu0 0.0
    %1795 = vmatmul.mubr.f32.gmra.mrb[0].mxu0 %v1722
    %v1796 = vpop.f32.mrb[0].mxu0
    %v1797 = vadd.f32 0.0, %v1796
    %v1798 = vpop.f32.mrb[0].mxu0
    %1799 = vmatprep.mubr.f32.mxu0 0.0
    %1800 = vmatmul.mubr.f32.gmra.mrb[0].mxu0 %v1724
    %v1801 = vpop.f32.mrb[0].mxu0
    %v1802 = vadd.f32 0.0, %v1801
    %v1803 = vpop.f32.mrb[0].mxu0
    %1804 = vdwg.mxu0
    %v1805 = vmul.f32 %v1797, 0.35355338
    %v1806 = vmul.f32 %v1802, 0.35355338
    %v1807 = vadd.f32 %v1805, %v113
    %v1808 = vadd.f32 %v1806, %v114
    %v1809 = vsel %vm326, %v1807, -inf
    %1810 = vmax.xlane.f32.xlu0 %v1809
    %v1811 = vpop.xlane.xlu0 %1810
    %v1812 = vsel %vm326, %v1808, -inf
    %1813 = vmax.xlane.f32.xlu0 %v1812
    %v1814 = vpop.xlane.xlu0 %1813
    %v1815 = vsub.f32 %v1807, %v1811
    %v1816 = vsub.f32 %v1808, %v1814
    %v1817 = vmul.f32 %v1815, 1.442695
    %v1818 = vpow.pop %v1817
    %v1819 = vmul.f32 %v1816, 1.442695
    %v1820 = vpow.pop %v1819
    %v1821 = vsel %vm326, %v1818, 0.0
    %1822 = vadd.xlane.f32.xlu0 %v1821
    %v1823 = vpop.xlane.xlu0 %1822
    %v1824 = vsel %vm326, %v1820, 0.0
    %1825 = vadd.xlane.f32.xlu0 %v1824
    %v1826 = vpop.xlane.xlu0 %1825
    %v1827 = vrcp.pop %v1823
    %v1828 = vrcp.pop %v1826
    %v1829 = vmul.f32 %v1818, %v1827
    %v1830 = vmul.f32 %v1820, %v1828
    %1831 = vrot.lane.b32.xlu0 %v1504, 56
    %v1832 = vpop.permute.xlu0 %1831
    %1833 = vrot.lane.b32.xlu0 %v1509, 56
    %v1834 = vpop.permute.xlu0 %1833
    %v1838 = vsel %vm326, %v1829, 0
    %v1841 = vsel %vm326, %v1830, 0
    %1843 = vmatprep.subr.mxu0 0.0
    %1844 = vmatpush1.msra.mxu0 %v1832
    %1845 = vmatprep.subr.mxu0 0.0
    %1846 = vmatpush1.msra.mxu0 %v1834
    %1847 = vmatprep.subr.mxu0 0.0
    %1848 = vmatpush1.msra.mxu0 0.0
    %1849 = vmatprep.subr.mxu0 0.0
    %1850 = vmatpush1.msra.mxu0 0.0
    %1851 = vmatprep.subr.mxu0 0.0
    %1852 = vmatpush1.msra.mxu0 0.0
    %1853 = vmatprep.subr.mxu0 0.0
    %1854 = vmatpush1.msra.mxu0 0.0
    %1855 = vmatprep.subr.mxu0 0.0
    %1856 = vmatpush1.msra.mxu0 0.0
    %1857 = vmatprep.subr.mxu0 0.0
    %1858 = vmatpush1.msra.mxu0 0.0
    %1859 = vmatprep.subr.mxu0 0.0
    %1860 = vmatpush1.msra.mxu0 0.0
    %1861 = vmatprep.subr.mxu0 0.0
    %1862 = vmatpush1.msra.mxu0 0.0
    %1863 = vmatprep.subr.mxu0 0.0
    %1864 = vmatpush1.msra.mxu0 0.0
    %1865 = vmatprep.subr.mxu0 0.0
    %1866 = vmatpush1.msra.mxu0 0.0
    %1867 = vmatprep.subr.mxu0 0.0
    %1868 = vmatpush1.msra.mxu0 0.0
    %1869 = vmatprep.subr.mxu0 0.0
    %1870 = vmatpush1.msra.mxu0 0.0
    %1871 = vmatprep.subr.mxu0 0.0
    %1872 = vmatpush1.msra.mxu0 0.0
    %1873 = vmatprep.subr.mxu0 0.0
    %1874 = vmatpush1.msra.mxu0 0.0
    %1875 = vmatprep.subr.mxu0 0.0
    %1876 = vmatpush1.msra.mxu0 0.0
    %1877 = vmatprep.subr.mxu0 0.0
    %1878 = vmatpush1.msra.mxu0 0.0
    %1879 = vmatprep.subr.mxu0 0.0
    %1880 = vmatpush1.msra.mxu0 0.0
    %1881 = vmatprep.subr.mxu0 0.0
    %1882 = vmatpush1.msra.mxu0 0.0
    %1883 = vmatprep.subr.mxu0 0.0
    %1884 = vmatpush1.msra.mxu0 0.0
    %1885 = vmatprep.subr.mxu0 0.0
    %1886 = vmatpush1.msra.mxu0 0.0
    %1887 = vmatprep.subr.mxu0 0.0
    %1888 = vmatpush1.msra.mxu0 0.0
    %1889 = vmatprep.subr.mxu0 0.0
    %1890 = vmatpush1.msra.mxu0 0.0
    %1891 = vmatprep.subr.mxu0 0.0
    %1892 = vmatpush1.msra.mxu0 0.0
    %1893 = vmatprep.subr.mxu0 0.0
    %1894 = vmatpush1.msra.mxu0 0.0
    %1895 = vmatprep.subr.mxu0 0.0
    %1896 = vmatpush1.msra.mxu0 0.0
    %1897 = vmatprep.subr.mxu0 0.0
    %1898 = vmatpush1.msra.mxu0 0.0
    %1899 = vmatprep.subr.mxu0 0.0
    %1900 = vmatpush1.msra.mxu0 0.0
    %1901 = vmatprep.subr.mxu0 0.0
    %1902 = vmatpush1.msra.mxu0 0.0
    %1903 = vmatprep.subr.mxu0 0.0
    %1904 = vmatpush1.msra.mxu0 0.0
    %1905 = vmatprep.subr.mxu0 0.0
    %1906 = vmatpush1.msra.mxu0 0.0
    %1907 = vmatprep.mubr.f32.mxu0 0.0
    %1908 = vmatmul.mubr.f32.gmra.mrb[0].mxu0 %v1838
    %v1909 = vpop.f32.mrb[0].mxu0
    %v1910 = vadd.f32 0.0, %v1909
    %v1911 = vpop.f32.mrb[0].mxu0
    %1912 = vmatprep.mubr.f32.mxu0 0.0
    %1913 = vmatmul.mubr.f32.gmra.mrb[0].mxu0 %v1841
    %v1914 = vpop.f32.mrb[0].mxu0
    %v1915 = vadd.f32 0.0, %v1914
    %v1916 = vpop.f32.mrb[0].mxu0
    %1917 = vdwg.mxu0
    %1918 = vrot.lane.b32.xlu0 %v1504, 112
    %v1919 = vpop.permute.xlu0 %1918
    %1920 = vrot.lane.b32.xlu0 %v1509, 112
    %v1921 = vpop.permute.xlu0 %1920
    %1922 = vrot.lane.b32.xlu0 %v1504, 80
    %v1923 = vpop.permute.xlu0 %1922
    %1924 = vrot.lane.b32.xlu0 %v1509, 80
    %v1925 = vpop.permute.xlu0 %1924
    %v1926 = vsel %vm238, %v1919, 0
    %v1928 = vsel %vm238, %v1921, 0
    %v1930 = vsel %vm238, %v1923, 0
    %v1932 = vsel %vm238, %v1925, 0
    %1934 = vmatprep.subr.mxu0 0.0
    %1935 = vmatpush1.xpose.msra.mxu0 %v1930
    %1936 = vmatprep.subr.mxu0 0.0
    %1937 = vmatpush1.xpose.msra.mxu0 %v1932
    %1938 = vmatprep.subr.mxu0 0.0
    %1939 = vmatpush1.xpose.msra.mxu0 0.0
    %1940 = vmatprep.subr.mxu0 0.0
    %1941 = vmatpush1.xpose.msra.mxu0 0.0
    %1942 = vmatprep.subr.mxu0 0.0
    %1943 = vmatpush1.xpose.msra.mxu0 0.0
    %1944 = vmatprep.subr.mxu0 0.0
    %1945 = vmatpush1.xpose.msra.mxu0 0.0
    %1946 = vmatprep.subr.mxu0 0.0
    %1947 = vmatpush1.xpose.msra.mxu0 0.0
    %1948 = vmatprep.subr.mxu0 0.0
    %1949 = vmatpush1.xpose.msra.mxu0 0.0
    %1950 = vmatprep.subr.mxu0 0.0
    %1951 = vmatpush1.xpose.msra.mxu0 0.0
    %1952 = vmatprep.subr.mxu0 0.0
    %1953 = vmatpush1.xpose.msra.mxu0 0.0
    %1954 = vmatprep.subr.mxu0 0.0
    %1955 = vmatpush1.xpose.msra.mxu0 0.0
    %1956 = vmatprep.subr.mxu0 0.0
    %1957 = vmatpush1.xpose.msra.mxu0 0.0
    %1958 = vmatprep.subr.mxu0 0.0
    %1959 = vmatpush1.xpose.msra.mxu0 0.0
    %1960 = vmatprep.subr.mxu0 0.0
    %1961 = vmatpush1.xpose.msra.mxu0 0.0
    %1962 = vmatprep.subr.mxu0 0.0
    %1963 = vmatpush1.xpose.msra.mxu0 0.0
    %1964 = vmatprep.subr.mxu0 0.0
    %1965 = vmatpush1.xpose.msra.mxu0 0.0
    %1966 = vmatprep.subr.mxu0 0.0
    %1967 = vmatpush1.xpose.msra.mxu0 0.0
    %1968 = vmatprep.subr.mxu0 0.0
    %1969 = vmatpush1.xpose.msra.mxu0 0.0
    %1970 = vmatprep.subr.mxu0 0.0
    %1971 = vmatpush1.xpose.msra.mxu0 0.0
    %1972 = vmatprep.subr.mxu0 0.0
    %1973 = vmatpush1.xpose.msra.mxu0 0.0
    %1974 = vmatprep.subr.mxu0 0.0
    %1975 = vmatpush1.xpose.msra.mxu0 0.0
    %1976 = vmatprep.subr.mxu0 0.0
    %1977 = vmatpush1.xpose.msra.mxu0 0.0
    %1978 = vmatprep.subr.mxu0 0.0
    %1979 = vmatpush1.xpose.msra.mxu0 0.0
    %1980 = vmatprep.subr.mxu0 0.0
    %1981 = vmatpush1.xpose.msra.mxu0 0.0
    %1982 = vmatprep.subr.mxu0 0.0
    %1983 = vmatpush1.xpose.msra.mxu0 0.0
    %1984 = vmatprep.subr.mxu0 0.0
    %1985 = vmatpush1.xpose.msra.mxu0 0.0
    %1986 = vmatprep.subr.mxu0 0.0
    %1987 = vmatpush1.xpose.msra.mxu0 0.0
    %1988 = vmatprep.subr.mxu0 0.0
    %1989 = vmatpush1.xpose.msra.mxu0 0.0
    %1990 = vmatprep.subr.mxu0 0.0
    %1991 = vmatpush1.xpose.msra.mxu0 0.0
    %1992 = vmatprep.subr.mxu0 0.0
    %1993 = vmatpush1.xpose.msra.mxu0 0.0
    %1994 = vmatprep.subr.mxu0 0.0
    %1995 = vmatpush1.xpose.msra.mxu0 0.0
    %1996 = vmatprep.subr.mxu0 0.0
    %1997 = vmatpush1.xpose.msra.mxu0 0.0
    %1998 = vmatprep.mubr.f32.mxu0 0.0
    %1999 = vmatmul.mubr.f32.gmra.mrb[0].mxu0 %v1926
    %v2000 = vpop.f32.mrb[0].mxu0
    %v2001 = vadd.f32 0.0, %v2000
    %v2002 = vpop.f32.mrb[0].mxu0
    %2003 = vmatprep.mubr.f32.mxu0 0.0
    %2004 = vmatmul.mubr.f32.gmra.mrb[0].mxu0 %v1928
    %v2005 = vpop.f32.mrb[0].mxu0
    %v2006 = vadd.f32 0.0, %v2005
    %v2007 = vpop.f32.mrb[0].mxu0
    %2008 = vdwg.mxu0
    %v2009 = vmul.f32 %v2001, 0.35355338
    %v2010 = vmul.f32 %v2006, 0.35355338
    %v2011 = vadd.f32 %v2009, %v113
    %v2012 = vadd.f32 %v2010, %v114
    %v2013 = vsel %vm326, %v2011, -inf
    %2014 = vmax.xlane.f32.xlu0 %v2013
    %v2015 = vpop.xlane.xlu0 %2014
    %v2016 = vsel %vm326, %v2012, -inf
    %2017 = vmax.xlane.f32.xlu0 %v2016
    %v2018 = vpop.xlane.xlu0 %2017
    %v2019 = vsub.f32 %v2011, %v2015
    %v2020 = vsub.f32 %v2012, %v2018
    %v2021 = vmul.f32 %v2019, 1.442695
    %v2022 = vpow.pop %v2021
    %v2023 = vmul.f32 %v2020, 1.442695
    %v2024 = vpow.pop %v2023
    %v2025 = vsel %vm326, %v2022, 0.0
    %2026 = vadd.xlane.f32.xlu0 %v2025
    %v2027 = vpop.xlane.xlu0 %2026
    %v2028 = vsel %vm326, %v2024, 0.0
    %2029 = vadd.xlane.f32.xlu0 %v2028
    %v2030 = vpop.xlane.xlu0 %2029
    %v2031 = vrcp.pop %v2027
    %v2032 = vrcp.pop %v2030
    %v2033 = vmul.f32 %v2022, %v2031
    %v2034 = vmul.f32 %v2024, %v2032
    %2035 = vrot.lane.b32.xlu0 %v1504, 48
    %v2036 = vpop.permute.xlu0 %2035
    %2037 = vrot.lane.b32.xlu0 %v1509, 48
    %v2038 = vpop.permute.xlu0 %2037
    %v2042 = vsel %vm326, %v2033, 0
    %v2045 = vsel %vm326, %v2034, 0
    %2047 = vmatprep.subr.mxu0 0.0
    %2048 = vmatpush1.msra.mxu0 %v2036
    %2049 = vmatprep.subr.mxu0 0.0
    %2050 = vmatpush1.msra.mxu0 %v2038
    %2051 = vmatprep.subr.mxu0 0.0
    %2052 = vmatpush1.msra.mxu0 0.0
    %2053 = vmatprep.subr.mxu0 0.0
    %2054 = vmatpush1.msra.mxu0 0.0
    %2055 = vmatprep.subr.mxu0 0.0
    %2056 = vmatpush1.msra.mxu0 0.0
    %2057 = vmatprep.subr.mxu0 0.0
    %2058 = vmatpush1.msra.mxu0 0.0
    %2059 = vmatprep.subr.mxu0 0.0
    %2060 = vmatpush1.msra.mxu0 0.0
    %2061 = vmatprep.subr.mxu0 0.0
    %2062 = vmatpush1.msra.mxu0 0.0
    %2063 = vmatprep.subr.mxu0 0.0
    %2064 = vmatpush1.msra.mxu0 0.0
    %2065 = vmatprep.subr.mxu0 0.0
    %2066 = vmatpush1.msra.mxu0 0.0
    %2067 = vmatprep.subr.mxu0 0.0
    %2068 = vmatpush1.msra.mxu0 0.0
    %2069 = vmatprep.subr.mxu0 0.0
    %2070 = vmatpush1.msra.mxu0 0.0
    %2071 = vmatprep.subr.mxu0 0.0
    %2072 = vmatpush1.msra.mxu0 0.0
    %2073 = vmatprep.subr.mxu0 0.0
    %2074 = vmatpush1.msra.mxu0 0.0
    %2075 = vmatprep.subr.mxu0 0.0
    %2076 = vmatpush1.msra.mxu0 0.0
    %2077 = vmatprep.subr.mxu0 0.0
    %2078 = vmatpush1.msra.mxu0 0.0
    %2079 = vmatprep.subr.mxu0 0.0
    %2080 = vmatpush1.msra.mxu0 0.0
    %2081 = vmatprep.subr.mxu0 0.0
    %2082 = vmatpush1.msra.mxu0 0.0
    %2083 = vmatprep.subr.mxu0 0.0
    %2084 = vmatpush1.msra.mxu0 0.0
    %2085 = vmatprep.subr.mxu0 0.0
    %2086 = vmatpush1.msra.mxu0 0.0
    %2087 = vmatprep.subr.mxu0 0.0
    %2088 = vmatpush1.msra.mxu0 0.0
    %2089 = vmatprep.subr.mxu0 0.0
    %2090 = vmatpush1.msra.mxu0 0.0
    %2091 = vmatprep.subr.mxu0 0.0
    %2092 = vmatpush1.msra.mxu0 0.0
    %2093 = vmatprep.subr.mxu0 0.0
    %2094 = vmatpush1.msra.mxu0 0.0
    %2095 = vmatprep.subr.mxu0 0.0
    %2096 = vmatpush1.msra.mxu0 0.0
    %2097 = vmatprep.subr.mxu0 0.0
    %2098 = vmatpush1.msra.mxu0 0.0
    %2099 = vmatprep.subr.mxu0 0.0
    %2100 = vmatpush1.msra.mxu0 0.0
    %2101 = vmatprep.subr.mxu0 0.0
    %2102 = vmatpush1.msra.mxu0 0.0
    %2103 = vmatprep.subr.mxu0 0.0
    %2104 = vmatpush1.msra.mxu0 0.0
    %2105 = vmatprep.subr.mxu0 0.0
    %2106 = vmatpush1.msra.mxu0 0.0
    %2107 = vmatprep.subr.mxu0 0.0
    %2108 = vmatpush1.msra.mxu0 0.0
    %2109 = vmatprep.subr.mxu0 0.0
    %2110 = vmatpush1.msra.mxu0 0.0
    %2111 = vmatprep.mubr.f32.mxu0 0.0
    %2112 = vmatmul.mubr.f32.gmra.mrb[0].mxu0 %v2042
    %v2113 = vpop.f32.mrb[0].mxu0
    %v2114 = vadd.f32 0.0, %v2113
    %v2115 = vpop.f32.mrb[0].mxu0
    %2116 = vmatprep.mubr.f32.mxu0 0.0
    %2117 = vmatmul.mubr.f32.gmra.mrb[0].mxu0 %v2045
    %v2118 = vpop.f32.mrb[0].mxu0
    %v2119 = vadd.f32 0.0, %v2118
    %v2120 = vpop.f32.mrb[0].mxu0
    %2121 = vdwg.mxu0
    %2122 = vrot.lane.b32.xlu0 %v1504, 104
    %v2123 = vpop.permute.xlu0 %2122
    %2124 = vrot.lane.b32.xlu0 %v1509, 104
    %v2125 = vpop.permute.xlu0 %2124
    %2126 = vrot.lane.b32.xlu0 %v1504, 72
    %v2127 = vpop.permute.xlu0 %2126
    %2128 = vrot.lane.b32.xlu0 %v1509, 72
    %v2129 = vpop.permute.xlu0 %2128
    %v2130 = vsel %vm238, %v2123, 0
    %v2132 = vsel %vm238, %v2125, 0
    %v2134 = vsel %vm238, %v2127, 0
    %v2136 = vsel %vm238, %v2129, 0
    %2138 = vmatprep.subr.mxu0 0.0
    %2139 = vmatpush1.xpose.msra.mxu0 %v2134
    %2140 = vmatprep.subr.mxu0 0.0
    %2141 = vmatpush1.xpose.msra.mxu0 %v2136
    %2142 = vmatprep.subr.mxu0 0.0
    %2143 = vmatpush1.xpose.msra.mxu0 0.0
    %2144 = vmatprep.subr.mxu0 0.0
    %2145 = vmatpush1.xpose.msra.mxu0 0.0
    %2146 = vmatprep.subr.mxu0 0.0
    %2147 = vmatpush1.xpose.msra.mxu0 0.0
    %2148 = vmatprep.subr.mxu0 0.0
    %2149 = vmatpush1.xpose.msra.mxu0 0.0
    %2150 = vmatprep.subr.mxu0 0.0
    %2151 = vmatpush1.xpose.msra.mxu0 0.0
    %2152 = vmatprep.subr.mxu0 0.0
    %2153 = vmatpush1.xpose.msra.mxu0 0.0
    %2154 = vmatprep.subr.mxu0 0.0
    %2155 = vmatpush1.xpose.msra.mxu0 0.0
    %2156 = vmatprep.subr.mxu0 0.0
    %2157 = vmatpush1.xpose.msra.mxu0 0.0
    %2158 = vmatprep.subr.mxu0 0.0
    %2159 = vmatpush1.xpose.msra.mxu0 0.0
    %2160 = vmatprep.subr.mxu0 0.0
    %2161 = vmatpush1.xpose.msra.mxu0 0.0
    %2162 = vmatprep.subr.mxu0 0.0
    %2163 = vmatpush1.xpose.msra.mxu0 0.0
    %2164 = vmatprep.subr.mxu0 0.0
    %2165 = vmatpush1.xpose.msra.mxu0 0.0
    %2166 = vmatprep.subr.mxu0 0.0
    %2167 = vmatpush1.xpose.msra.mxu0 0.0
    %2168 = vmatprep.subr.mxu0 0.0
    %2169 = vmatpush1.xpose.msra.mxu0 0.0
    %2170 = vmatprep.subr.mxu0 0.0
    %2171 = vmatpush1.xpose.msra.mxu0 0.0
    %2172 = vmatprep.subr.mxu0 0.0
    %2173 = vmatpush1.xpose.msra.mxu0 0.0
    %2174 = vmatprep.subr.mxu0 0.0
    %2175 = vmatpush1.xpose.msra.mxu0 0.0
    %2176 = vmatprep.subr.mxu0 0.0
    %2177 = vmatpush1.xpose.msra.mxu0 0.0
    %2178 = vmatprep.subr.mxu0 0.0
    %2179 = vmatpush1.xpose.msra.mxu0 0.0
    %2180 = vmatprep.subr.mxu0 0.0
    %2181 = vmatpush1.xpose.msra.mxu0 0.0
    %2182 = vmatprep.subr.mxu0 0.0
    %2183 = vmatpush1.xpose.msra.mxu0 0.0
    %2184 = vmatprep.subr.mxu0 0.0
    %2185 = vmatpush1.xpose.msra.mxu0 0.0
    %2186 = vmatprep.subr.mxu0 0.0
    %2187 = vmatpush1.xpose.msra.mxu0 0.0
    %2188 = vmatprep.subr.mxu0 0.0
    %2189 = vmatpush1.xpose.msra.mxu0 0.0
    %2190 = vmatprep.subr.mxu0 0.0
    %2191 = vmatpush1.xpose.msra.mxu0 0.0
    %2192 = vmatprep.subr.mxu0 0.0
    %2193 = vmatpush1.xpose.msra.mxu0 0.0
    %2194 = vmatprep.subr.mxu0 0.0
    %2195 = vmatpush1.xpose.msra.mxu0 0.0
    %2196 = vmatprep.subr.mxu0 0.0
    %2197 = vmatpush1.xpose.msra.mxu0 0.0
    %2198 = vmatprep.subr.mxu0 0.0
    %2199 = vmatpush1.xpose.msra.mxu0 0.0
    %2200 = vmatprep.subr.mxu0 0.0
    %2201 = vmatpush1.xpose.msra.mxu0 0.0
    %2202 = vmatprep.mubr.f32.mxu0 0.0
    %2203 = vmatmul.mubr.f32.gmra.mrb[0].mxu0 %v2130
    %v2204 = vpop.f32.mrb[0].mxu0
    %v2205 = vadd.f32 0.0, %v2204
    %v2206 = vpop.f32.mrb[0].mxu0
    %2207 = vmatprep.mubr.f32.mxu0 0.0
    %2208 = vmatmul.mubr.f32.gmra.mrb[0].mxu0 %v2132
    %v2209 = vpop.f32.mrb[0].mxu0
    %v2210 = vadd.f32 0.0, %v2209
    %v2211 = vpop.f32.mrb[0].mxu0
    %2212 = vdwg.mxu0
    %v2213 = vmul.f32 %v2205, 0.35355338
    %v2214 = vmul.f32 %v2210, 0.35355338
    %v2215 = vadd.f32 %v2213, %v113
    %v2216 = vadd.f32 %v2214, %v114
    %v2217 = vsel %vm326, %v2215, -inf
    %2218 = vmax.xlane.f32.xlu0 %v2217
    %v2219 = vpop.xlane.xlu0 %2218
    %v2220 = vsel %vm326, %v2216, -inf
    %2221 = vmax.xlane.f32.xlu0 %v2220
    %v2222 = vpop.xlane.xlu0 %2221
    %v2223 = vsub.f32 %v2215, %v2219
    %v2224 = vsub.f32 %v2216, %v2222
    %v2225 = vmul.f32 %v2223, 1.442695
    %v2226 = vpow.pop %v2225
    %v2227 = vmul.f32 %v2224, 1.442695
    %v2228 = vpow.pop %v2227
    %v2229 = vsel %vm326, %v2226, 0.0
    %2230 = vadd.xlane.f32.xlu0 %v2229
    %v2231 = vpop.xlane.xlu0 %2230
    %v2232 = vsel %vm326, %v2228, 0.0
    %2233 = vadd.xlane.f32.xlu0 %v2232
    %v2234 = vpop.xlane.xlu0 %2233
    %v2235 = vrcp.pop %v2231
    %v2236 = vrcp.pop %v2234
    %v2237 = vmul.f32 %v2226, %v2235
    %v2238 = vmul.f32 %v2228, %v2236
    %2239 = vrot.lane.b32.xlu0 %v1504, 40
    %v2240 = vpop.permute.xlu0 %2239
    %2241 = vrot.lane.b32.xlu0 %v1509, 40
    %v2242 = vpop.permute.xlu0 %2241
    %v2246 = vsel %vm326, %v2237, 0
    %v2249 = vsel %vm326, %v2238, 0
    %2251 = vmatprep.subr.mxu0 0.0
    %2252 = vmatpush1.msra.mxu0 %v2240
    %2253 = vmatprep.subr.mxu0 0.0
    %2254 = vmatpush1.msra.mxu0 %v2242
    %2255 = vmatprep.subr.mxu0 0.0
    %2256 = vmatpush1.msra.mxu0 0.0
    %2257 = vmatprep.subr.mxu0 0.0
    %2258 = vmatpush1.msra.mxu0 0.0
    %2259 = vmatprep.subr.mxu0 0.0
    %2260 = vmatpush1.msra.mxu0 0.0
    %2261 = vmatprep.subr.mxu0 0.0
    %2262 = vmatpush1.msra.mxu0 0.0
    %2263 = vmatprep.subr.mxu0 0.0
    %2264 = vmatpush1.msra.mxu0 0.0
    %2265 = vmatprep.subr.mxu0 0.0
    %2266 = vmatpush1.msra.mxu0 0.0
    %2267 = vmatprep.subr.mxu0 0.0
    %2268 = vmatpush1.msra.mxu0 0.0
    %2269 = vmatprep.subr.mxu0 0.0
    %2270 = vmatpush1.msra.mxu0 0.0
    %2271 = vmatprep.subr.mxu0 0.0
    %2272 = vmatpush1.msra.mxu0 0.0
    %2273 = vmatprep.subr.mxu0 0.0
    %2274 = vmatpush1.msra.mxu0 0.0
    %2275 = vmatprep.subr.mxu0 0.0
    %2276 = vmatpush1.msra.mxu0 0.0
    %2277 = vmatprep.subr.mxu0 0.0
    %2278 = vmatpush1.msra.mxu0 0.0
    %2279 = vmatprep.subr.mxu0 0.0
    %2280 = vmatpush1.msra.mxu0 0.0
    %2281 = vmatprep.subr.mxu0 0.0
    %2282 = vmatpush1.msra.mxu0 0.0
    %2283 = vmatprep.subr.mxu0 0.0
    %2284 = vmatpush1.msra.mxu0 0.0
    %2285 = vmatprep.subr.mxu0 0.0
    %2286 = vmatpush1.msra.mxu0 0.0
    %2287 = vmatprep.subr.mxu0 0.0
    %2288 = vmatpush1.msra.mxu0 0.0
    %2289 = vmatprep.subr.mxu0 0.0
    %2290 = vmatpush1.msra.mxu0 0.0
    %2291 = vmatprep.subr.mxu0 0.0
    %2292 = vmatpush1.msra.mxu0 0.0
    %2293 = vmatprep.subr.mxu0 0.0
    %2294 = vmatpush1.msra.mxu0 0.0
    %2295 = vmatprep.subr.mxu0 0.0
    %2296 = vmatpush1.msra.mxu0 0.0
    %2297 = vmatprep.subr.mxu0 0.0
    %2298 = vmatpush1.msra.mxu0 0.0
    %2299 = vmatprep.subr.mxu0 0.0
    %2300 = vmatpush1.msra.mxu0 0.0
    %2301 = vmatprep.subr.mxu0 0.0
    %2302 = vmatpush1.msra.mxu0 0.0
    %2303 = vmatprep.subr.mxu0 0.0
    %2304 = vmatpush1.msra.mxu0 0.0
    %2305 = vmatprep.subr.mxu0 0.0
    %2306 = vmatpush1.msra.mxu0 0.0
    %2307 = vmatprep.subr.mxu0 0.0
    %2308 = vmatpush1.msra.mxu0 0.0
    %2309 = vmatprep.subr.mxu0 0.0
    %2310 = vmatpush1.msra.mxu0 0.0
    %2311 = vmatprep.subr.mxu0 0.0
    %2312 = vmatpush1.msra.mxu0 0.0
    %2313 = vmatprep.subr.mxu0 0.0
    %2314 = vmatpush1.msra.mxu0 0.0
    %2315 = vmatprep.mubr.f32.mxu0 0.0
    %2316 = vmatmul.mubr.f32.gmra.mrb[0].mxu0 %v2246
    %v2317 = vpop.f32.mrb[0].mxu0
    %v2318 = vadd.f32 0.0, %v2317
    %v2319 = vpop.f32.mrb[0].mxu0
    %2320 = vmatprep.mubr.f32.mxu0 0.0
    %2321 = vmatmul.mubr.f32.gmra.mrb[0].mxu0 %v2249
    %v2322 = vpop.f32.mrb[0].mxu0
    %v2323 = vadd.f32 0.0, %v2322
    %v2324 = vpop.f32.mrb[0].mxu0
    %2325 = vdwg.mxu0
    %2328 = vrot.lane.b32.xlu0 %v1910, 8
    %v2329 = vpop.permute.xlu0 %2328
    %2330 = vrot.lane.b32.xlu0 %v1915, 8
    %v2331 = vpop.permute.xlu0 %2330
    %2336 = vrot.lane.b32.xlu0 %v2114, 16
    %v2337 = vpop.permute.xlu0 %2336
    %2338 = vrot.lane.b32.xlu0 %v2119, 16
    %v2339 = vpop.permute.xlu0 %2338
    %2344 = vrot.lane.b32.xlu0 %v2318, 24
    %v2345 = vpop.permute.xlu0 %2344
    %2346 = vrot.lane.b32.xlu0 %v2323, 24
    %v2347 = vpop.permute.xlu0 %2346
    %v2350 = vsel %vm238, %v1706, %v2329
    %v2351 = vsel %vm238, %v1711, %v2331
    %v2352 = vsel %vm326, %v2350, %v2337
    %v2353 = vsel %vm326, %v2351, %v2339
    %v2354 = vsel %vm1076, %v2352, %v2345
    %v2355 = vsel %vm1076, %v2353, %v2347
    %v2357 = vsel %vm115, %v2354, 0
    %v2360 = vsel %vm115, %v2355, 0
    %2362 = vmatprep.subr.mxu0 0.0
    %2363 = vmatpush1.msra.mxu0 %v1084
    %2364 = vmatprep.subr.mxu0 0.0
    %2365 = vmatpush1.msra.mxu0 %v1086
    %2366 = vmatprep.subr.mxu0 0.0
    %2367 = vmatpush1.msra.mxu0 %v1088
    %2368 = vmatprep.subr.mxu0 0.0
    %2369 = vmatpush1.msra.mxu0 %v1090
    %2370 = vmatprep.subr.mxu0 0.0
    %2371 = vmatpush1.msra.mxu0 0.0
    %2372 = vmatprep.subr.mxu0 0.0
    %2373 = vmatpush1.msra.mxu0 0.0
    %2374 = vmatprep.subr.mxu0 0.0
    %2375 = vmatpush1.msra.mxu0 0.0
    %2376 = vmatprep.subr.mxu0 0.0
    %2377 = vmatpush1.msra.mxu0 0.0
    %2378 = vmatprep.subr.mxu0 0.0
    %2379 = vmatpush1.msra.mxu0 0.0
    %2380 = vmatprep.subr.mxu0 0.0
    %2381 = vmatpush1.msra.mxu0 0.0
    %2382 = vmatprep.subr.mxu0 0.0
    %2383 = vmatpush1.msra.mxu0 0.0
    %2384 = vmatprep.subr.mxu0 0.0
    %2385 = vmatpush1.msra.mxu0 0.0
    %2386 = vmatprep.subr.mxu0 0.0
    %2387 = vmatpush1.msra.mxu0 0.0
    %2388 = vmatprep.subr.mxu0 0.0
    %2389 = vmatpush1.msra.mxu0 0.0
    %2390 = vmatprep.subr.mxu0 0.0
    %2391 = vmatpush1.msra.mxu0 0.0
    %2392 = vmatprep.subr.mxu0 0.0
    %2393 = vmatpush1.msra.mxu0 0.0
    %2394 = vmatprep.subr.mxu0 0.0
    %2395 = vmatpush1.msra.mxu0 0.0
    %2396 = vmatprep.subr.mxu0 0.0
    %2397 = vmatpush1.msra.mxu0 0.0
    %2398 = vmatprep.subr.mxu0 0.0
    %2399 = vmatpush1.msra.mxu0 0.0
    %2400 = vmatprep.subr.mxu0 0.0
    %2401 = vmatpush1.msra.mxu0 0.0
    %2402 = vmatprep.subr.mxu0 0.0
    %2403 = vmatpush1.msra.mxu0 0.0
    %2404 = vmatprep.subr.mxu0 0.0
    %2405 = vmatpush1.msra.mxu0 0.0
    %2406 = vmatprep.subr.mxu0 0.0
    %2407 = vmatpush1.msra.mxu0 0.0
    %2408 = vmatprep.subr.mxu0 0.0
    %2409 = vmatpush1.msra.mxu0 0.0
    %2410 = vmatprep.subr.mxu0 0.0
    %2411 = vmatpush1.msra.mxu0 0.0
    %2412 = vmatprep.subr.mxu0 0.0
    %2413 = vmatpush1.msra.mxu0 0.0
    %2414 = vmatprep.subr.mxu0 0.0
    %2415 = vmatpush1.msra.mxu0 0.0
    %2416 = vmatprep.subr.mxu0 0.0
    %2417 = vmatpush1.msra.mxu0 0.0
    %2418 = vmatprep.subr.mxu0 0.0
    %2419 = vmatpush1.msra.mxu0 0.0
    %2420 = vmatprep.subr.mxu0 0.0
    %2421 = vmatpush1.msra.mxu0 0.0
    %2422 = vmatprep.subr.mxu0 0.0
    %2423 = vmatpush1.msra.mxu0 0.0
    %2424 = vmatprep.subr.mxu0 0.0
    %2425 = vmatpush1.msra.mxu0 0.0
    %2426 = vmatprep.mubr.f32.mxu0 0.0
    %2427 = vmatmul.mubr.f32.gmra.mrb[0].mxu0 %v2357
    %v2428 = vpop.f32.mrb[0].mxu0
    %v2429 = vadd.f32 %v68, %v2428
    %v2430 = vpop.f32.mrb[0].mxu0
    %2431 = vmatprep.mubr.f32.mxu0 0.0
    %2432 = vmatmul.mubr.f32.gmra.mrb[0].mxu0 %v2360
    %v2433 = vpop.f32.mrb[0].mxu0
    %v2434 = vadd.f32 %v68, %v2433
    %v2435 = vpop.f32.mrb[0].mxu0
    %2436 = vdwg.mxu0
    %v2437 = vadd.f32 %v1399, %v2429
    %v2438 = vadd.f32 %v1400, %v2434
    %v2439 = vsel %vm115, %v2437, 0.0
    %2440 = vadd.xlane.f32.xlu0 %v2439
    %v2441 = vpop.xlane.xlu0 %2440
    %v2442 = vsel %vm115, %v2438, 0.0
    %2443 = vadd.xlane.f32.xlu0 %v2442
    %v2444 = vpop.xlane.xlu0 %2443
    %v2445 = vmul.f32 %v2441, %v122
    %v2446 = vmul.f32 %v2444, %v122
    %v2447 = vsub.f32 %v2437, %v2445
    %v2448 = vsub.f32 %v2438, %v2446
    %v2449 = vmul.f32 %v2447, %v2447
    %v2450 = vmul.f32 %v2448, %v2448
    %v2451 = vsel %vm115, %v2449, 0.0
    %2452 = vadd.xlane.f32.xlu0 %v2451
    %v2453 = vpop.xlane.xlu0 %2452
    %v2454 = vsel %vm115, %v2450, 0.0
    %2455 = vadd.xlane.f32.xlu0 %v2454
    %v2456 = vpop.xlane.xlu0 %2455
    %v2457 = vmul.f32 %v2453, %v122
    %v2458 = vmul.f32 %v2456, %v122
    %v2459 = vadd.f32 %v2457, 1e-05
    %v2460 = vadd.f32 %v2458, 1e-05
    %v2461 = vrsqrt.pop %v2459
    %v2462 = vrsqrt.pop %v2460
    %v2463 = vmul.f32 %v2447, %v2461
    %v2464 = vmul.f32 %v2448, %v2462
    %v2465 = vmul.f32 %v2463, %v84
    %v2466 = vmul.f32 %v2464, %v84
    %v2467 = vadd.f32 %v2465, %v88
    %v2468 = vadd.f32 %v2466, %v88
    %v2470 = vsel %vm115, %v2467, 0
    %v2473 = vsel %vm115, %v2468, 0
    %2475 = vmatprep.subr.mxu0 0.0
    %2476 = vmatpush1.msra.mxu0 %v57
    %2477 = vmatprep.subr.mxu0 0.0
    %2478 = vmatpush1.msra.mxu0 %v59
    %2479 = vmatprep.subr.mxu0 0.0
    %2480 = vmatpush1.msra.mxu0 %v61
    %2481 = vmatprep.subr.mxu0 0.0
    %2482 = vmatpush1.msra.mxu0 %v63
    %2483 = vmatprep.subr.mxu0 0.0
    %2484 = vmatpush1.msra.mxu0 0.0
    %2485 = vmatprep.subr.mxu0 0.0
    %2486 = vmatpush1.msra.mxu0 0.0
    %2487 = vmatprep.subr.mxu0 0.0
    %2488 = vmatpush1.msra.mxu0 0.0
    %2489 = vmatprep.subr.mxu0 0.0
    %2490 = vmatpush1.msra.mxu0 0.0
    %2491 = vmatprep.subr.mxu0 0.0
    %2492 = vmatpush1.msra.mxu0 0.0
    %2493 = vmatprep.subr.mxu0 0.0
    %2494 = vmatpush1.msra.mxu0 0.0
    %2495 = vmatprep.subr.mxu0 0.0
    %2496 = vmatpush1.msra.mxu0 0.0
    %2497 = vmatprep.subr.mxu0 0.0
    %2498 = vmatpush1.msra.mxu0 0.0
    %2499 = vmatprep.subr.mxu0 0.0
    %2500 = vmatpush1.msra.mxu0 0.0
    %2501 = vmatprep.subr.mxu0 0.0
    %2502 = vmatpush1.msra.mxu0 0.0
    %2503 = vmatprep.subr.mxu0 0.0
    %2504 = vmatpush1.msra.mxu0 0.0
    %2505 = vmatprep.subr.mxu0 0.0
    %2506 = vmatpush1.msra.mxu0 0.0
    %2507 = vmatprep.subr.mxu0 0.0
    %2508 = vmatpush1.msra.mxu0 0.0
    %2509 = vmatprep.subr.mxu0 0.0
    %2510 = vmatpush1.msra.mxu0 0.0
    %2511 = vmatprep.subr.mxu0 0.0
    %2512 = vmatpush1.msra.mxu0 0.0
    %2513 = vmatprep.subr.mxu0 0.0
    %2514 = vmatpush1.msra.mxu0 0.0
    %2515 = vmatprep.subr.mxu0 0.0
    %2516 = vmatpush1.msra.mxu0 0.0
    %2517 = vmatprep.subr.mxu0 0.0
    %2518 = vmatpush1.msra.mxu0 0.0
    %2519 = vmatprep.subr.mxu0 0.0
    %2520 = vmatpush1.msra.mxu0 0.0
    %2521 = vmatprep.subr.mxu0 0.0
    %2522 = vmatpush1.msra.mxu0 0.0
    %2523 = vmatprep.subr.mxu0 0.0
    %2524 = vmatpush1.msra.mxu0 0.0
    %2525 = vmatprep.subr.mxu0 0.0
    %2526 = vmatpush1.msra.mxu0 0.0
    %2527 = vmatprep.subr.mxu0 0.0
    %2528 = vmatpush1.msra.mxu0 0.0
    %2529 = vmatprep.subr.mxu0 0.0
    %2530 = vmatpush1.msra.mxu0 0.0
    %2531 = vmatprep.subr.mxu0 0.0
    %2532 = vmatpush1.msra.mxu0 0.0
    %2533 = vmatprep.subr.mxu0 0.0
    %2534 = vmatpush1.msra.mxu0 0.0
    %2535 = vmatprep.subr.mxu0 0.0
    %2536 = vmatpush1.msra.mxu0 0.0
    %2537 = vmatprep.subr.mxu0 0.0
    %2538 = vmatpush1.msra.mxu0 0.0
    %2539 = vmatprep.mubr.f32.mxu0 0.0
    %2540 = vmatmul.mubr.f32.gmra.mrb[0].mxu0 %v2470
    %v2541 = vpop.f32.mrb[0].mxu0
    %v2542 = vadd.f32 %v1210, %v2541
    %v2543 = vpop.f32.mrb[0].mxu0
    %2544 = vmatprep.mubr.f32.mxu0 0.0
    %2545 = vmatmul.mubr.f32.gmra.mrb[0].mxu0 %v2473
    %v2546 = vpop.f32.mrb[0].mxu0
    %v2547 = vadd.f32 %v1210, %v2546
    %v2548 = vpop.f32.mrb[0].mxu0
    %2549 = vdwg.mxu0
    %v2550 = vmax.f32 %v2542, 0.0
    %v2551 = vmax.f32 %v2547, 0.0
    %v2553 = vsel %vm1307, %v2550, 0
    %v2556 = vsel %vm1307, %v2551, 0
    %2558 = vmatprep.subr.mxu0 0.0
    %2559 = vmatpush1.xpose.msra.mxu0 %v1314
    %2560 = vmatprep.subr.mxu0 0.0
    %2561 = vmatpush1.xpose.msra.mxu0 %v1316
    %2562 = vmatprep.subr.mxu0 0.0
    %2563 = vmatpush1.xpose.msra.mxu0 %v1318
    %2564 = vmatprep.subr.mxu0 0.0
    %2565 = vmatpush1.xpose.msra.mxu0 %v1320
    %2566 = vmatprep.subr.mxu0 0.0
    %2567 = vmatpush1.xpose.msra.mxu0 0.0
    %2568 = vmatprep.subr.mxu0 0.0
    %2569 = vmatpush1.xpose.msra.mxu0 0.0
    %2570 = vmatprep.subr.mxu0 0.0
    %2571 = vmatpush1.xpose.msra.mxu0 0.0
    %2572 = vmatprep.subr.mxu0 0.0
    %2573 = vmatpush1.xpose.msra.mxu0 0.0
    %2574 = vmatprep.subr.mxu0 0.0
    %2575 = vmatpush1.xpose.msra.mxu0 0.0
    %2576 = vmatprep.subr.mxu0 0.0
    %2577 = vmatpush1.xpose.msra.mxu0 0.0
    %2578 = vmatprep.subr.mxu0 0.0
    %2579 = vmatpush1.xpose.msra.mxu0 0.0
    %2580 = vmatprep.subr.mxu0 0.0
    %2581 = vmatpush1.xpose.msra.mxu0 0.0
    %2582 = vmatprep.subr.mxu0 0.0
    %2583 = vmatpush1.xpose.msra.mxu0 0.0
    %2584 = vmatprep.subr.mxu0 0.0
    %2585 = vmatpush1.xpose.msra.mxu0 0.0
    %2586 = vmatprep.subr.mxu0 0.0
    %2587 = vmatpush1.xpose.msra.mxu0 0.0
    %2588 = vmatprep.subr.mxu0 0.0
    %2589 = vmatpush1.xpose.msra.mxu0 0.0
    %2590 = vmatprep.subr.mxu0 0.0
    %2591 = vmatpush1.xpose.msra.mxu0 0.0
    %2592 = vmatprep.subr.mxu0 0.0
    %2593 = vmatpush1.xpose.msra.mxu0 0.0
    %2594 = vmatprep.subr.mxu0 0.0
    %2595 = vmatpush1.xpose.msra.mxu0 0.0
    %2596 = vmatprep.subr.mxu0 0.0
    %2597 = vmatpush1.xpose.msra.mxu0 0.0
    %2598 = vmatprep.subr.mxu0 0.0
    %2599 = vmatpush1.xpose.msra.mxu0 0.0
    %2600 = vmatprep.subr.mxu0 0.0
    %2601 = vmatpush1.xpose.msra.mxu0 0.0
    %2602 = vmatprep.subr.mxu0 0.0
    %2603 = vmatpush1.xpose.msra.mxu0 0.0
    %2604 = vmatprep.subr.mxu0 0.0
    %2605 = vmatpush1.xpose.msra.mxu0 0.0
    %2606 = vmatprep.subr.mxu0 0.0
    %2607 = vmatpush1.xpose.msra.mxu0 0.0
    %2608 = vmatprep.subr.mxu0 0.0
    %2609 = vmatpush1.xpose.msra.mxu0 0.0
    %2610 = vmatprep.subr.mxu0 0.0
    %2611 = vmatpush1.xpose.msra.mxu0 0.0
    %2612 = vmatprep.subr.mxu0 0.0
    %2613 = vmatpush1.xpose.msra.mxu0 0.0
    %2614 = vmatprep.subr.mxu0 0.0
    %2615 = vmatpush1.xpose.msra.mxu0 0.0
    %2616 = vmatprep.subr.mxu0 0.0
    %2617 = vmatpush1.xpose.msra.mxu0 0.0
    %2618 = vmatprep.subr.mxu0 0.0
    %2619 = vmatpush1.xpose.msra.mxu0 0.0
    %2620 = vmatprep.subr.mxu0 0.0
    %2621 = vmatpush1.xpose.msra.mxu0 0.0
    %2622 = vmatprep.mubr.f32.mxu0 0.0
    %2623 = vmatmul.mubr.f32.gmra.mrb[0].mxu0 %v2553
    %v2624 = vpop.f32.mrb[0].mxu0
    %v2625 = vadd.f32 0.0, %v2624
    %v2626 = vpop.f32.mrb[0].mxu0
    %2627 = vmatprep.mubr.f32.mxu0 0.0
    %2628 = vmatmul.mubr.f32.gmra.mrb[0].mxu0 %v2556
    %v2629 = vpop.f32.mrb[0].mxu0
    %v2630 = vadd.f32 0.0, %v2629
    %v2631 = vpop.f32.mrb[0].mxu0
    %2632 = vdwg.mxu0
    %v2633 = vadd.f32 %v2437, %v2625
    %v2634 = vadd.f32 %v2438, %v2630
    %v2635 = vadd.f32 %v2633, %v72
    %v2636 = vadd.f32 %v2634, %v72
    %v2637 = vsel %vm115, %v2635, 0.0
    %2638 = vadd.xlane.f32.xlu0 %v2637
    %v2639 = vpop.xlane.xlu0 %2638
    %v2640 = vsel %vm115, %v2636, 0.0
    %2641 = vadd.xlane.f32.xlu0 %v2640
    %v2642 = vpop.xlane.xlu0 %2641
    %v2643 = vmul.f32 %v2639, %v122
    %v2644 = vmul.f32 %v2642, %v122
    %v2645 = vsub.f32 %v2635, %v2643
    %v2646 = vsub.f32 %v2636, %v2644
    %v2647 = vmul.f32 %v2645, %v2645
    %v2648 = vmul.f32 %v2646, %v2646
    %v2649 = vsel %vm115, %v2647, 0.0
    %2650 = vadd.xlane.f32.xlu0 %v2649
    %v2651 = vpop.xlane.xlu0 %2650
    %v2652 = vsel %vm115, %v2648, 0.0
    %2653 = vadd.xlane.f32.xlu0 %v2652
    %v2654 = vpop.xlane.xlu0 %2653
    %v2655 = vmul.f32 %v2651, %v122
    %v2656 = vmul.f32 %v2654, %v122
    %v2657 = vadd.f32 %v2655, 1e-05
    %v2658 = vadd.f32 %v2656, 1e-05
    %v2659 = vrsqrt.pop %v2657
    %v2660 = vrsqrt.pop %v2658
    %v2661 = vmul.f32 %v2645, %v2659
    %v2662 = vmul.f32 %v2646, %v2660
    %v2663 = vmul.f32 %v2661, %v92
    %v2664 = vmul.f32 %v2662, %v92
    %v2665 = vadd.f32 %v2663, %v96
    %v2666 = vadd.f32 %v2664, %v96
    %2667 = vst.msk [vmem:[#allocation8] sm:$0xff] %vm115, %v2665
    %2668 = vst.msk [vmem:[#allocation8 + $0x8] sm:$0xff] %vm115, %v2666
    // Predicated region
    $region26: #{tpu_custom_call.1} parent=1 // pred_check
      _
    $region27: #{tpu_custom_call.1} parent=1 // pred_check_branch
      %2670 = sbr.rel (0) target = $region29
    $region28: #{tpu_custom_call.1} parent=1 // pred_region
      %s2672 = ssub.s32 256, 256
      %2673 = vsyncadd [#allocation4], %s2672
      %s2674 = sshll.u32 [#allocation8], 4
      %s2675 = int_to_ptr.vmem [resolvable:$true] %s2674
      %2680 = dma.vmem_to_hbm [thread:$0]  %s2675, 256, %s3, [#allocation4], 128, 128, 8
    $region29: #{tpu_custom_call.1} parent=1 // pred_fallthru
      _
    // Predicated region
    $region30: #{tpu_custom_call.1} parent=1 // pred_check
      _
    $region31: #{tpu_custom_call.1} parent=1 // pred_check_branch
      %2682 = sbr.rel (0) target = $region33
    $region32: #{tpu_custom_call.1} parent=1 // pred_region
      %2683 = dma.done [#allocation4], 256
    $region33: #{tpu_custom_call.1} parent=1 // pred_fallthru
      _
    %2684 = vsyncpa [#allocation3], 1
    %2685 = vsyncpa [#allocation6], 1
    %2686 = vsyncpa [#allocation4], 1

</llo_original>
